<compile_context>
chip_gen: v6e
topology: v6e:2x2x1
jax: 0.10.0
libtpu: 0.0.40
codegen_flags: <defaults>
</compile_context>

<pallas_src>
import functools
import math

import jax
import jax.numpy as jnp
from jax import lax
from jax.experimental import pallas as pl
from jax.experimental.pallas import tpu as pltpu


# ----------------------------- in-kernel helpers -----------------------------

def _layernorm(x, g, b, eps=1e-6):
    mu = jnp.mean(x, axis=-1, keepdims=True)
    xc = x - mu
    var = jnp.mean(xc * xc, axis=-1, keepdims=True)
    inv = lax.rsqrt(var + eps)
    return xc * inv * g + b


def _gelu(x):
    # tanh-approximate GELU (timm uses exact erf; difference ~1e-3).
    c = 0.7978845608028654  # sqrt(2/pi)
    return 0.5 * x * (1.0 + jnp.tanh(c * (x + 0.044715 * x * x * x)))


# ------------------------------ fused ViT kernel ------------------------------

def fused_vit_kernel(patches_ref, patch_w_ref, clspos_ref, blkvec_ref, *refs,
                     num_heads, depth, batch, n_pad, n_real, d_model,
                     mlp_hidden):
    """Entire scaled-down DeiT-tiny forward in one kernel invocation.

    refs = depth x [qkv_w, proj_w, fc1_w, fc2_w], fin_vecs, head_w, out.
    blkvec_ref packs, per block (8 rows x 256 lanes):
      [ln1_g, ln1_b, qkv_b, proj_b, ln2_g, ln2_b, fc1_b, fc2_b]
    fin_vecs packs [ln_g, ln_b, head_b] (8 x 128).
    """
    blk_w = []
    idx = 0
    for _ in range(depth):
        blk_w.append(refs[idx:idx + 4])
        idx += 4
    fin_vec_ref = refs[idx]
    head_w_ref = refs[idx + 1]
    out_ref = refs[idx + 2]

    D = d_model
    hd = D // num_heads
    scale = 1.0 / math.sqrt(hd)

    # --- patch embed + cls/pos: one matmul + one full-width add, all rows.
    #     (cls rows and pad rows of `patches` are zero; clspos carries
    #      cls_token+pos[0] / patch_bias+pos[1:] / 0 respectively.)
    x = jnp.dot(patches_ref[...], patch_w_ref[...],
                preferred_element_type=jnp.float32) + clspos_ref[...]

    # key-padding mask: key columns >= n_real are padded tokens
    col_ids = lax.broadcasted_iota(jnp.int32, (n_pad, n_pad), 1)
    key_mask = jnp.where(col_ids < n_real, 0.0, -1e30).astype(jnp.float32)

    # --- transformer blocks (pre-norm MHSA + MLP), weights VMEM-resident
    for li, (qkvw_ref, projw_ref, fc1w_ref, fc2w_ref) in enumerate(blk_w):
        r0 = li * 8
        ln1g = blkvec_ref[r0 + 0:r0 + 1, :D]
        ln1b = blkvec_ref[r0 + 1:r0 + 2, :D]
        qkvb = blkvec_ref[r0 + 2:r0 + 3, :3 * D]
        projb = blkvec_ref[r0 + 3:r0 + 4, :D]
        ln2g = blkvec_ref[r0 + 4:r0 + 5, :D]
        ln2b = blkvec_ref[r0 + 5:r0 + 6, :D]
        fc1b = blkvec_ref[r0 + 6:r0 + 7, :mlp_hidden]
        fc2b = blkvec_ref[r0 + 7:r0 + 8, :D]

        # ---- MHSA (pre-norm)
        h1 = _layernorm(x, ln1g, ln1b)
        qkv = jnp.dot(h1.astype(jnp.bfloat16), qkvw_ref[...],
                      preferred_element_type=jnp.float32) + qkvb   # (B*n_pad, 3D)

        def heads(base):
            # stack per-(batch, head) slices into one (B*H, n_pad, hd) value
            return jnp.stack(
                [qkv[b * n_pad:(b + 1) * n_pad,
                     base + hh * hd: base + (hh + 1) * hd]
                 for b in range(batch) for hh in range(num_heads)], axis=0)

        q_s = heads(0).astype(jnp.bfloat16)          # (B*H, n_pad, hd)
        k_s = heads(D).astype(jnp.bfloat16)
        v_s = heads(2 * D).astype(jnp.bfloat16)

        # one batched QK^T, one softmax, one batched PV
        s = jnp.einsum('bqd,bkd->bqk', q_s, k_s,
                       preferred_element_type=jnp.float32) * scale + key_mask
        s = s - jnp.max(s, axis=-1, keepdims=True)
        p = jnp.exp(s)
        p = p * pl.reciprocal(jnp.sum(p, axis=-1, keepdims=True), approx=True)
        o = jnp.einsum('bqk,bkd->bqd', p.astype(jnp.bfloat16), v_s,
                       preferred_element_type=jnp.float32)         # (B*H, n_pad, hd)

        # recombine heads in registers (no masked partial stores)
        attn = jnp.concatenate(
            [jnp.concatenate([o[b * num_heads + hh] for hh in range(num_heads)],
                             axis=-1)
             for b in range(batch)], axis=0)                       # (B*n_pad, D)

        x = x + jnp.dot(attn.astype(jnp.bfloat16), projw_ref[...],
                        preferred_element_type=jnp.float32) + projb

        # ---- MLP (pre-norm)
        h2 = _layernorm(x, ln2g, ln2b)
        f = _gelu(jnp.dot(h2.astype(jnp.bfloat16), fc1w_ref[...],
                          preferred_element_type=jnp.float32) + fc1b)
        x = x + jnp.dot(f.astype(jnp.bfloat16), fc2w_ref[...],
                        preferred_element_type=jnp.float32) + fc2b

    # --- final LN + classification head only on the B cls rows
    cls = jnp.concatenate([x[b * n_pad:b * n_pad + 1, :] for b in range(batch)],
                          axis=0)                                  # (B, D)
    ln_g = fin_vec_ref[0:1, :D]
    ln_b = fin_vec_ref[1:2, :D]
    head_b = fin_vec_ref[2:3, :]
    xf = _layernorm(cls, ln_g, ln_b)
    out_ref[...] = jnp.dot(xf.astype(jnp.bfloat16), head_w_ref[...],
                           preferred_element_type=jnp.float32) + head_b


# --------------------------------- glue code ---------------------------------

def extract_patches(x, patch):
    """NCHW image -> (B, num_patches, C*patch*patch), matching Conv2d(k=s=patch)."""
    B, C, H, W = x.shape
    gh, gw = H // patch, W // patch
    x = x.reshape(B, C, gh, patch, gw, patch)
    x = x.transpose(0, 2, 4, 1, 3, 5)                  # (B, gh, gw, C, p, p)
    return x.reshape(B, gh * gw, C * patch * patch)


def init_params(key, *, C, patch, D, depth, mlp_hidden, n_tokens, num_classes):
    keys = jax.random.split(key, 4 + depth)

    def nrm(k, shape):
        return (0.02 * jax.random.normal(k, shape)).astype(jnp.float32)

    params = {
        "patch_w": nrm(keys[0], (C * patch * patch, D)),
        "patch_b": jnp.zeros((1, D), jnp.float32),
        "cls_token": nrm(keys[1], (1, 1, D)),
        "pos_embed": nrm(keys[2], (1, n_tokens, D)),
        "ln_g": jnp.ones((1, D), jnp.float32),
        "ln_b": jnp.zeros((1, D), jnp.float32),
        "head_w": nrm(keys[3], (D, num_classes)),
        "head_b": jnp.zeros((1, num_classes), jnp.float32),
        "blocks": [],
    }
    for i in range(depth):
        bk = jax.random.split(keys[4 + i], 4)
        params["blocks"].append(dict(
            ln1_g=jnp.ones((1, D), jnp.float32),
            ln1_b=jnp.zeros((1, D), jnp.float32),
            qkv_w=nrm(bk[0], (D, 3 * D)),
            qkv_b=jnp.zeros((1, 3 * D), jnp.float32),
            proj_w=nrm(bk[1], (D, D)),
            proj_b=jnp.zeros((1, D), jnp.float32),
            ln2_g=jnp.ones((1, D), jnp.float32),
            ln2_b=jnp.zeros((1, D), jnp.float32),
            fc1_w=nrm(bk[2], (D, mlp_hidden)),
            fc1_b=jnp.zeros((1, mlp_hidden), jnp.float32),
            fc2_w=nrm(bk[3], (mlp_hidden, D)),
            fc2_b=jnp.zeros((1, D), jnp.float32),
        ))
    return params


def emotion_model_forward(x, params, *, patch, num_heads):
    B = x.shape[0]
    D = params["patch_w"].shape[1]
    depth = len(params["blocks"])
    num_classes = params["head_w"].shape[1]
    mlp_hidden = params["blocks"][0]["fc1_w"].shape[1]

    # Patch extraction (pure layout glue; Conv2d(k=s=patch) == flatten + matmul).
    patches = extract_patches(x, patch)                 # (B, P, C*p*p)
    P, Cpp = patches.shape[1], patches.shape[2]
    n_real = P + 1                                      # patches + cls
    n_pad = ((n_real + 7) // 8) * 8                     # pad tokens to 8-sublane

    # Patch rows placed directly into token-row layout; cls/pad rows zero.
    patches_padded = jnp.zeros((B, n_pad, Cpp), jnp.float32)
    patches_padded = patches_padded.at[:, 1:1 + P, :].set(patches)
    patches_padded = patches_padded.reshape(B * n_pad, Cpp).astype(jnp.bfloat16)

    # Additive constant per token row: cls_token+pos[0] at cls rows,
    # patch_bias+pos[1+i] at patch rows, 0 at pad rows.
    pos = params["pos_embed"].reshape(n_real, D)
    clspos = jnp.zeros((n_pad, D), jnp.float32)
    clspos = clspos.at[0, :].set(params["cls_token"].reshape(D) + pos[0])
    clspos = clspos.at[1:1 + P, :].set(params["patch_b"].reshape(1, D) + pos[1:])
    clspos = jnp.tile(clspos, (B, 1))                   # (B*n_pad, D)

    # Pack all per-block 1-row vectors into one array (one DMA instead of 8*depth).
    Wvec = max(3 * D, mlp_hidden, 128)

    def pad_row(v, w=Wvec):
        v = v.reshape(1, -1)
        return jnp.pad(v, ((0, 0), (0, w - v.shape[1])))

    blk_rows = []
    for bp in params["blocks"]:
        blk_rows += [pad_row(bp["ln1_g"]), pad_row(bp["ln1_b"]),
                     pad_row(bp["qkv_b"]), pad_row(bp["proj_b"]),
                     pad_row(bp["ln2_g"]), pad_row(bp["ln2_b"]),
                     pad_row(bp["fc1_b"]), pad_row(bp["fc2_b"])]
    blk_vecs = jnp.concatenate(blk_rows, axis=0).astype(jnp.float32)

    # Final LN gains/bias + head bias packed into one (8, 128) array.
    head_b_pad = jnp.pad(params["head_b"], ((0, 0), (0, 128 - num_classes)))
    fin_rows = [pad_row(params["ln_g"], 128), pad_row(params["ln_b"], 128),
                head_b_pad]
    fin_vecs = jnp.concatenate(
        fin_rows + [jnp.zeros((8 - len(fin_rows), 128), jnp.float32)], axis=0)

    head_w_pad = jnp.pad(params["head_w"],
                         ((0, 0), (0, 128 - num_classes))).astype(jnp.bfloat16)

    args = [patches_padded,
            params["patch_w"].astype(jnp.bfloat16),
            clspos,
            blk_vecs]
    for bp in params["blocks"]:
        args += [bp["qkv_w"].astype(jnp.bfloat16),
                 bp["proj_w"].astype(jnp.bfloat16),
                 bp["fc1_w"].astype(jnp.bfloat16),
                 bp["fc2_w"].astype(jnp.bfloat16)]
    args += [fin_vecs, head_w_pad]

    kern = functools.partial(fused_vit_kernel, num_heads=num_heads, depth=depth,
                             batch=B, n_pad=n_pad, n_real=n_real, d_model=D,
                             mlp_hidden=mlp_hidden)

    out = pl.pallas_call(
        kern,
        out_shape=jax.ShapeDtypeStruct((B, 128), jnp.float32),
        grid=(1,),
        in_specs=[pl.BlockSpec(a.shape, lambda i: (0, 0)) for a in args],
        out_specs=pl.BlockSpec((B, 128), lambda i: (0, 0)),
        compiler_params=pltpu.CompilerParams(
            dimension_semantics=("arbitrary",)),
    )(*args)

    # First num_classes lanes are the real logits.
    return out[:, :num_classes]


# ----------------------------------- main ------------------------------------

if __name__ == "__main__":
    # Scaled-down DeiT-tiny configuration.
    B, C, H, W = 2, 3, 32, 32
    PATCH = 16
    D = 64
    HEADS = 2
    DEPTH = 2
    MLP_HIDDEN = 4 * D
    NUM_CLASSES = 7
    N_TOKENS = (H // PATCH) * (W // PATCH) + 1          # patches + cls = 5

    key = jax.random.PRNGKey(0)
    kx, kp = jax.random.split(key)
    x = jax.random.normal(kx, (B, C, H, W), jnp.float32)    # NCHW, like PyTorch

    params = init_params(kp, C=C, patch=PATCH, D=D, depth=DEPTH,
                         mlp_hidden=MLP_HIDDEN, n_tokens=N_TOKENS,
                         num_classes=NUM_CLASSES)

    fwd = jax.jit(functools.partial(emotion_model_forward,
                                    patch=PATCH, num_heads=HEADS))
    logits = fwd(x, params)
    logits = jax.block_until_ready(logits)

    assert logits.shape == (B, NUM_CLASSES)
    assert bool(jnp.all(jnp.isfinite(logits)))
    print("KERNEL_OK")
</pallas_src>

<mosaic_0001>
module attributes {stable_mosaic.version = 11 : i64} {
  func.func @fused_vit_kernel(%arg0: i32, %arg1: memref<16x768xbf16, #tpu.memory_space<vmem>>, %arg2: memref<768x64xbf16, #tpu.memory_space<vmem>>, %arg3: memref<16x64xf32, #tpu.memory_space<vmem>>, %arg4: memref<16x256xf32, #tpu.memory_space<vmem>>, %arg5: memref<64x192xbf16, #tpu.memory_space<vmem>>, %arg6: memref<64x64xbf16, #tpu.memory_space<vmem>>, %arg7: memref<64x256xbf16, #tpu.memory_space<vmem>>, %arg8: memref<256x64xbf16, #tpu.memory_space<vmem>>, %arg9: memref<64x192xbf16, #tpu.memory_space<vmem>>, %arg10: memref<64x64xbf16, #tpu.memory_space<vmem>>, %arg11: memref<64x256xbf16, #tpu.memory_space<vmem>>, %arg12: memref<256x64xbf16, #tpu.memory_space<vmem>>, %arg13: memref<8x128xf32, #tpu.memory_space<vmem>>, %arg14: memref<64x128xbf16, #tpu.memory_space<vmem>>, %arg15: memref<2x128xf32, #tpu.memory_space<vmem>>) attributes {dimension_semantics = [#tpu.dimension_semantics<arbitrary>], iteration_bounds = array<i64: 1>, scalar_prefetch = 0 : i64, scratch_operands = 0 : i64, tpu.core_type = #tpu.core_type<tc>, window_params = [{pipeline_mode = #tpu.pipeline_mode<synchronous>, transform_indices = @transform_0, window_bounds = array<i64: 16, 768>}, {pipeline_mode = #tpu.pipeline_mode<synchronous>, transform_indices = @transform_1, window_bounds = array<i64: 768, 64>}, {pipeline_mode = #tpu.pipeline_mode<synchronous>, transform_indices = @transform_2, window_bounds = array<i64: 16, 64>}, {pipeline_mode = #tpu.pipeline_mode<synchronous>, transform_indices = @transform_3, window_bounds = array<i64: 16, 256>}, {pipeline_mode = #tpu.pipeline_mode<synchronous>, transform_indices = @transform_4, window_bounds = array<i64: 64, 192>}, {pipeline_mode = #tpu.pipeline_mode<synchronous>, transform_indices = @transform_5, window_bounds = array<i64: 64, 64>}, {pipeline_mode = #tpu.pipeline_mode<synchronous>, transform_indices = @transform_6, window_bounds = array<i64: 64, 256>}, {pipeline_mode = #tpu.pipeline_mode<synchronous>, transform_indices = @transform_7, window_bounds = array<i64: 256, 64>}, {pipeline_mode = #tpu.pipeline_mode<synchronous>, transform_indices = @transform_8, window_bounds = array<i64: 64, 192>}, {pipeline_mode = #tpu.pipeline_mode<synchronous>, transform_indices = @transform_9, window_bounds = array<i64: 64, 64>}, {pipeline_mode = #tpu.pipeline_mode<synchronous>, transform_indices = @transform_10, window_bounds = array<i64: 64, 256>}, {pipeline_mode = #tpu.pipeline_mode<synchronous>, transform_indices = @transform_11, window_bounds = array<i64: 256, 64>}, {pipeline_mode = #tpu.pipeline_mode<synchronous>, transform_indices = @transform_12, window_bounds = array<i64: 8, 128>}, {pipeline_mode = #tpu.pipeline_mode<synchronous>, transform_indices = @transform_13, window_bounds = array<i64: 64, 128>}, {pipeline_mode = #tpu.pipeline_mode<synchronous>, transform_indices = @transform_14, window_bounds = array<i64: 2, 128>}]} {
    %c0 = arith.constant 0 : index
    %c0_0 = arith.constant 0 : index
    %0 = vector.load %arg1[%c0, %c0_0] : memref<16x768xbf16, #tpu.memory_space<vmem>>, vector<16x768xbf16>
    %c0_1 = arith.constant 0 : index
    %c0_2 = arith.constant 0 : index
    %1 = vector.load %arg2[%c0_1, %c0_2] : memref<768x64xbf16, #tpu.memory_space<vmem>>, vector<768x64xbf16>
    %cst = arith.constant dense<0.000000e+00> : vector<16x64xf32>
    %2 = tpu.matmul %0, %1, %cst {dimension_numbers = #tpu.dot_dimension_numbers<[1], [0], [0], [1], [0, 0, 1, 1], [], []>} : vector<16x768xbf16>, vector<768x64xbf16>, vector<16x64xf32> -> vector<16x64xf32>
    %c0_3 = arith.constant 0 : index
    %c0_4 = arith.constant 0 : index
    %3 = vector.load %arg3[%c0_3, %c0_4] : memref<16x64xf32, #tpu.memory_space<vmem>>, vector<16x64xf32>
    %4 = arith.addf %2, %3 : vector<16x64xf32>
    %5 = tpu.iota {dimensions = array<i32: 1>} : vector<8x8xi32>
    %c5_i32 = arith.constant 5 : i32
    %6 = vector.broadcast %c5_i32 : i32 to vector<8x8xi32>
    %7 = arith.cmpi slt, %5, %6 : vector<8x8xi32>
    %cst_5 = arith.constant 0.000000e+00 : f32
    %cst_6 = arith.constant -1.000000e+30 : f32
    %8 = vector.broadcast %cst_5 : f32 to vector<8x8xf32>
    %9 = vector.broadcast %cst_6 : f32 to vector<8x8xf32>
    %10 = arith.select %7, %8, %9 : vector<8x8xi1>, vector<8x8xf32>
    %c0_7 = arith.constant 0 : index
    %c0_8 = arith.constant 0 : index
    %11 = vector.load %arg4[%c0_7, %c0_8] : memref<16x256xf32, #tpu.memory_space<vmem>>, vector<1x64xf32>
    %c1 = arith.constant 1 : index
    %c0_9 = arith.constant 0 : index
    %12 = vector.load %arg4[%c1, %c0_9] : memref<16x256xf32, #tpu.memory_space<vmem>>, vector<1x64xf32>
    %c2 = arith.constant 2 : index
    %c0_10 = arith.constant 0 : index
    %13 = vector.load %arg4[%c2, %c0_10] : memref<16x256xf32, #tpu.memory_space<vmem>>, vector<1x192xf32>
    %c3 = arith.constant 3 : index
    %c0_11 = arith.constant 0 : index
    %14 = vector.load %arg4[%c3, %c0_11] : memref<16x256xf32, #tpu.memory_space<vmem>>, vector<1x64xf32>
    %c4 = arith.constant 4 : index
    %c0_12 = arith.constant 0 : index
    %15 = vector.load %arg4[%c4, %c0_12] : memref<16x256xf32, #tpu.memory_space<vmem>>, vector<1x64xf32>
    %c5 = arith.constant 5 : index
    %c0_13 = arith.constant 0 : index
    %16 = vector.load %arg4[%c5, %c0_13] : memref<16x256xf32, #tpu.memory_space<vmem>>, vector<1x64xf32>
    %c6 = arith.constant 6 : index
    %c0_14 = arith.constant 0 : index
    %17 = vector.load %arg4[%c6, %c0_14] : memref<16x256xf32, #tpu.memory_space<vmem>>, vector<1x256xf32>
    %c7 = arith.constant 7 : index
    %c0_15 = arith.constant 0 : index
    %18 = vector.load %arg4[%c7, %c0_15] : memref<16x256xf32, #tpu.memory_space<vmem>>, vector<1x64xf32>
    %cst_16 = arith.constant dense<0.000000e+00> : vector<16xf32>
    %19 = vector.multi_reduction <add>, %4, %cst_16 [1] : vector<16x64xf32> to vector<16xf32>
    %20 = vector.shape_cast %19 : vector<16xf32> to vector<16x1xf32>
    %cst_17 = arith.constant 6.400000e+01 : f32
    %21 = vector.broadcast %cst_17 : f32 to vector<16x1xf32>
    %22 = arith.divf %20, %21 : vector<16x1xf32>
    %23 = vector.broadcast %22 : vector<16x1xf32> to vector<16x64xf32>
    %24 = arith.subf %4, %23 : vector<16x64xf32>
    %25 = arith.mulf %24, %24 : vector<16x64xf32>
    %cst_18 = arith.constant dense<0.000000e+00> : vector<16xf32>
    %26 = vector.multi_reduction <add>, %25, %cst_18 [1] : vector<16x64xf32> to vector<16xf32>
    %27 = vector.shape_cast %26 : vector<16xf32> to vector<16x1xf32>
    %cst_19 = arith.constant 6.400000e+01 : f32
    %28 = vector.broadcast %cst_19 : f32 to vector<16x1xf32>
    %29 = arith.divf %27, %28 : vector<16x1xf32>
    %cst_20 = arith.constant 9.99999997E-7 : f32
    %30 = vector.broadcast %cst_20 : f32 to vector<16x1xf32>
    %31 = arith.addf %29, %30 : vector<16x1xf32>
    %32 = math.rsqrt %31 : vector<16x1xf32>
    %33 = vector.broadcast %32 : vector<16x1xf32> to vector<16x64xf32>
    %34 = arith.mulf %24, %33 : vector<16x64xf32>
    %35 = vector.broadcast %11 : vector<1x64xf32> to vector<16x64xf32>
    %36 = arith.mulf %34, %35 : vector<16x64xf32>
    %37 = vector.broadcast %12 : vector<1x64xf32> to vector<16x64xf32>
    %38 = arith.addf %36, %37 : vector<16x64xf32>
    %39 = arith.truncf %38 : vector<16x64xf32> to vector<16x64xbf16>
    %c0_21 = arith.constant 0 : index
    %c0_22 = arith.constant 0 : index
    %40 = vector.load %arg5[%c0_21, %c0_22] : memref<64x192xbf16, #tpu.memory_space<vmem>>, vector<64x192xbf16>
    %cst_23 = arith.constant dense<0.000000e+00> : vector<16x192xf32>
    %41 = tpu.matmul %39, %40, %cst_23 {dimension_numbers = #tpu.dot_dimension_numbers<[1], [0], [0], [1], [0, 0, 1, 1], [], []>} : vector<16x64xbf16>, vector<64x192xbf16>, vector<16x192xf32> -> vector<16x192xf32>
    %42 = vector.broadcast %13 : vector<1x192xf32> to vector<16x192xf32>
    %43 = arith.addf %41, %42 : vector<16x192xf32>
    %44 = vector.extract_strided_slice %43 {offsets = [0, 0], sizes = [8, 32], strides = [1, 1]} : vector<16x192xf32> to vector<8x32xf32>
    %45 = vector.extract_strided_slice %43 {offsets = [0, 32], sizes = [8, 32], strides = [1, 1]} : vector<16x192xf32> to vector<8x32xf32>
    %46 = vector.extract_strided_slice %43 {offsets = [8, 0], sizes = [8, 32], strides = [1, 1]} : vector<16x192xf32> to vector<8x32xf32>
    %47 = vector.extract_strided_slice %43 {offsets = [8, 32], sizes = [8, 32], strides = [1, 1]} : vector<16x192xf32> to vector<8x32xf32>
    %48 = vector.shape_cast %44 : vector<8x32xf32> to vector<1x8x32xf32>
    %49 = vector.shape_cast %45 : vector<8x32xf32> to vector<1x8x32xf32>
    %50 = vector.shape_cast %46 : vector<8x32xf32> to vector<1x8x32xf32>
    %51 = vector.shape_cast %47 : vector<8x32xf32> to vector<1x8x32xf32>
    %52 = tpu.concatenate %48, %49, %50, %51 in 0 : vector<1x8x32xf32>, vector<1x8x32xf32>, vector<1x8x32xf32>, vector<1x8x32xf32> -> vector<4x8x32xf32>
    %53 = arith.truncf %52 : vector<4x8x32xf32> to vector<4x8x32xbf16>
    %54 = vector.extract_strided_slice %43 {offsets = [0, 64], sizes = [8, 32], strides = [1, 1]} : vector<16x192xf32> to vector<8x32xf32>
    %55 = vector.extract_strided_slice %43 {offsets = [0, 96], sizes = [8, 32], strides = [1, 1]} : vector<16x192xf32> to vector<8x32xf32>
    %56 = vector.extract_strided_slice %43 {offsets = [8, 64], sizes = [8, 32], strides = [1, 1]} : vector<16x192xf32> to vector<8x32xf32>
    %57 = vector.extract_strided_slice %43 {offsets = [8, 96], sizes = [8, 32], strides = [1, 1]} : vector<16x192xf32> to vector<8x32xf32>
    %58 = vector.shape_cast %54 : vector<8x32xf32> to vector<1x8x32xf32>
    %59 = vector.shape_cast %55 : vector<8x32xf32> to vector<1x8x32xf32>
    %60 = vector.shape_cast %56 : vector<8x32xf32> to vector<1x8x32xf32>
    %61 = vector.shape_cast %57 : vector<8x32xf32> to vector<1x8x32xf32>
    %62 = tpu.concatenate %58, %59, %60, %61 in 0 : vector<1x8x32xf32>, vector<1x8x32xf32>, vector<1x8x32xf32>, vector<1x8x32xf32> -> vector<4x8x32xf32>
    %63 = arith.truncf %62 : vector<4x8x32xf32> to vector<4x8x32xbf16>
    %64 = vector.extract_strided_slice %43 {offsets = [0, 128], sizes = [8, 32], strides = [1, 1]} : vector<16x192xf32> to vector<8x32xf32>
    %65 = vector.extract_strided_slice %43 {offsets = [0, 160], sizes = [8, 32], strides = [1, 1]} : vector<16x192xf32> to vector<8x32xf32>
    %66 = vector.extract_strided_slice %43 {offsets = [8, 128], sizes = [8, 32], strides = [1, 1]} : vector<16x192xf32> to vector<8x32xf32>
    %67 = vector.extract_strided_slice %43 {offsets = [8, 160], sizes = [8, 32], strides = [1, 1]} : vector<16x192xf32> to vector<8x32xf32>
    %68 = vector.shape_cast %64 : vector<8x32xf32> to vector<1x8x32xf32>
    %69 = vector.shape_cast %65 : vector<8x32xf32> to vector<1x8x32xf32>
    %70 = vector.shape_cast %66 : vector<8x32xf32> to vector<1x8x32xf32>
    %71 = vector.shape_cast %67 : vector<8x32xf32> to vector<1x8x32xf32>
    %72 = tpu.concatenate %68, %69, %70, %71 in 0 : vector<1x8x32xf32>, vector<1x8x32xf32>, vector<1x8x32xf32>, vector<1x8x32xf32> -> vector<4x8x32xf32>
    %73 = arith.truncf %72 : vector<4x8x32xf32> to vector<4x8x32xbf16>
    "tpu.trace_start"() <{level = 10 : i32, message = "bqd,bkd->bqk"}> : () -> ()
    %cst_24 = arith.constant dense<0.000000e+00> : vector<4x8x8xf32>
    %74 = tpu.matmul %53, %63, %cst_24 {dimension_numbers = #tpu.dot_dimension_numbers<[2], [2], [1], [1], [0, 0, 0, 1, 1, 1], [0], [0]>} : vector<4x8x32xbf16>, vector<4x8x32xbf16>, vector<4x8x8xf32> -> vector<4x8x8xf32>
    "tpu.trace_stop"() : () -> ()
    %cst_25 = arith.constant 0.176776692 : f32
    %75 = vector.broadcast %cst_25 : f32 to vector<4x8x8xf32>
    %76 = arith.mulf %74, %75 : vector<4x8x8xf32>
    %77 = vector.shape_cast %10 : vector<8x8xf32> to vector<1x8x8xf32>
    %78 = vector.broadcast %77 : vector<1x8x8xf32> to vector<4x8x8xf32>
    %79 = arith.addf %76, %78 : vector<4x8x8xf32>
    %cst_26 = arith.constant dense<0xFF800000> : vector<4x8xf32>
    %80 = vector.multi_reduction <maximumf>, %79, %cst_26 [2] : vector<4x8x8xf32> to vector<4x8xf32>
    %81 = vector.shape_cast %80 : vector<4x8xf32> to vector<4x8x1xf32>
    %82 = vector.broadcast %81 : vector<4x8x1xf32> to vector<4x8x8xf32>
    %83 = arith.subf %79, %82 : vector<4x8x8xf32>
    %84 = math.exp %83 : vector<4x8x8xf32>
    %cst_27 = arith.constant dense<0.000000e+00> : vector<4x8xf32>
    %85 = vector.multi_reduction <add>, %84, %cst_27 [2] : vector<4x8x8xf32> to vector<4x8xf32>
    %86 = vector.shape_cast %85 : vector<4x8xf32> to vector<4x8x1xf32>
    %87 = tpu.reciprocal %86 {approx = true} : vector<4x8x1xf32> -> vector<4x8x1xf32>
    %88 = vector.broadcast %87 : vector<4x8x1xf32> to vector<4x8x8xf32>
    %89 = arith.mulf %84, %88 : vector<4x8x8xf32>
    %90 = arith.truncf %89 : vector<4x8x8xf32> to vector<4x8x8xbf16>
    "tpu.trace_start"() <{level = 10 : i32, message = "bqk,bkd->bqd"}> : () -> ()
    %cst_28 = arith.constant dense<0.000000e+00> : vector<4x8x32xf32>
    %91 = tpu.matmul %90, %73, %cst_28 {dimension_numbers = #tpu.dot_dimension_numbers<[2], [1], [1], [2], [0, 0, 0, 1, 1, 2], [0], [0]>} : vector<4x8x8xbf16>, vector<4x8x32xbf16>, vector<4x8x32xf32> -> vector<4x8x32xf32>
    "tpu.trace_stop"() : () -> ()
    %92 = vector.extract_strided_slice %91 {offsets = [0, 0, 0], sizes = [1, 8, 32], strides = [1, 1, 1]} : vector<4x8x32xf32> to vector<1x8x32xf32>
    %93 = vector.shape_cast %92 : vector<1x8x32xf32> to vector<8x32xf32>
    %94 = vector.extract_strided_slice %91 {offsets = [1, 0, 0], sizes = [1, 8, 32], strides = [1, 1, 1]} : vector<4x8x32xf32> to vector<1x8x32xf32>
    %95 = vector.shape_cast %94 : vector<1x8x32xf32> to vector<8x32xf32>
    %96 = tpu.concatenate %93, %95 in 1 : vector<8x32xf32>, vector<8x32xf32> -> vector<8x64xf32>
    %97 = vector.extract_strided_slice %91 {offsets = [2, 0, 0], sizes = [1, 8, 32], strides = [1, 1, 1]} : vector<4x8x32xf32> to vector<1x8x32xf32>
    %98 = vector.shape_cast %97 : vector<1x8x32xf32> to vector<8x32xf32>
    %99 = vector.extract_strided_slice %91 {offsets = [3, 0, 0], sizes = [1, 8, 32], strides = [1, 1, 1]} : vector<4x8x32xf32> to vector<1x8x32xf32>
    %100 = vector.shape_cast %99 : vector<1x8x32xf32> to vector<8x32xf32>
    %101 = tpu.concatenate %98, %100 in 1 : vector<8x32xf32>, vector<8x32xf32> -> vector<8x64xf32>
    %102 = tpu.concatenate %96, %101 in 0 : vector<8x64xf32>, vector<8x64xf32> -> vector<16x64xf32>
    %103 = arith.truncf %102 : vector<16x64xf32> to vector<16x64xbf16>
    %c0_29 = arith.constant 0 : index
    %c0_30 = arith.constant 0 : index
    %104 = vector.load %arg6[%c0_29, %c0_30] : memref<64x64xbf16, #tpu.memory_space<vmem>>, vector<64x64xbf16>
    %cst_31 = arith.constant dense<0.000000e+00> : vector<16x64xf32>
    %105 = tpu.matmul %103, %104, %cst_31 {dimension_numbers = #tpu.dot_dimension_numbers<[1], [0], [0], [1], [0, 0, 1, 1], [], []>} : vector<16x64xbf16>, vector<64x64xbf16>, vector<16x64xf32> -> vector<16x64xf32>
    %106 = arith.addf %4, %105 : vector<16x64xf32>
    %107 = vector.broadcast %14 : vector<1x64xf32> to vector<16x64xf32>
    %108 = arith.addf %106, %107 : vector<16x64xf32>
    %cst_32 = arith.constant dense<0.000000e+00> : vector<16xf32>
    %109 = vector.multi_reduction <add>, %108, %cst_32 [1] : vector<16x64xf32> to vector<16xf32>
    %110 = vector.shape_cast %109 : vector<16xf32> to vector<16x1xf32>
    %cst_33 = arith.constant 6.400000e+01 : f32
    %111 = vector.broadcast %cst_33 : f32 to vector<16x1xf32>
    %112 = arith.divf %110, %111 : vector<16x1xf32>
    %113 = vector.broadcast %112 : vector<16x1xf32> to vector<16x64xf32>
    %114 = arith.subf %108, %113 : vector<16x64xf32>
    %115 = arith.mulf %114, %114 : vector<16x64xf32>
    %cst_34 = arith.constant dense<0.000000e+00> : vector<16xf32>
    %116 = vector.multi_reduction <add>, %115, %cst_34 [1] : vector<16x64xf32> to vector<16xf32>
    %117 = vector.shape_cast %116 : vector<16xf32> to vector<16x1xf32>
    %cst_35 = arith.constant 6.400000e+01 : f32
    %118 = vector.broadcast %cst_35 : f32 to vector<16x1xf32>
    %119 = arith.divf %117, %118 : vector<16x1xf32>
    %cst_36 = arith.constant 9.99999997E-7 : f32
    %120 = vector.broadcast %cst_36 : f32 to vector<16x1xf32>
    %121 = arith.addf %119, %120 : vector<16x1xf32>
    %122 = math.rsqrt %121 : vector<16x1xf32>
    %123 = vector.broadcast %122 : vector<16x1xf32> to vector<16x64xf32>
    %124 = arith.mulf %114, %123 : vector<16x64xf32>
    %125 = vector.broadcast %15 : vector<1x64xf32> to vector<16x64xf32>
    %126 = arith.mulf %124, %125 : vector<16x64xf32>
    %127 = vector.broadcast %16 : vector<1x64xf32> to vector<16x64xf32>
    %128 = arith.addf %126, %127 : vector<16x64xf32>
    %129 = arith.truncf %128 : vector<16x64xf32> to vector<16x64xbf16>
    %c0_37 = arith.constant 0 : index
    %c0_38 = arith.constant 0 : index
    %130 = vector.load %arg7[%c0_37, %c0_38] : memref<64x256xbf16, #tpu.memory_space<vmem>>, vector<64x256xbf16>
    %cst_39 = arith.constant dense<0.000000e+00> : vector<16x256xf32>
    %131 = tpu.matmul %129, %130, %cst_39 {dimension_numbers = #tpu.dot_dimension_numbers<[1], [0], [0], [1], [0, 0, 1, 1], [], []>} : vector<16x64xbf16>, vector<64x256xbf16>, vector<16x256xf32> -> vector<16x256xf32>
    %132 = vector.broadcast %17 : vector<1x256xf32> to vector<16x256xf32>
    %133 = arith.addf %131, %132 : vector<16x256xf32>
    %cst_40 = arith.constant 5.000000e-01 : f32
    %134 = vector.broadcast %cst_40 : f32 to vector<16x256xf32>
    %135 = arith.mulf %134, %133 : vector<16x256xf32>
    %cst_41 = arith.constant 4.471500e-02 : f32
    %136 = vector.broadcast %cst_41 : f32 to vector<16x256xf32>
    %137 = arith.mulf %136, %133 : vector<16x256xf32>
    %138 = arith.mulf %137, %133 : vector<16x256xf32>
    %139 = arith.mulf %138, %133 : vector<16x256xf32>
    %140 = arith.addf %133, %139 : vector<16x256xf32>
    %cst_42 = arith.constant 0.797884583 : f32
    %141 = vector.broadcast %cst_42 : f32 to vector<16x256xf32>
    %142 = arith.mulf %141, %140 : vector<16x256xf32>
    %143 = math.tanh %142 : vector<16x256xf32>
    %cst_43 = arith.constant 1.000000e+00 : f32
    %144 = vector.broadcast %cst_43 : f32 to vector<16x256xf32>
    %145 = arith.addf %144, %143 : vector<16x256xf32>
    %146 = arith.mulf %135, %145 : vector<16x256xf32>
    %147 = arith.truncf %146 : vector<16x256xf32> to vector<16x256xbf16>
    %c0_44 = arith.constant 0 : index
    %c0_45 = arith.constant 0 : index
    %148 = vector.load %arg8[%c0_44, %c0_45] : memref<256x64xbf16, #tpu.memory_space<vmem>>, vector<256x64xbf16>
    %cst_46 = arith.constant dense<0.000000e+00> : vector<16x64xf32>
    %149 = tpu.matmul %147, %148, %cst_46 {dimension_numbers = #tpu.dot_dimension_numbers<[1], [0], [0], [1], [0, 0, 1, 1], [], []>} : vector<16x256xbf16>, vector<256x64xbf16>, vector<16x64xf32> -> vector<16x64xf32>
    %150 = arith.addf %108, %149 : vector<16x64xf32>
    %151 = vector.broadcast %18 : vector<1x64xf32> to vector<16x64xf32>
    %152 = arith.addf %150, %151 : vector<16x64xf32>
    %c8 = arith.constant 8 : index
    %c0_47 = arith.constant 0 : index
    %153 = vector.load %arg4[%c8, %c0_47] : memref<16x256xf32, #tpu.memory_space<vmem>>, vector<1x64xf32>
    %c9 = arith.constant 9 : index
    %c0_48 = arith.constant 0 : index
    %154 = vector.load %arg4[%c9, %c0_48] : memref<16x256xf32, #tpu.memory_space<vmem>>, vector<1x64xf32>
    %c10 = arith.constant 10 : index
    %c0_49 = arith.constant 0 : index
    %155 = vector.load %arg4[%c10, %c0_49] : memref<16x256xf32, #tpu.memory_space<vmem>>, vector<1x192xf32>
    %c11 = arith.constant 11 : index
    %c0_50 = arith.constant 0 : index
    %156 = vector.load %arg4[%c11, %c0_50] : memref<16x256xf32, #tpu.memory_space<vmem>>, vector<1x64xf32>
    %c12 = arith.constant 12 : index
    %c0_51 = arith.constant 0 : index
    %157 = vector.load %arg4[%c12, %c0_51] : memref<16x256xf32, #tpu.memory_space<vmem>>, vector<1x64xf32>
    %c13 = arith.constant 13 : index
    %c0_52 = arith.constant 0 : index
    %158 = vector.load %arg4[%c13, %c0_52] : memref<16x256xf32, #tpu.memory_space<vmem>>, vector<1x64xf32>
    %c14 = arith.constant 14 : index
    %c0_53 = arith.constant 0 : index
    %159 = vector.load %arg4[%c14, %c0_53] : memref<16x256xf32, #tpu.memory_space<vmem>>, vector<1x256xf32>
    %c15 = arith.constant 15 : index
    %c0_54 = arith.constant 0 : index
    %160 = vector.load %arg4[%c15, %c0_54] : memref<16x256xf32, #tpu.memory_space<vmem>>, vector<1x64xf32>
    %cst_55 = arith.constant dense<0.000000e+00> : vector<16xf32>
    %161 = vector.multi_reduction <add>, %152, %cst_55 [1] : vector<16x64xf32> to vector<16xf32>
    %162 = vector.shape_cast %161 : vector<16xf32> to vector<16x1xf32>
    %cst_56 = arith.constant 6.400000e+01 : f32
    %163 = vector.broadcast %cst_56 : f32 to vector<16x1xf32>
    %164 = arith.divf %162, %163 : vector<16x1xf32>
    %165 = vector.broadcast %164 : vector<16x1xf32> to vector<16x64xf32>
    %166 = arith.subf %152, %165 : vector<16x64xf32>
    %167 = arith.mulf %166, %166 : vector<16x64xf32>
    %cst_57 = arith.constant dense<0.000000e+00> : vector<16xf32>
    %168 = vector.multi_reduction <add>, %167, %cst_57 [1] : vector<16x64xf32> to vector<16xf32>
    %169 = vector.shape_cast %168 : vector<16xf32> to vector<16x1xf32>
    %cst_58 = arith.constant 6.400000e+01 : f32
    %170 = vector.broadcast %cst_58 : f32 to vector<16x1xf32>
    %171 = arith.divf %169, %170 : vector<16x1xf32>
    %cst_59 = arith.constant 9.99999997E-7 : f32
    %172 = vector.broadcast %cst_59 : f32 to vector<16x1xf32>
    %173 = arith.addf %171, %172 : vector<16x1xf32>
    %174 = math.rsqrt %173 : vector<16x1xf32>
    %175 = vector.broadcast %174 : vector<16x1xf32> to vector<16x64xf32>
    %176 = arith.mulf %166, %175 : vector<16x64xf32>
    %177 = vector.broadcast %153 : vector<1x64xf32> to vector<16x64xf32>
    %178 = arith.mulf %176, %177 : vector<16x64xf32>
    %179 = vector.broadcast %154 : vector<1x64xf32> to vector<16x64xf32>
    %180 = arith.addf %178, %179 : vector<16x64xf32>
    %181 = arith.truncf %180 : vector<16x64xf32> to vector<16x64xbf16>
    %c0_60 = arith.constant 0 : index
    %c0_61 = arith.constant 0 : index
    %182 = vector.load %arg9[%c0_60, %c0_61] : memref<64x192xbf16, #tpu.memory_space<vmem>>, vector<64x192xbf16>
    %cst_62 = arith.constant dense<0.000000e+00> : vector<16x192xf32>
    %183 = tpu.matmul %181, %182, %cst_62 {dimension_numbers = #tpu.dot_dimension_numbers<[1], [0], [0], [1], [0, 0, 1, 1], [], []>} : vector<16x64xbf16>, vector<64x192xbf16>, vector<16x192xf32> -> vector<16x192xf32>
    %184 = vector.broadcast %155 : vector<1x192xf32> to vector<16x192xf32>
    %185 = arith.addf %183, %184 : vector<16x192xf32>
    %186 = vector.extract_strided_slice %185 {offsets = [0, 0], sizes = [8, 32], strides = [1, 1]} : vector<16x192xf32> to vector<8x32xf32>
    %187 = vector.extract_strided_slice %185 {offsets = [0, 32], sizes = [8, 32], strides = [1, 1]} : vector<16x192xf32> to vector<8x32xf32>
    %188 = vector.extract_strided_slice %185 {offsets = [8, 0], sizes = [8, 32], strides = [1, 1]} : vector<16x192xf32> to vector<8x32xf32>
    %189 = vector.extract_strided_slice %185 {offsets = [8, 32], sizes = [8, 32], strides = [1, 1]} : vector<16x192xf32> to vector<8x32xf32>
    %190 = vector.shape_cast %186 : vector<8x32xf32> to vector<1x8x32xf32>
    %191 = vector.shape_cast %187 : vector<8x32xf32> to vector<1x8x32xf32>
    %192 = vector.shape_cast %188 : vector<8x32xf32> to vector<1x8x32xf32>
    %193 = vector.shape_cast %189 : vector<8x32xf32> to vector<1x8x32xf32>
    %194 = tpu.concatenate %190, %191, %192, %193 in 0 : vector<1x8x32xf32>, vector<1x8x32xf32>, vector<1x8x32xf32>, vector<1x8x32xf32> -> vector<4x8x32xf32>
    %195 = arith.truncf %194 : vector<4x8x32xf32> to vector<4x8x32xbf16>
    %196 = vector.extract_strided_slice %185 {offsets = [0, 64], sizes = [8, 32], strides = [1, 1]} : vector<16x192xf32> to vector<8x32xf32>
    %197 = vector.extract_strided_slice %185 {offsets = [0, 96], sizes = [8, 32], strides = [1, 1]} : vector<16x192xf32> to vector<8x32xf32>
    %198 = vector.extract_strided_slice %185 {offsets = [8, 64], sizes = [8, 32], strides = [1, 1]} : vector<16x192xf32> to vector<8x32xf32>
    %199 = vector.extract_strided_slice %185 {offsets = [8, 96], sizes = [8, 32], strides = [1, 1]} : vector<16x192xf32> to vector<8x32xf32>
    %200 = vector.shape_cast %196 : vector<8x32xf32> to vector<1x8x32xf32>
    %201 = vector.shape_cast %197 : vector<8x32xf32> to vector<1x8x32xf32>
    %202 = vector.shape_cast %198 : vector<8x32xf32> to vector<1x8x32xf32>
    %203 = vector.shape_cast %199 : vector<8x32xf32> to vector<1x8x32xf32>
    %204 = tpu.concatenate %200, %201, %202, %203 in 0 : vector<1x8x32xf32>, vector<1x8x32xf32>, vector<1x8x32xf32>, vector<1x8x32xf32> -> vector<4x8x32xf32>
    %205 = arith.truncf %204 : vector<4x8x32xf32> to vector<4x8x32xbf16>
    %206 = vector.extract_strided_slice %185 {offsets = [0, 128], sizes = [8, 32], strides = [1, 1]} : vector<16x192xf32> to vector<8x32xf32>
    %207 = vector.extract_strided_slice %185 {offsets = [0, 160], sizes = [8, 32], strides = [1, 1]} : vector<16x192xf32> to vector<8x32xf32>
    %208 = vector.extract_strided_slice %185 {offsets = [8, 128], sizes = [8, 32], strides = [1, 1]} : vector<16x192xf32> to vector<8x32xf32>
    %209 = vector.extract_strided_slice %185 {offsets = [8, 160], sizes = [8, 32], strides = [1, 1]} : vector<16x192xf32> to vector<8x32xf32>
    %210 = vector.shape_cast %206 : vector<8x32xf32> to vector<1x8x32xf32>
    %211 = vector.shape_cast %207 : vector<8x32xf32> to vector<1x8x32xf32>
    %212 = vector.shape_cast %208 : vector<8x32xf32> to vector<1x8x32xf32>
    %213 = vector.shape_cast %209 : vector<8x32xf32> to vector<1x8x32xf32>
    %214 = tpu.concatenate %210, %211, %212, %213 in 0 : vector<1x8x32xf32>, vector<1x8x32xf32>, vector<1x8x32xf32>, vector<1x8x32xf32> -> vector<4x8x32xf32>
    %215 = arith.truncf %214 : vector<4x8x32xf32> to vector<4x8x32xbf16>
    "tpu.trace_start"() <{level = 10 : i32, message = "bqd,bkd->bqk"}> : () -> ()
    %cst_63 = arith.constant dense<0.000000e+00> : vector<4x8x8xf32>
    %216 = tpu.matmul %195, %205, %cst_63 {dimension_numbers = #tpu.dot_dimension_numbers<[2], [2], [1], [1], [0, 0, 0, 1, 1, 1], [0], [0]>} : vector<4x8x32xbf16>, vector<4x8x32xbf16>, vector<4x8x8xf32> -> vector<4x8x8xf32>
    "tpu.trace_stop"() : () -> ()
    %cst_64 = arith.constant 0.176776692 : f32
    %217 = vector.broadcast %cst_64 : f32 to vector<4x8x8xf32>
    %218 = arith.mulf %216, %217 : vector<4x8x8xf32>
    %219 = vector.shape_cast %10 : vector<8x8xf32> to vector<1x8x8xf32>
    %220 = vector.broadcast %219 : vector<1x8x8xf32> to vector<4x8x8xf32>
    %221 = arith.addf %218, %220 : vector<4x8x8xf32>
    %cst_65 = arith.constant dense<0xFF800000> : vector<4x8xf32>
    %222 = vector.multi_reduction <maximumf>, %221, %cst_65 [2] : vector<4x8x8xf32> to vector<4x8xf32>
    %223 = vector.shape_cast %222 : vector<4x8xf32> to vector<4x8x1xf32>
    %224 = vector.broadcast %223 : vector<4x8x1xf32> to vector<4x8x8xf32>
    %225 = arith.subf %221, %224 : vector<4x8x8xf32>
    %226 = math.exp %225 : vector<4x8x8xf32>
    %cst_66 = arith.constant dense<0.000000e+00> : vector<4x8xf32>
    %227 = vector.multi_reduction <add>, %226, %cst_66 [2] : vector<4x8x8xf32> to vector<4x8xf32>
    %228 = vector.shape_cast %227 : vector<4x8xf32> to vector<4x8x1xf32>
    %229 = tpu.reciprocal %228 {approx = true} : vector<4x8x1xf32> -> vector<4x8x1xf32>
    %230 = vector.broadcast %229 : vector<4x8x1xf32> to vector<4x8x8xf32>
    %231 = arith.mulf %226, %230 : vector<4x8x8xf32>
    %232 = arith.truncf %231 : vector<4x8x8xf32> to vector<4x8x8xbf16>
    "tpu.trace_start"() <{level = 10 : i32, message = "bqk,bkd->bqd"}> : () -> ()
    %cst_67 = arith.constant dense<0.000000e+00> : vector<4x8x32xf32>
    %233 = tpu.matmul %232, %215, %cst_67 {dimension_numbers = #tpu.dot_dimension_numbers<[2], [1], [1], [2], [0, 0, 0, 1, 1, 2], [0], [0]>} : vector<4x8x8xbf16>, vector<4x8x32xbf16>, vector<4x8x32xf32> -> vector<4x8x32xf32>
    "tpu.trace_stop"() : () -> ()
    %234 = vector.extract_strided_slice %233 {offsets = [0, 0, 0], sizes = [1, 8, 32], strides = [1, 1, 1]} : vector<4x8x32xf32> to vector<1x8x32xf32>
    %235 = vector.shape_cast %234 : vector<1x8x32xf32> to vector<8x32xf32>
    %236 = vector.extract_strided_slice %233 {offsets = [1, 0, 0], sizes = [1, 8, 32], strides = [1, 1, 1]} : vector<4x8x32xf32> to vector<1x8x32xf32>
    %237 = vector.shape_cast %236 : vector<1x8x32xf32> to vector<8x32xf32>
    %238 = tpu.concatenate %235, %237 in 1 : vector<8x32xf32>, vector<8x32xf32> -> vector<8x64xf32>
    %239 = vector.extract_strided_slice %233 {offsets = [2, 0, 0], sizes = [1, 8, 32], strides = [1, 1, 1]} : vector<4x8x32xf32> to vector<1x8x32xf32>
    %240 = vector.shape_cast %239 : vector<1x8x32xf32> to vector<8x32xf32>
    %241 = vector.extract_strided_slice %233 {offsets = [3, 0, 0], sizes = [1, 8, 32], strides = [1, 1, 1]} : vector<4x8x32xf32> to vector<1x8x32xf32>
    %242 = vector.shape_cast %241 : vector<1x8x32xf32> to vector<8x32xf32>
    %243 = tpu.concatenate %240, %242 in 1 : vector<8x32xf32>, vector<8x32xf32> -> vector<8x64xf32>
    %244 = tpu.concatenate %238, %243 in 0 : vector<8x64xf32>, vector<8x64xf32> -> vector<16x64xf32>
    %245 = arith.truncf %244 : vector<16x64xf32> to vector<16x64xbf16>
    %c0_68 = arith.constant 0 : index
    %c0_69 = arith.constant 0 : index
    %246 = vector.load %arg10[%c0_68, %c0_69] : memref<64x64xbf16, #tpu.memory_space<vmem>>, vector<64x64xbf16>
    %cst_70 = arith.constant dense<0.000000e+00> : vector<16x64xf32>
    %247 = tpu.matmul %245, %246, %cst_70 {dimension_numbers = #tpu.dot_dimension_numbers<[1], [0], [0], [1], [0, 0, 1, 1], [], []>} : vector<16x64xbf16>, vector<64x64xbf16>, vector<16x64xf32> -> vector<16x64xf32>
    %248 = arith.addf %152, %247 : vector<16x64xf32>
    %249 = vector.broadcast %156 : vector<1x64xf32> to vector<16x64xf32>
    %250 = arith.addf %248, %249 : vector<16x64xf32>
    %cst_71 = arith.constant dense<0.000000e+00> : vector<16xf32>
    %251 = vector.multi_reduction <add>, %250, %cst_71 [1] : vector<16x64xf32> to vector<16xf32>
    %252 = vector.shape_cast %251 : vector<16xf32> to vector<16x1xf32>
    %cst_72 = arith.constant 6.400000e+01 : f32
    %253 = vector.broadcast %cst_72 : f32 to vector<16x1xf32>
    %254 = arith.divf %252, %253 : vector<16x1xf32>
    %255 = vector.broadcast %254 : vector<16x1xf32> to vector<16x64xf32>
    %256 = arith.subf %250, %255 : vector<16x64xf32>
    %257 = arith.mulf %256, %256 : vector<16x64xf32>
    %cst_73 = arith.constant dense<0.000000e+00> : vector<16xf32>
    %258 = vector.multi_reduction <add>, %257, %cst_73 [1] : vector<16x64xf32> to vector<16xf32>
    %259 = vector.shape_cast %258 : vector<16xf32> to vector<16x1xf32>
    %cst_74 = arith.constant 6.400000e+01 : f32
    %260 = vector.broadcast %cst_74 : f32 to vector<16x1xf32>
    %261 = arith.divf %259, %260 : vector<16x1xf32>
    %cst_75 = arith.constant 9.99999997E-7 : f32
    %262 = vector.broadcast %cst_75 : f32 to vector<16x1xf32>
    %263 = arith.addf %261, %262 : vector<16x1xf32>
    %264 = math.rsqrt %263 : vector<16x1xf32>
    %265 = vector.broadcast %264 : vector<16x1xf32> to vector<16x64xf32>
    %266 = arith.mulf %256, %265 : vector<16x64xf32>
    %267 = vector.broadcast %157 : vector<1x64xf32> to vector<16x64xf32>
    %268 = arith.mulf %266, %267 : vector<16x64xf32>
    %269 = vector.broadcast %158 : vector<1x64xf32> to vector<16x64xf32>
    %270 = arith.addf %268, %269 : vector<16x64xf32>
    %271 = arith.truncf %270 : vector<16x64xf32> to vector<16x64xbf16>
    %c0_76 = arith.constant 0 : index
    %c0_77 = arith.constant 0 : index
    %272 = vector.load %arg11[%c0_76, %c0_77] : memref<64x256xbf16, #tpu.memory_space<vmem>>, vector<64x256xbf16>
    %cst_78 = arith.constant dense<0.000000e+00> : vector<16x256xf32>
    %273 = tpu.matmul %271, %272, %cst_78 {dimension_numbers = #tpu.dot_dimension_numbers<[1], [0], [0], [1], [0, 0, 1, 1], [], []>} : vector<16x64xbf16>, vector<64x256xbf16>, vector<16x256xf32> -> vector<16x256xf32>
    %274 = vector.broadcast %159 : vector<1x256xf32> to vector<16x256xf32>
    %275 = arith.addf %273, %274 : vector<16x256xf32>
    %cst_79 = arith.constant 5.000000e-01 : f32
    %276 = vector.broadcast %cst_79 : f32 to vector<16x256xf32>
    %277 = arith.mulf %276, %275 : vector<16x256xf32>
    %cst_80 = arith.constant 4.471500e-02 : f32
    %278 = vector.broadcast %cst_80 : f32 to vector<16x256xf32>
    %279 = arith.mulf %278, %275 : vector<16x256xf32>
    %280 = arith.mulf %279, %275 : vector<16x256xf32>
    %281 = arith.mulf %280, %275 : vector<16x256xf32>
    %282 = arith.addf %275, %281 : vector<16x256xf32>
    %cst_81 = arith.constant 0.797884583 : f32
    %283 = vector.broadcast %cst_81 : f32 to vector<16x256xf32>
    %284 = arith.mulf %283, %282 : vector<16x256xf32>
    %285 = math.tanh %284 : vector<16x256xf32>
    %cst_82 = arith.constant 1.000000e+00 : f32
    %286 = vector.broadcast %cst_82 : f32 to vector<16x256xf32>
    %287 = arith.addf %286, %285 : vector<16x256xf32>
    %288 = arith.mulf %277, %287 : vector<16x256xf32>
    %289 = arith.truncf %288 : vector<16x256xf32> to vector<16x256xbf16>
    %c0_83 = arith.constant 0 : index
    %c0_84 = arith.constant 0 : index
    %290 = vector.load %arg12[%c0_83, %c0_84] : memref<256x64xbf16, #tpu.memory_space<vmem>>, vector<256x64xbf16>
    %cst_85 = arith.constant dense<0.000000e+00> : vector<16x64xf32>
    %291 = tpu.matmul %289, %290, %cst_85 {dimension_numbers = #tpu.dot_dimension_numbers<[1], [0], [0], [1], [0, 0, 1, 1], [], []>} : vector<16x256xbf16>, vector<256x64xbf16>, vector<16x64xf32> -> vector<16x64xf32>
    %292 = arith.addf %250, %291 : vector<16x64xf32>
    %293 = vector.broadcast %160 : vector<1x64xf32> to vector<16x64xf32>
    %294 = arith.addf %292, %293 : vector<16x64xf32>
    %295 = vector.extract_strided_slice %294 {offsets = [0, 0], sizes = [1, 64], strides = [1, 1]} : vector<16x64xf32> to vector<1x64xf32>
    %296 = vector.extract_strided_slice %294 {offsets = [8, 0], sizes = [1, 64], strides = [1, 1]} : vector<16x64xf32> to vector<1x64xf32>
    %297 = tpu.concatenate %295, %296 in 0 : vector<1x64xf32>, vector<1x64xf32> -> vector<2x64xf32>
    %c0_86 = arith.constant 0 : index
    %c0_87 = arith.constant 0 : index
    %298 = vector.load %arg13[%c0_86, %c0_87] : memref<8x128xf32, #tpu.memory_space<vmem>>, vector<1x64xf32>
    %c1_88 = arith.constant 1 : index
    %c0_89 = arith.constant 0 : index
    %299 = vector.load %arg13[%c1_88, %c0_89] : memref<8x128xf32, #tpu.memory_space<vmem>>, vector<1x64xf32>
    %c2_90 = arith.constant 2 : index
    %c0_91 = arith.constant 0 : index
    %300 = vector.load %arg13[%c2_90, %c0_91] : memref<8x128xf32, #tpu.memory_space<vmem>>, vector<1x128xf32>
    %cst_92 = arith.constant dense<0.000000e+00> : vector<2xf32>
    %301 = vector.multi_reduction <add>, %297, %cst_92 [1] : vector<2x64xf32> to vector<2xf32>
    %302 = vector.shape_cast %301 : vector<2xf32> to vector<2x1xf32>
    %cst_93 = arith.constant 6.400000e+01 : f32
    %303 = vector.broadcast %cst_93 : f32 to vector<2x1xf32>
    %304 = arith.divf %302, %303 : vector<2x1xf32>
    %305 = vector.broadcast %304 : vector<2x1xf32> to vector<2x64xf32>
    %306 = arith.subf %297, %305 : vector<2x64xf32>
    %307 = arith.mulf %306, %306 : vector<2x64xf32>
    %cst_94 = arith.constant dense<0.000000e+00> : vector<2xf32>
    %308 = vector.multi_reduction <add>, %307, %cst_94 [1] : vector<2x64xf32> to vector<2xf32>
    %309 = vector.shape_cast %308 : vector<2xf32> to vector<2x1xf32>
    %cst_95 = arith.constant 6.400000e+01 : f32
    %310 = vector.broadcast %cst_95 : f32 to vector<2x1xf32>
    %311 = arith.divf %309, %310 : vector<2x1xf32>
    %cst_96 = arith.constant 9.99999997E-7 : f32
    %312 = vector.broadcast %cst_96 : f32 to vector<2x1xf32>
    %313 = arith.addf %311, %312 : vector<2x1xf32>
    %314 = math.rsqrt %313 : vector<2x1xf32>
    %315 = vector.broadcast %314 : vector<2x1xf32> to vector<2x64xf32>
    %316 = arith.mulf %306, %315 : vector<2x64xf32>
    %317 = vector.broadcast %298 : vector<1x64xf32> to vector<2x64xf32>
    %318 = arith.mulf %316, %317 : vector<2x64xf32>
    %319 = vector.broadcast %299 : vector<1x64xf32> to vector<2x64xf32>
    %320 = arith.addf %318, %319 : vector<2x64xf32>
    %321 = arith.truncf %320 : vector<2x64xf32> to vector<2x64xbf16>
    %c0_97 = arith.constant 0 : index
    %c0_98 = arith.constant 0 : index
    %322 = vector.load %arg14[%c0_97, %c0_98] : memref<64x128xbf16, #tpu.memory_space<vmem>>, vector<64x128xbf16>
    %cst_99 = arith.constant dense<0.000000e+00> : vector<2x128xf32>
    %323 = tpu.matmul %321, %322, %cst_99 {dimension_numbers = #tpu.dot_dimension_numbers<[1], [0], [0], [1], [0, 0, 1, 1], [], []>} : vector<2x64xbf16>, vector<64x128xbf16>, vector<2x128xf32> -> vector<2x128xf32>
    %324 = vector.broadcast %300 : vector<1x128xf32> to vector<2x128xf32>
    %325 = arith.addf %323, %324 : vector<2x128xf32>
    %c0_100 = arith.constant 0 : index
    %c0_101 = arith.constant 0 : index
    %326 = vector.load %arg15[%c0_100, %c0_101] : memref<2x128xf32, #tpu.memory_space<vmem>>, vector<2x128xf32>
    tpu.vector_store %arg15[%c0_100, %c0_101], %325 {strides = array<i32>} : memref<2x128xf32, #tpu.memory_space<vmem>>, vector<2x128xf32>,
    return
  }
  func.func @transform_0(%arg0: i32) -> (i32, i32) {
    %c0_i32 = arith.constant 0 : i32
    %c0_i32_0 = arith.constant 0 : i32
    %c0_i32_1 = arith.constant 0 : i32
    return %c0_i32, %c0_i32_0 : i32, i32
  }
  func.func @transform_1(%arg0: i32) -> (i32, i32) {
    %c0_i32 = arith.constant 0 : i32
    %c0_i32_0 = arith.constant 0 : i32
    %c0_i32_1 = arith.constant 0 : i32
    return %c0_i32, %c0_i32_0 : i32, i32
  }
  func.func @transform_2(%arg0: i32) -> (i32, i32) {
    %c0_i32 = arith.constant 0 : i32
    %c0_i32_0 = arith.constant 0 : i32
    %c0_i32_1 = arith.constant 0 : i32
    return %c0_i32, %c0_i32_0 : i32, i32
  }
  func.func @transform_3(%arg0: i32) -> (i32, i32) {
    %c0_i32 = arith.constant 0 : i32
    %c0_i32_0 = arith.constant 0 : i32
    %c0_i32_1 = arith.constant 0 : i32
    return %c0_i32, %c0_i32_0 : i32, i32
  }
  func.func @transform_4(%arg0: i32) -> (i32, i32) {
    %c0_i32 = arith.constant 0 : i32
    %c0_i32_0 = arith.constant 0 : i32
    %c0_i32_1 = arith.constant 0 : i32
    return %c0_i32, %c0_i32_0 : i32, i32
  }
  func.func @transform_5(%arg0: i32) -> (i32, i32) {
    %c0_i32 = arith.constant 0 : i32
    %c0_i32_0 = arith.constant 0 : i32
    %c0_i32_1 = arith.constant 0 : i32
    return %c0_i32, %c0_i32_0 : i32, i32
  }
  func.func @transform_6(%arg0: i32) -> (i32, i32) {
    %c0_i32 = arith.constant 0 : i32
    %c0_i32_0 = arith.constant 0 : i32
    %c0_i32_1 = arith.constant 0 : i32
    return %c0_i32, %c0_i32_0 : i32, i32
  }
  func.func @transform_7(%arg0: i32) -> (i32, i32) {
    %c0_i32 = arith.constant 0 : i32
    %c0_i32_0 = arith.constant 0 : i32
    %c0_i32_1 = arith.constant 0 : i32
    return %c0_i32, %c0_i32_0 : i32, i32
  }
  func.func @transform_8(%arg0: i32) -> (i32, i32) {
    %c0_i32 = arith.constant 0 : i32
    %c0_i32_0 = arith.constant 0 : i32
    %c0_i32_1 = arith.constant 0 : i32
    return %c0_i32, %c0_i32_0 : i32, i32
  }
  func.func @transform_9(%arg0: i32) -> (i32, i32) {
    %c0_i32 = arith.constant 0 : i32
    %c0_i32_0 = arith.constant 0 : i32
    %c0_i32_1 = arith.constant 0 : i32
    return %c0_i32, %c0_i32_0 : i32, i32
  }
  func.func @transform_10(%arg0: i32) -> (i32, i32) {
    %c0_i32 = arith.constant 0 : i32
    %c0_i32_0 = arith.constant 0 : i32
    %c0_i32_1 = arith.constant 0 : i32
    return %c0_i32, %c0_i32_0 : i32, i32
  }
  func.func @transform_11(%arg0: i32) -> (i32, i32) {
    %c0_i32 = arith.constant 0 : i32
    %c0_i32_0 = arith.constant 0 : i32
    %c0_i32_1 = arith.constant 0 : i32
    return %c0_i32, %c0_i32_0 : i32, i32
  }
  func.func @transform_12(%arg0: i32) -> (i32, i32) {
    %c0_i32 = arith.constant 0 : i32
    %c0_i32_0 = arith.constant 0 : i32
    %c0_i32_1 = arith.constant 0 : i32
    return %c0_i32, %c0_i32_0 : i32, i32
  }
  func.func @transform_13(%arg0: i32) -> (i32, i32) {
    %c0_i32 = arith.constant 0 : i32
    %c0_i32_0 = arith.constant 0 : i32
    %c0_i32_1 = arith.constant 0 : i32
    return %c0_i32, %c0_i32_0 : i32, i32
  }
  func.func @transform_14(%arg0: i32) -> (i32, i32) {
    %c0_i32 = arith.constant 0 : i32
    %c0_i32_0 = arith.constant 0 : i32
    %c0_i32_1 = arith.constant 0 : i32
    return %c0_i32, %c0_i32_0 : i32, i32
  }
}

</mosaic_0001>

<llo_original>
// kernel: emotion_model_forward.1
$region0: #{emotion_model_forward.1}
  #allocation0 [shape = 'u32[]', space=smem, size = 0x4, offset = 0x4, fixed_abs, tag = 'smem constant byte address 0x4 - core index']
  #allocation1 [shape = 'u32[144,128]{1,0:T(1,128)}', space=vmem, size = 0x12000, scoped, tag = 'internal scratch']
  %s0 = inlined_call_operand.vmem [shape: bf16[16,768], index: 0, kind: input, shape index: {}]
  %s1 = inlined_call_operand.vmem [shape: bf16[768,64], index: 1, kind: input, shape index: {}]
  %s2 = inlined_call_operand.vmem [shape: f32[16,64], index: 2, kind: input, shape index: {}]
  %s3 = inlined_call_operand.vmem [shape: f32[16,256], index: 3, kind: input, shape index: {}]
  %s4 = inlined_call_operand.vmem [shape: bf16[64,192], index: 4, kind: input, shape index: {}]
  %s5 = inlined_call_operand.vmem [shape: bf16[64,64], index: 5, kind: input, shape index: {}]
  %s6 = inlined_call_operand.vmem [shape: bf16[64,256], index: 6, kind: input, shape index: {}]
  %s7 = inlined_call_operand.vmem [shape: bf16[256,64], index: 7, kind: input, shape index: {}]
  %s8 = inlined_call_operand.vmem [shape: bf16[64,192], index: 8, kind: input, shape index: {}]
  %s9 = inlined_call_operand.vmem [shape: bf16[64,64], index: 9, kind: input, shape index: {}]
  %s10 = inlined_call_operand.vmem [shape: bf16[64,256], index: 10, kind: input, shape index: {}]
  %s11 = inlined_call_operand.vmem [shape: bf16[256,64], index: 11, kind: input, shape index: {}]
  %s12 = inlined_call_operand.vmem [shape: f32[8,128], index: 12, kind: input, shape index: {}]
  %s13 = inlined_call_operand.vmem [shape: bf16[64,128], index: 13, kind: input, shape index: {}]
  %s14 = inlined_call_operand.hbm [shape: f32[2,128], index: 14, kind: output, shape index: {}]
  %s15 = sld [smem:[#allocation0]]
  $region66: #{emotion_model_forward.1} parent=0
    _
  %s17 = ssub.s32 1, %s15
  %s18 = scalar_select 0, %s17, %s15
  $region1: #{emotion_model_forward.1} parent=0
    #allocation2 [shape = 'u8[1024]{0}', space=vmem, size = 0x400, scoped, tag = 'output window, operand 0, single buffered']
    #allocation3 [shape = 's32[1]{0}', space=sflag, size = 0x4, scoped, tag = 'scoped memory for emotion_model_forward.1']
    %19 = vsyncpa [#allocation3], 0
    // Predicated region
    $region2: #{emotion_model_forward.1} parent=1 // pred_check
      _
    $region3: #{emotion_model_forward.1} parent=1 // pred_check_branch
      %21 = sbr.rel (0) target = $region5
    $region4: #{emotion_model_forward.1} parent=1 // pred_region
      _
    $region5: #{emotion_model_forward.1} parent=1 // pred_fallthru
      _
    // Predicated region
    $region6: #{emotion_model_forward.1} parent=1 // pred_check
      _
    $region7: #{emotion_model_forward.1} parent=1 // pred_check_branch
      %23 = sbr.rel (0) target = $region9
    $region8: #{emotion_model_forward.1} parent=1 // pred_region
      _
    $region9: #{emotion_model_forward.1} parent=1 // pred_fallthru
      _
    // Predicated region
    $region10: #{emotion_model_forward.1} parent=1 // pred_check
      _
    $region11: #{emotion_model_forward.1} parent=1 // pred_check_branch
      %25 = sbr.rel (0) target = $region13
    $region12: #{emotion_model_forward.1} parent=1 // pred_region
      _
    $region13: #{emotion_model_forward.1} parent=1 // pred_fallthru
      _
    // Predicated region
    $region14: #{emotion_model_forward.1} parent=1 // pred_check
      _
    $region15: #{emotion_model_forward.1} parent=1 // pred_check_branch
      %27 = sbr.rel (0) target = $region17
    $region16: #{emotion_model_forward.1} parent=1 // pred_region
      _
    $region17: #{emotion_model_forward.1} parent=1 // pred_fallthru
      _
    // Predicated region
    $region18: #{emotion_model_forward.1} parent=1 // pred_check
      _
    $region19: #{emotion_model_forward.1} parent=1 // pred_check_branch
      %29 = sbr.rel (0) target = $region21
    $region20: #{emotion_model_forward.1} parent=1 // pred_region
      _
    $region21: #{emotion_model_forward.1} parent=1 // pred_fallthru
      _
    // Predicated region
    $region22: #{emotion_model_forward.1} parent=1 // pred_check
      _
    $region23: #{emotion_model_forward.1} parent=1 // pred_check_branch
      %31 = sbr.rel (0) target = $region25
    $region24: #{emotion_model_forward.1} parent=1 // pred_region
      _
    $region25: #{emotion_model_forward.1} parent=1 // pred_fallthru
      _
    // Predicated region
    $region26: #{emotion_model_forward.1} parent=1 // pred_check
      _
    $region27: #{emotion_model_forward.1} parent=1 // pred_check_branch
      %33 = sbr.rel (0) target = $region29
    $region28: #{emotion_model_forward.1} parent=1 // pred_region
      _
    $region29: #{emotion_model_forward.1} parent=1 // pred_fallthru
      _
    // Predicated region
    $region30: #{emotion_model_forward.1} parent=1 // pred_check
      _
    $region31: #{emotion_model_forward.1} parent=1 // pred_check_branch
      %35 = sbr.rel (0) target = $region33
    $region32: #{emotion_model_forward.1} parent=1 // pred_region
      _
    $region33: #{emotion_model_forward.1} parent=1 // pred_fallthru
      _
    // Predicated region
    $region34: #{emotion_model_forward.1} parent=1 // pred_check
      _
    $region35: #{emotion_model_forward.1} parent=1 // pred_check_branch
      %37 = sbr.rel (0) target = $region37
    $region36: #{emotion_model_forward.1} parent=1 // pred_region
      _
    $region37: #{emotion_model_forward.1} parent=1 // pred_fallthru
      _
    // Predicated region
    $region38: #{emotion_model_forward.1} parent=1 // pred_check
      _
    $region39: #{emotion_model_forward.1} parent=1 // pred_check_branch
      %39 = sbr.rel (0) target = $region41
    $region40: #{emotion_model_forward.1} parent=1 // pred_region
      _
    $region41: #{emotion_model_forward.1} parent=1 // pred_fallthru
      _
    // Predicated region
    $region42: #{emotion_model_forward.1} parent=1 // pred_check
      _
    $region43: #{emotion_model_forward.1} parent=1 // pred_check_branch
      %41 = sbr.rel (0) target = $region45
    $region44: #{emotion_model_forward.1} parent=1 // pred_region
      _
    $region45: #{emotion_model_forward.1} parent=1 // pred_fallthru
      _
    // Predicated region
    $region46: #{emotion_model_forward.1} parent=1 // pred_check
      _
    $region47: #{emotion_model_forward.1} parent=1 // pred_check_branch
      %43 = sbr.rel (0) target = $region49
    $region48: #{emotion_model_forward.1} parent=1 // pred_region
      _
    $region49: #{emotion_model_forward.1} parent=1 // pred_fallthru
      _
    // Predicated region
    $region50: #{emotion_model_forward.1} parent=1 // pred_check
      _
    $region51: #{emotion_model_forward.1} parent=1 // pred_check_branch
      %45 = sbr.rel (0) target = $region53
    $region52: #{emotion_model_forward.1} parent=1 // pred_region
      _
    $region53: #{emotion_model_forward.1} parent=1 // pred_fallthru
      _
    // Predicated region
    $region54: #{emotion_model_forward.1} parent=1 // pred_check
      _
    $region55: #{emotion_model_forward.1} parent=1 // pred_check_branch
      %47 = sbr.rel (0) target = $region57
    $region56: #{emotion_model_forward.1} parent=1 // pred_region
      _
    $region57: #{emotion_model_forward.1} parent=1 // pred_fallthru
      _
    %v49 = vld [vmem:[%s0] sm:$0xff]
    %v50 = vld [vmem:[%s0 + $0x8] sm:$0xff]
    %v51 = vld [vmem:[%s0 + $0x10] sm:$0xff]
    %v52 = vld [vmem:[%s0 + $0x18] sm:$0xff]
    %v53 = vld [vmem:[%s0 + $0x20] sm:$0xff]
    %v54 = vld [vmem:[%s0 + $0x28] sm:$0xff]
    %v55 = vld [vmem:[%s1] sm:$0xf]
    %v56 = vld [vmem:[%s1 + $0x4] sm:$0xf]
    %v57 = vld [vmem:[%s1 + $0x8] sm:$0xf]
    %v58 = vld [vmem:[%s1 + $0xc] sm:$0xf]
    %v59 = vld [vmem:[%s1 + $0x10] sm:$0xf]
    %v60 = vld [vmem:[%s1 + $0x14] sm:$0xf]
    %v61 = vld [vmem:[%s1 + $0x18] sm:$0xf]
    %v62 = vld [vmem:[%s1 + $0x1c] sm:$0xf]
    %v63 = vld [vmem:[%s1 + $0x20] sm:$0xf]
    %v64 = vld [vmem:[%s1 + $0x24] sm:$0xf]
    %v65 = vld [vmem:[%s1 + $0x28] sm:$0xf]
    %v66 = vld [vmem:[%s1 + $0x2c] sm:$0xf]
    %v67 = vld [vmem:[%s1 + $0x30] sm:$0xf]
    %v68 = vld [vmem:[%s1 + $0x34] sm:$0xf]
    %v69 = vld [vmem:[%s1 + $0x38] sm:$0xf]
    %v70 = vld [vmem:[%s1 + $0x3c] sm:$0xf]
    %v71 = vld [vmem:[%s1 + $0x40] sm:$0xf]
    %v72 = vld [vmem:[%s1 + $0x44] sm:$0xf]
    %v73 = vld [vmem:[%s1 + $0x48] sm:$0xf]
    %v74 = vld [vmem:[%s1 + $0x4c] sm:$0xf]
    %v75 = vld [vmem:[%s1 + $0x50] sm:$0xf]
    %v76 = vld [vmem:[%s1 + $0x54] sm:$0xf]
    %v77 = vld [vmem:[%s1 + $0x58] sm:$0xf]
    %v78 = vld [vmem:[%s1 + $0x5c] sm:$0xf]
    %v79 = vld [vmem:[%s1 + $0x60] sm:$0xf]
    %v80 = vld [vmem:[%s1 + $0x64] sm:$0xf]
    %v81 = vld [vmem:[%s1 + $0x68] sm:$0xf]
    %v82 = vld [vmem:[%s1 + $0x6c] sm:$0xf]
    %v83 = vld [vmem:[%s1 + $0x70] sm:$0xf]
    %v84 = vld [vmem:[%s1 + $0x74] sm:$0xf]
    %v85 = vld [vmem:[%s1 + $0x78] sm:$0xf]
    %v86 = vld [vmem:[%s1 + $0x7c] sm:$0xf]
    %v87 = vld [vmem:[%s1 + $0x80] sm:$0xf]
    %v88 = vld [vmem:[%s1 + $0x84] sm:$0xf]
    %v89 = vld [vmem:[%s1 + $0x88] sm:$0xf]
    %v90 = vld [vmem:[%s1 + $0x8c] sm:$0xf]
    %v91 = vld [vmem:[%s1 + $0x90] sm:$0xf]
    %v92 = vld [vmem:[%s1 + $0x94] sm:$0xf]
    %v93 = vld [vmem:[%s1 + $0x98] sm:$0xf]
    %v94 = vld [vmem:[%s1 + $0x9c] sm:$0xf]
    %v95 = vld [vmem:[%s1 + $0xa0] sm:$0xf]
    %v96 = vld [vmem:[%s1 + $0xa4] sm:$0xf]
    %v97 = vld [vmem:[%s1 + $0xa8] sm:$0xf]
    %v98 = vld [vmem:[%s1 + $0xac] sm:$0xf]
    %v99 = vld [vmem:[%s1 + $0xb0] sm:$0xf]
    %v100 = vld [vmem:[%s1 + $0xb4] sm:$0xf]
    %v101 = vld [vmem:[%s1 + $0xb8] sm:$0xf]
    %v102 = vld [vmem:[%s1 + $0xbc] sm:$0xf]
    %v103 = vld [vmem:[%s1 + $0xc0] sm:$0xf]
    %v104 = vld [vmem:[%s1 + $0xc4] sm:$0xf]
    %v105 = vld [vmem:[%s1 + $0xc8] sm:$0xf]
    %v106 = vld [vmem:[%s1 + $0xcc] sm:$0xf]
    %v107 = vld [vmem:[%s1 + $0xd0] sm:$0xf]
    %v108 = vld [vmem:[%s1 + $0xd4] sm:$0xf]
    %v109 = vld [vmem:[%s1 + $0xd8] sm:$0xf]
    %v110 = vld [vmem:[%s1 + $0xdc] sm:$0xf]
    %v111 = vld [vmem:[%s1 + $0xe0] sm:$0xf]
    %v112 = vld [vmem:[%s1 + $0xe4] sm:$0xf]
    %v113 = vld [vmem:[%s1 + $0xe8] sm:$0xf]
    %v114 = vld [vmem:[%s1 + $0xec] sm:$0xf]
    %v115 = vld [vmem:[%s1 + $0xf0] sm:$0xf]
    %v116 = vld [vmem:[%s1 + $0xf4] sm:$0xf]
    %v117 = vld [vmem:[%s1 + $0xf8] sm:$0xf]
    %v118 = vld [vmem:[%s1 + $0xfc] sm:$0xf]
    %v119 = vld [vmem:[%s1 + $0x100] sm:$0xf]
    %v120 = vld [vmem:[%s1 + $0x104] sm:$0xf]
    %v121 = vld [vmem:[%s1 + $0x108] sm:$0xf]
    %v122 = vld [vmem:[%s1 + $0x10c] sm:$0xf]
    %v123 = vld [vmem:[%s1 + $0x110] sm:$0xf]
    %v124 = vld [vmem:[%s1 + $0x114] sm:$0xf]
    %v125 = vld [vmem:[%s1 + $0x118] sm:$0xf]
    %v126 = vld [vmem:[%s1 + $0x11c] sm:$0xf]
    %v127 = vld [vmem:[%s1 + $0x120] sm:$0xf]
    %v128 = vld [vmem:[%s1 + $0x124] sm:$0xf]
    %v129 = vld [vmem:[%s1 + $0x128] sm:$0xf]
    %v130 = vld [vmem:[%s1 + $0x12c] sm:$0xf]
    %v131 = vld [vmem:[%s1 + $0x130] sm:$0xf]
    %v132 = vld [vmem:[%s1 + $0x134] sm:$0xf]
    %v133 = vld [vmem:[%s1 + $0x138] sm:$0xf]
    %v134 = vld [vmem:[%s1 + $0x13c] sm:$0xf]
    %v135 = vld [vmem:[%s1 + $0x140] sm:$0xf]
    %v136 = vld [vmem:[%s1 + $0x144] sm:$0xf]
    %v137 = vld [vmem:[%s1 + $0x148] sm:$0xf]
    %v138 = vld [vmem:[%s1 + $0x14c] sm:$0xf]
    %v139 = vld [vmem:[%s1 + $0x150] sm:$0xf]
    %v140 = vld [vmem:[%s1 + $0x154] sm:$0xf]
    %v141 = vld [vmem:[%s1 + $0x158] sm:$0xf]
    %v142 = vld [vmem:[%s1 + $0x15c] sm:$0xf]
    %v143 = vld [vmem:[%s1 + $0x160] sm:$0xf]
    %v144 = vld [vmem:[%s1 + $0x164] sm:$0xf]
    %v145 = vld [vmem:[%s1 + $0x168] sm:$0xf]
    %v146 = vld [vmem:[%s1 + $0x16c] sm:$0xf]
    %v147 = vld [vmem:[%s1 + $0x170] sm:$0xf]
    %v148 = vld [vmem:[%s1 + $0x174] sm:$0xf]
    %v149 = vld [vmem:[%s1 + $0x178] sm:$0xf]
    %v150 = vld [vmem:[%s1 + $0x17c] sm:$0xf]
    %v151 = vld [vmem:[%s2] sm:$0xff]
    %v152 = vld [vmem:[%s2 + $0x8] sm:$0xff]
    %v159 = vunpack.c.l.b16 %v49
    %v160 = vunpack.c.h.b16 %v49
    %v161 = vunpack.c.l.b16 %v50
    %v162 = vunpack.c.h.b16 %v50
    %v163 = vunpack.c.l.b16 %v51
    %v164 = vunpack.c.h.b16 %v51
    %v165 = vunpack.c.l.b16 %v52
    %v166 = vunpack.c.h.b16 %v52
    %v167 = vunpack.c.l.b16 %v53
    %v168 = vunpack.c.h.b16 %v53
    %v169 = vunpack.c.l.b16 %v54
    %v170 = vunpack.c.h.b16 %v54
    %v171 = vpack.c.b16 %v165, %v159
    %v172 = vpack.c.b16 %v166, %v160
    %v173 = vpack.c.b16 %v167, %v161
    %v174 = vpack.c.b16 %v168, %v162
    %v175 = vpack.c.b16 %v169, %v163
    %v176 = vpack.c.b16 %v170, %v164
    %v279 = vunpack.c.l.b16 %v55
    %v280 = vunpack.c.l.b16 %v56
    %v281 = vunpack.c.l.b16 %v57
    %v282 = vunpack.c.l.b16 %v58
    %v283 = vunpack.c.l.b16 %v59
    %v284 = vunpack.c.l.b16 %v60
    %v285 = vunpack.c.l.b16 %v61
    %v286 = vunpack.c.l.b16 %v62
    %v287 = vunpack.c.l.b16 %v63
    %v288 = vunpack.c.l.b16 %v64
    %v289 = vunpack.c.l.b16 %v65
    %v290 = vunpack.c.l.b16 %v66
    %v291 = vunpack.c.l.b16 %v67
    %v292 = vunpack.c.l.b16 %v68
    %v293 = vunpack.c.l.b16 %v69
    %v294 = vunpack.c.l.b16 %v70
    %v295 = vunpack.c.l.b16 %v71
    %v296 = vunpack.c.l.b16 %v72
    %v297 = vunpack.c.l.b16 %v73
    %v298 = vunpack.c.l.b16 %v74
    %v299 = vunpack.c.l.b16 %v75
    %v300 = vunpack.c.l.b16 %v76
    %v301 = vunpack.c.l.b16 %v77
    %v302 = vunpack.c.l.b16 %v78
    %v303 = vunpack.c.l.b16 %v79
    %v304 = vunpack.c.l.b16 %v80
    %v305 = vunpack.c.l.b16 %v81
    %v306 = vunpack.c.l.b16 %v82
    %v307 = vunpack.c.l.b16 %v83
    %v308 = vunpack.c.l.b16 %v84
    %v309 = vunpack.c.l.b16 %v85
    %v310 = vunpack.c.l.b16 %v86
    %v311 = vunpack.c.l.b16 %v87
    %v312 = vunpack.c.l.b16 %v88
    %v313 = vunpack.c.l.b16 %v89
    %v314 = vunpack.c.l.b16 %v90
    %v315 = vunpack.c.l.b16 %v91
    %v316 = vunpack.c.l.b16 %v92
    %v317 = vunpack.c.l.b16 %v93
    %v318 = vunpack.c.l.b16 %v94
    %v319 = vunpack.c.l.b16 %v95
    %v320 = vunpack.c.l.b16 %v96
    %v321 = vunpack.c.l.b16 %v97
    %v322 = vunpack.c.l.b16 %v98
    %v323 = vunpack.c.l.b16 %v99
    %v324 = vunpack.c.l.b16 %v100
    %v325 = vunpack.c.l.b16 %v101
    %v326 = vunpack.c.l.b16 %v102
    %v327 = vunpack.c.l.b16 %v103
    %v328 = vunpack.c.l.b16 %v104
    %v329 = vunpack.c.l.b16 %v105
    %v330 = vunpack.c.l.b16 %v106
    %v331 = vunpack.c.l.b16 %v107
    %v332 = vunpack.c.l.b16 %v108
    %v333 = vunpack.c.l.b16 %v109
    %v334 = vunpack.c.l.b16 %v110
    %v335 = vunpack.c.l.b16 %v111
    %v336 = vunpack.c.l.b16 %v112
    %v337 = vunpack.c.l.b16 %v113
    %v338 = vunpack.c.l.b16 %v114
    %v339 = vunpack.c.l.b16 %v115
    %v340 = vunpack.c.l.b16 %v116
    %v341 = vunpack.c.l.b16 %v117
    %v342 = vunpack.c.l.b16 %v118
    %v343 = vunpack.c.l.b16 %v119
    %v344 = vunpack.c.l.b16 %v120
    %v345 = vunpack.c.l.b16 %v121
    %v346 = vunpack.c.l.b16 %v122
    %v347 = vunpack.c.l.b16 %v123
    %v348 = vunpack.c.l.b16 %v124
    %v349 = vunpack.c.l.b16 %v125
    %v350 = vunpack.c.l.b16 %v126
    %v351 = vunpack.c.l.b16 %v127
    %v352 = vunpack.c.l.b16 %v128
    %v353 = vunpack.c.l.b16 %v129
    %v354 = vunpack.c.l.b16 %v130
    %v355 = vunpack.c.l.b16 %v131
    %v356 = vunpack.c.l.b16 %v132
    %v357 = vunpack.c.l.b16 %v133
    %v358 = vunpack.c.l.b16 %v134
    %v359 = vunpack.c.l.b16 %v135
    %v360 = vunpack.c.l.b16 %v136
    %v361 = vunpack.c.l.b16 %v137
    %v362 = vunpack.c.l.b16 %v138
    %v363 = vunpack.c.l.b16 %v139
    %v364 = vunpack.c.l.b16 %v140
    %v365 = vunpack.c.l.b16 %v141
    %v366 = vunpack.c.l.b16 %v142
    %v367 = vunpack.c.l.b16 %v143
    %v368 = vunpack.c.l.b16 %v144
    %v369 = vunpack.c.l.b16 %v145
    %v370 = vunpack.c.l.b16 %v146
    %v371 = vunpack.c.l.b16 %v147
    %v372 = vunpack.c.l.b16 %v148
    %v373 = vunpack.c.l.b16 %v149
    %v374 = vunpack.c.l.b16 %v150
    %v375 = vpack.c.b16 %v280, %v279
    %v376 = vpack.c.b16 %v282, %v281
    %v377 = vpack.c.b16 %v284, %v283
    %v378 = vpack.c.b16 %v286, %v285
    %v379 = vpack.c.b16 %v288, %v287
    %v380 = vpack.c.b16 %v290, %v289
    %v381 = vpack.c.b16 %v292, %v291
    %v382 = vpack.c.b16 %v294, %v293
    %v383 = vpack.c.b16 %v296, %v295
    %v384 = vpack.c.b16 %v298, %v297
    %v385 = vpack.c.b16 %v300, %v299
    %v386 = vpack.c.b16 %v302, %v301
    %v387 = vpack.c.b16 %v304, %v303
    %v388 = vpack.c.b16 %v306, %v305
    %v389 = vpack.c.b16 %v308, %v307
    %v390 = vpack.c.b16 %v310, %v309
    %v391 = vpack.c.b16 %v312, %v311
    %v392 = vpack.c.b16 %v314, %v313
    %v393 = vpack.c.b16 %v316, %v315
    %v394 = vpack.c.b16 %v318, %v317
    %v395 = vpack.c.b16 %v320, %v319
    %v396 = vpack.c.b16 %v322, %v321
    %v397 = vpack.c.b16 %v324, %v323
    %v398 = vpack.c.b16 %v326, %v325
    %v399 = vpack.c.b16 %v328, %v327
    %v400 = vpack.c.b16 %v330, %v329
    %v401 = vpack.c.b16 %v332, %v331
    %v402 = vpack.c.b16 %v334, %v333
    %v403 = vpack.c.b16 %v336, %v335
    %v404 = vpack.c.b16 %v338, %v337
    %v405 = vpack.c.b16 %v340, %v339
    %v406 = vpack.c.b16 %v342, %v341
    %v407 = vpack.c.b16 %v344, %v343
    %v408 = vpack.c.b16 %v346, %v345
    %v409 = vpack.c.b16 %v348, %v347
    %v410 = vpack.c.b16 %v350, %v349
    %v411 = vpack.c.b16 %v352, %v351
    %v412 = vpack.c.b16 %v354, %v353
    %v413 = vpack.c.b16 %v356, %v355
    %v414 = vpack.c.b16 %v358, %v357
    %v415 = vpack.c.b16 %v360, %v359
    %v416 = vpack.c.b16 %v362, %v361
    %v417 = vpack.c.b16 %v364, %v363
    %v418 = vpack.c.b16 %v366, %v365
    %v419 = vpack.c.b16 %v368, %v367
    %v420 = vpack.c.b16 %v370, %v369
    %v421 = vpack.c.b16 %v372, %v371
    %v422 = vpack.c.b16 %v374, %v373
    %471 = vmatprep.subr.bf16.mxu0 0
    %472 = vmatpush1.bf16.msra.mxu0 %v382
    %473 = vmatprep.subr.bf16.mxu0 0
    %474 = vmatpush1.bf16.msra.mxu0 %v381
    %475 = vmatprep.subr.bf16.mxu0 0
    %476 = vmatpush1.bf16.msra.mxu0 %v380
    %477 = vmatprep.subr.bf16.mxu0 0
    %478 = vmatpush1.bf16.msra.mxu0 %v379
    %479 = vmatprep.subr.bf16.mxu0 0
    %480 = vmatpush1.bf16.msra.mxu0 %v378
    %481 = vmatprep.subr.bf16.mxu0 0
    %482 = vmatpush1.bf16.msra.mxu0 %v377
    %483 = vmatprep.subr.bf16.mxu0 0
    %484 = vmatpush1.bf16.msra.mxu0 %v376
    %485 = vmatprep.subr.bf16.mxu0 0
    %486 = vmatpush1.bf16.msra.mxu0 %v375
    %487 = vmatprep.subr.bf16.mxu0 0
    %488 = vmatpush2.bf16.msra.mxu0 %v390
    %489 = vmatprep.subr.bf16.mxu0 0
    %490 = vmatpush2.bf16.msra.mxu0 %v389
    %491 = vmatprep.subr.bf16.mxu0 0
    %492 = vmatpush2.bf16.msra.mxu0 %v388
    %493 = vmatprep.subr.bf16.mxu0 0
    %494 = vmatpush2.bf16.msra.mxu0 %v387
    %495 = vmatprep.subr.bf16.mxu0 0
    %496 = vmatpush2.bf16.msra.mxu0 %v386
    %497 = vmatprep.subr.bf16.mxu0 0
    %498 = vmatpush2.bf16.msra.mxu0 %v385
    %499 = vmatprep.subr.bf16.mxu0 0
    %500 = vmatpush2.bf16.msra.mxu0 %v384
    %501 = vmatprep.subr.bf16.mxu0 0
    %502 = vmatpush2.bf16.msra.mxu0 %v383
    %503 = vmatprep.mubr.bf16.mxu0 %v172
    %504 = vmatmul.mubr.bf16.gmra.mxu0 %v171
    %v505 = vpop.f32.mrf.mxu0
    %v506 = vadd.f32 %v151, %v505
    %v507 = vpop.f32.mrf.mxu0
    %v508 = vpop.f32.mrf.mxu0
    %v509 = vadd.f32 %v152, %v508
    %v510 = vpop.f32.mrf.mxu0
    %511 = vdwg.mxu0
    %512 = vmatprep.subr.bf16.mxu0 0
    %513 = vmatpush1.bf16.msra.mxu0 %v398
    %514 = vmatprep.subr.bf16.mxu0 0
    %515 = vmatpush1.bf16.msra.mxu0 %v397
    %516 = vmatprep.subr.bf16.mxu0 0
    %517 = vmatpush1.bf16.msra.mxu0 %v396
    %518 = vmatprep.subr.bf16.mxu0 0
    %519 = vmatpush1.bf16.msra.mxu0 %v395
    %520 = vmatprep.subr.bf16.mxu0 0
    %521 = vmatpush1.bf16.msra.mxu0 %v394
    %522 = vmatprep.subr.bf16.mxu0 0
    %523 = vmatpush1.bf16.msra.mxu0 %v393
    %524 = vmatprep.subr.bf16.mxu0 0
    %525 = vmatpush1.bf16.msra.mxu0 %v392
    %526 = vmatprep.subr.bf16.mxu0 0
    %527 = vmatpush1.bf16.msra.mxu0 %v391
    %528 = vmatprep.subr.bf16.mxu0 0
    %529 = vmatpush2.bf16.msra.mxu0 %v406
    %530 = vmatprep.subr.bf16.mxu0 0
    %531 = vmatpush2.bf16.msra.mxu0 %v405
    %532 = vmatprep.subr.bf16.mxu0 0
    %533 = vmatpush2.bf16.msra.mxu0 %v404
    %534 = vmatprep.subr.bf16.mxu0 0
    %535 = vmatpush2.bf16.msra.mxu0 %v403
    %536 = vmatprep.subr.bf16.mxu0 0
    %537 = vmatpush2.bf16.msra.mxu0 %v402
    %538 = vmatprep.subr.bf16.mxu0 0
    %539 = vmatpush2.bf16.msra.mxu0 %v401
    %540 = vmatprep.subr.bf16.mxu0 0
    %541 = vmatpush2.bf16.msra.mxu0 %v400
    %542 = vmatprep.subr.bf16.mxu0 0
    %543 = vmatpush2.bf16.msra.mxu0 %v399
    %544 = vmatprep.mubr.bf16.mxu0 %v174
    %545 = vmatmul.mubr.bf16.gmra.mxu0 %v173
    %v546 = vpop.f32.mrf.mxu0
    %v547 = vadd.f32 %v506, %v546
    %v548 = vpop.f32.mrf.mxu0
    %v549 = vpop.f32.mrf.mxu0
    %v550 = vadd.f32 %v509, %v549
    %v551 = vpop.f32.mrf.mxu0
    %552 = vdwg.mxu0
    %553 = vmatprep.subr.bf16.mxu0 0
    %554 = vmatpush1.bf16.msra.mxu0 %v414
    %555 = vmatprep.subr.bf16.mxu0 0
    %556 = vmatpush1.bf16.msra.mxu0 %v413
    %557 = vmatprep.subr.bf16.mxu0 0
    %558 = vmatpush1.bf16.msra.mxu0 %v412
    %559 = vmatprep.subr.bf16.mxu0 0
    %560 = vmatpush1.bf16.msra.mxu0 %v411
    %561 = vmatprep.subr.bf16.mxu0 0
    %562 = vmatpush1.bf16.msra.mxu0 %v410
    %563 = vmatprep.subr.bf16.mxu0 0
    %564 = vmatpush1.bf16.msra.mxu0 %v409
    %565 = vmatprep.subr.bf16.mxu0 0
    %566 = vmatpush1.bf16.msra.mxu0 %v408
    %567 = vmatprep.subr.bf16.mxu0 0
    %568 = vmatpush1.bf16.msra.mxu0 %v407
    %569 = vmatprep.subr.bf16.mxu0 0
    %570 = vmatpush2.bf16.msra.mxu0 %v422
    %571 = vmatprep.subr.bf16.mxu0 0
    %572 = vmatpush2.bf16.msra.mxu0 %v421
    %573 = vmatprep.subr.bf16.mxu0 0
    %574 = vmatpush2.bf16.msra.mxu0 %v420
    %575 = vmatprep.subr.bf16.mxu0 0
    %576 = vmatpush2.bf16.msra.mxu0 %v419
    %577 = vmatprep.subr.bf16.mxu0 0
    %578 = vmatpush2.bf16.msra.mxu0 %v418
    %579 = vmatprep.subr.bf16.mxu0 0
    %580 = vmatpush2.bf16.msra.mxu0 %v417
    %581 = vmatprep.subr.bf16.mxu0 0
    %582 = vmatpush2.bf16.msra.mxu0 %v416
    %583 = vmatprep.subr.bf16.mxu0 0
    %584 = vmatpush2.bf16.msra.mxu0 %v415
    %585 = vmatprep.mubr.bf16.mxu0 %v176
    %586 = vmatmul.mubr.bf16.gmra.mxu0 %v175
    %v587 = vpop.f32.mrf.mxu0
    %v588 = vadd.f32 %v547, %v587
    %v589 = vpop.f32.mrf.mxu0
    %v590 = vpop.f32.mrf.mxu0
    %v591 = vadd.f32 %v550, %v590
    %v592 = vpop.f32.mrf.mxu0
    %593 = vdwg.mxu0
    %v594 = vlaneseq
    %v595 = vand.u32 %v594, 127
    %vm596 = vcmp.lt.s32.totalorder %v595, 5
    %v597 = vsel %vm596, 0.0, -1e+30
    %v598 = vld [vmem:[%s3] ss:$0 sm:$0xff]
    %v599 = vld [vmem:[%s3 + $0x1] ss:$0 sm:$0xff]
    %s600 = scalar_lea.vmem %s3, 2
    %v601 = vld [vmem:[%s600] ss:$8 sm:$0x3]
    %v602 = vld [vmem:[%s3 + $0x3] ss:$0 sm:$0xff]
    %v603 = vld [vmem:[%s3 + $0x4] ss:$0 sm:$0xff]
    %v604 = vld [vmem:[%s3 + $0x5] ss:$0 sm:$0xff]
    %s605 = scalar_lea.vmem %s3, 6
    %v606 = vld [vmem:[%s605] ss:$8 sm:$0x3]
    %v607 = vld [vmem:[%s3 + $0x7] ss:$0 sm:$0xff]
    %vm608 = vcmask 523264
    %v609 = vsel %vm608, %v588, 0.0
    %610 = vadd.xlane.f32.xlu0 %v609
    %v611 = vpop.xlane.xlu0 %610
    %v612 = vsel %vm608, %v591, 0.0
    %613 = vadd.xlane.f32.xlu0 %v612
    %v614 = vpop.xlane.xlu0 %613
    %v615 = vrcp.pop 64.0
    %v616 = vmul.f32 %v611, %v615
    %v617 = vmul.f32 %v614, %v615
    %v618 = vsub.f32 %v588, %v616
    %v619 = vsub.f32 %v591, %v617
    %v620 = vmul.f32 %v618, %v618
    %v621 = vmul.f32 %v619, %v619
    %v622 = vsel %vm608, %v620, 0.0
    %623 = vadd.xlane.f32.xlu0 %v622
    %v624 = vpop.xlane.xlu0 %623
    %v625 = vsel %vm608, %v621, 0.0
    %626 = vadd.xlane.f32.xlu0 %v625
    %v627 = vpop.xlane.xlu0 %626
    %v628 = vmul.f32 %v624, %v615
    %v629 = vmul.f32 %v627, %v615
    %v630 = vadd.f32 %v628, 1e-06
    %v631 = vadd.f32 %v629, 1e-06
    %v632 = vrsqrt.pop %v630
    %v633 = vrsqrt.pop %v631
    %v634 = vmul.f32 %v618, %v632
    %v635 = vmul.f32 %v619, %v633
    %v636 = vmul.f32 %v634, %v598
    %v637 = vmul.f32 %v635, %v598
    %v638 = vadd.f32 %v636, %v599
    %v639 = vadd.f32 %v637, %v599
    %v640 = vpack.c.bf16 %v639, %v638
    %v641 = vld [vmem:[%s4] sm:$0xff]
    %v642 = vld [vmem:[%s4 + $0x8] sm:$0xff]
    %v643 = vld [vmem:[%s4 + $0x10] sm:$0xff]
    %v644 = vld [vmem:[%s4 + $0x18] sm:$0xff]
    %v645 = vld [vmem:[%s4 + $0x20] sm:$0xff]
    %v646 = vld [vmem:[%s4 + $0x28] sm:$0xff]
    %v647 = vld [vmem:[%s4 + $0x30] sm:$0xff]
    %v648 = vld [vmem:[%s4 + $0x38] sm:$0xff]
    %v650 = vlaneseq
    %v651 = vshrl.u32 %v650, 7
    %v652 = vsub.s32 0, %v651
    %v653 = vrot.slane %v601, %v652
    %v654 = vlaneseq
    %v655 = vshrl.u32 %v654, 7
    %v656 = vsub.s32 1, %v655
    %v657 = vrot.slane %v601, %v656
    %v668 = vunpack.c.l.b16 %v641
    %v669 = vunpack.c.h.b16 %v641
    %v670 = vunpack.c.l.b16 %v642
    %v671 = vunpack.c.h.b16 %v642
    %v672 = vunpack.c.l.b16 %v643
    %v673 = vunpack.c.h.b16 %v643
    %v674 = vunpack.c.l.b16 %v644
    %v675 = vunpack.c.h.b16 %v644
    %v676 = vunpack.c.l.b16 %v645
    %v677 = vunpack.c.h.b16 %v645
    %v678 = vunpack.c.l.b16 %v646
    %v679 = vunpack.c.h.b16 %v646
    %v680 = vunpack.c.l.b16 %v647
    %v681 = vunpack.c.h.b16 %v647
    %v682 = vunpack.c.l.b16 %v648
    %v683 = vunpack.c.h.b16 %v648
    %v684 = vpack.c.b16 %v670, %v668
    %v685 = vpack.c.b16 %v671, %v669
    %v686 = vpack.c.b16 %v674, %v672
    %v687 = vpack.c.b16 %v675, %v673
    %v688 = vpack.c.b16 %v678, %v676
    %v689 = vpack.c.b16 %v679, %v677
    %v690 = vpack.c.b16 %v682, %v680
    %v691 = vpack.c.b16 %v683, %v681
    %v701 = vsel %vm608, %v640, 0
    %703 = vmatprep.subr.bf16.mxu0 0
    %704 = vmatpush1.bf16.msra.mxu0 0
    %705 = vmatprep.subr.bf16.mxu0 0
    %706 = vmatpush1.bf16.msra.mxu0 0
    %707 = vmatprep.subr.bf16.mxu0 0
    %708 = vmatpush1.bf16.msra.mxu0 0
    %709 = vmatprep.subr.bf16.mxu0 0
    %710 = vmatpush1.bf16.msra.mxu0 0
    %711 = vmatprep.subr.bf16.mxu0 %v691
    %712 = vmatpush1.bf16.msra.mxu0 %v690
    %713 = vmatprep.subr.bf16.mxu0 %v689
    %714 = vmatpush1.bf16.msra.mxu0 %v688
    %715 = vmatprep.subr.bf16.mxu0 %v687
    %716 = vmatpush1.bf16.msra.mxu0 %v686
    %717 = vmatprep.subr.bf16.mxu0 %v685
    %718 = vmatpush1.bf16.msra.mxu0 %v684
    %719 = vmatprep.subr.bf16.mxu0 0
    %720 = vmatpush2.bf16.msra.mxu0 0
    %721 = vmatprep.subr.bf16.mxu0 0
    %722 = vmatpush2.bf16.msra.mxu0 0
    %723 = vmatprep.subr.bf16.mxu0 0
    %724 = vmatpush2.bf16.msra.mxu0 0
    %725 = vmatprep.subr.bf16.mxu0 0
    %726 = vmatpush2.bf16.msra.mxu0 0
    %727 = vmatprep.subr.bf16.mxu0 0
    %728 = vmatpush2.bf16.msra.mxu0 0
    %729 = vmatprep.subr.bf16.mxu0 0
    %730 = vmatpush2.bf16.msra.mxu0 0
    %731 = vmatprep.subr.bf16.mxu0 0
    %732 = vmatpush2.bf16.msra.mxu0 0
    %733 = vmatprep.subr.bf16.mxu0 0
    %734 = vmatpush2.bf16.msra.mxu0 0
    %735 = vmatprep.mubr.bf16.mxu0 0
    %736 = vmatmul.mubr.bf16.gmra.mxu0 %v701
    %v737 = vpop.f32.mrf.mxu0
    %v738 = vadd.f32 %v653, %v737
    %v739 = vpop.f32.mrf.mxu0
    %v740 = vadd.f32 %v657, %v739
    %v741 = vpop.f32.mrf.mxu0
    %v742 = vadd.f32 %v653, %v741
    %v743 = vpop.f32.mrf.mxu0
    %v744 = vadd.f32 %v657, %v743
    %745 = vdwg.mxu0
    %747 = vrot.lane.b32.xlu0 %v738, 96
    %v748 = vpop.permute.xlu0 %747
    %751 = vrot.lane.b32.xlu0 %v742, 96
    %v752 = vpop.permute.xlu0 %751
    %v754 = vpack.c.bf16 %v738, %v738
    %v755 = vpack.c.bf16 %v748, %v748
    %v756 = vpack.c.bf16 %v742, %v742
    %v757 = vpack.c.bf16 %v752, %v752
    %759 = vrot.lane.b32.xlu0 %v740, 96
    %v760 = vpop.permute.xlu0 %759
    %763 = vrot.lane.b32.xlu0 %v744, 96
    %v764 = vpop.permute.xlu0 %763
    %v766 = vpack.c.bf16 %v740, %v740
    %v767 = vpack.c.bf16 %v760, %v760
    %v768 = vpack.c.bf16 %v744, %v744
    %v769 = vpack.c.bf16 %v764, %v764
    %771 = vrot.lane.b32.xlu0 %v754, 64
    %v772 = vpop.permute.xlu0 %771
    %vm773 = vcmask 261120
    %v775 = vsel %vm773, %v754, 0
    %v778 = vsel %vm773, %v772, 0
    %780 = vmatprep.subr.bf16.mxu0 0
    %781 = vmatpush1.bf16.xpose.msra.mxu0 0
    %782 = vmatprep.subr.bf16.mxu0 0
    %783 = vmatpush1.bf16.xpose.msra.mxu0 0
    %784 = vmatprep.subr.bf16.mxu0 0
    %785 = vmatpush1.bf16.xpose.msra.mxu0 0
    %786 = vmatprep.subr.bf16.mxu0 0
    %787 = vmatpush1.bf16.xpose.msra.mxu0 0
    %788 = vmatprep.subr.bf16.mxu0 0
    %789 = vmatpush1.bf16.xpose.msra.mxu0 0
    %790 = vmatprep.subr.bf16.mxu0 0
    %791 = vmatpush1.bf16.xpose.msra.mxu0 0
    %792 = vmatprep.subr.bf16.mxu0 0
    %793 = vmatpush1.bf16.xpose.msra.mxu0 0
    %794 = vmatprep.subr.bf16.mxu0 0
    %795 = vmatpush1.bf16.xpose.msra.mxu0 %v778
    %796 = vmatprep.subr.bf16.mxu0 0
    %797 = vmatpush2.bf16.xpose.msra.mxu0 0
    %798 = vmatprep.subr.bf16.mxu0 0
    %799 = vmatpush2.bf16.xpose.msra.mxu0 0
    %800 = vmatprep.subr.bf16.mxu0 0
    %801 = vmatpush2.bf16.xpose.msra.mxu0 0
    %802 = vmatprep.subr.bf16.mxu0 0
    %803 = vmatpush2.bf16.xpose.msra.mxu0 0
    %804 = vmatprep.subr.bf16.mxu0 0
    %805 = vmatpush2.bf16.xpose.msra.mxu0 0
    %806 = vmatprep.subr.bf16.mxu0 0
    %807 = vmatpush2.bf16.xpose.msra.mxu0 0
    %808 = vmatprep.subr.bf16.mxu0 0
    %809 = vmatpush2.bf16.xpose.msra.mxu0 0
    %810 = vmatprep.subr.bf16.mxu0 0
    %811 = vmatpush2.bf16.xpose.msra.mxu0 0
    %812 = vmatprep.mubr.bf16.mxu0 0
    %813 = vmatmul.mubr.bf16.gmra.mxu0 %v775
    %v814 = vpop.f32.mrf.mxu0
    %v815 = vadd.f32 0.0, %v814
    %v816 = vpop.f32.mrf.mxu0
    %v817 = vpop.f32.mrf.mxu0
    %v818 = vpop.f32.mrf.mxu0
    %819 = vdwg.mxu0
    %821 = vrot.lane.b32.xlu0 %v755, 64
    %v822 = vpop.permute.xlu0 %821
    %v824 = vsel %vm773, %v755, 0
    %v827 = vsel %vm773, %v822, 0
    %829 = vmatprep.subr.bf16.mxu0 0
    %830 = vmatpush1.bf16.xpose.msra.mxu0 0
    %831 = vmatprep.subr.bf16.mxu0 0
    %832 = vmatpush1.bf16.xpose.msra.mxu0 0
    %833 = vmatprep.subr.bf16.mxu0 0
    %834 = vmatpush1.bf16.xpose.msra.mxu0 0
    %835 = vmatprep.subr.bf16.mxu0 0
    %836 = vmatpush1.bf16.xpose.msra.mxu0 0
    %837 = vmatprep.subr.bf16.mxu0 0
    %838 = vmatpush1.bf16.xpose.msra.mxu0 0
    %839 = vmatprep.subr.bf16.mxu0 0
    %840 = vmatpush1.bf16.xpose.msra.mxu0 0
    %841 = vmatprep.subr.bf16.mxu0 0
    %842 = vmatpush1.bf16.xpose.msra.mxu0 0
    %843 = vmatprep.subr.bf16.mxu0 0
    %844 = vmatpush1.bf16.xpose.msra.mxu0 %v827
    %845 = vmatprep.subr.bf16.mxu0 0
    %846 = vmatpush2.bf16.xpose.msra.mxu0 0
    %847 = vmatprep.subr.bf16.mxu0 0
    %848 = vmatpush2.bf16.xpose.msra.mxu0 0
    %849 = vmatprep.subr.bf16.mxu0 0
    %850 = vmatpush2.bf16.xpose.msra.mxu0 0
    %851 = vmatprep.subr.bf16.mxu0 0
    %852 = vmatpush2.bf16.xpose.msra.mxu0 0
    %853 = vmatprep.subr.bf16.mxu0 0
    %854 = vmatpush2.bf16.xpose.msra.mxu0 0
    %855 = vmatprep.subr.bf16.mxu0 0
    %856 = vmatpush2.bf16.xpose.msra.mxu0 0
    %857 = vmatprep.subr.bf16.mxu0 0
    %858 = vmatpush2.bf16.xpose.msra.mxu0 0
    %859 = vmatprep.subr.bf16.mxu0 0
    %860 = vmatpush2.bf16.xpose.msra.mxu0 0
    %861 = vmatprep.mubr.bf16.mxu0 0
    %862 = vmatmul.mubr.bf16.gmra.mxu0 %v824
    %v863 = vpop.f32.mrf.mxu0
    %v864 = vadd.f32 0.0, %v863
    %v865 = vpop.f32.mrf.mxu0
    %v866 = vpop.f32.mrf.mxu0
    %v867 = vpop.f32.mrf.mxu0
    %868 = vdwg.mxu0
    %870 = vrot.lane.b32.xlu0 %v756, 64
    %v871 = vpop.permute.xlu0 %870
    %v873 = vsel %vm773, %v756, 0
    %v876 = vsel %vm773, %v871, 0
    %878 = vmatprep.subr.bf16.mxu0 0
    %879 = vmatpush1.bf16.xpose.msra.mxu0 0
    %880 = vmatprep.subr.bf16.mxu0 0
    %881 = vmatpush1.bf16.xpose.msra.mxu0 0
    %882 = vmatprep.subr.bf16.mxu0 0
    %883 = vmatpush1.bf16.xpose.msra.mxu0 0
    %884 = vmatprep.subr.bf16.mxu0 0
    %885 = vmatpush1.bf16.xpose.msra.mxu0 0
    %886 = vmatprep.subr.bf16.mxu0 0
    %887 = vmatpush1.bf16.xpose.msra.mxu0 0
    %888 = vmatprep.subr.bf16.mxu0 0
    %889 = vmatpush1.bf16.xpose.msra.mxu0 0
    %890 = vmatprep.subr.bf16.mxu0 0
    %891 = vmatpush1.bf16.xpose.msra.mxu0 0
    %892 = vmatprep.subr.bf16.mxu0 0
    %893 = vmatpush1.bf16.xpose.msra.mxu0 %v876
    %894 = vmatprep.subr.bf16.mxu0 0
    %895 = vmatpush2.bf16.xpose.msra.mxu0 0
    %896 = vmatprep.subr.bf16.mxu0 0
    %897 = vmatpush2.bf16.xpose.msra.mxu0 0
    %898 = vmatprep.subr.bf16.mxu0 0
    %899 = vmatpush2.bf16.xpose.msra.mxu0 0
    %900 = vmatprep.subr.bf16.mxu0 0
    %901 = vmatpush2.bf16.xpose.msra.mxu0 0
    %902 = vmatprep.subr.bf16.mxu0 0
    %903 = vmatpush2.bf16.xpose.msra.mxu0 0
    %904 = vmatprep.subr.bf16.mxu0 0
    %905 = vmatpush2.bf16.xpose.msra.mxu0 0
    %906 = vmatprep.subr.bf16.mxu0 0
    %907 = vmatpush2.bf16.xpose.msra.mxu0 0
    %908 = vmatprep.subr.bf16.mxu0 0
    %909 = vmatpush2.bf16.xpose.msra.mxu0 0
    %910 = vmatprep.mubr.bf16.mxu0 0
    %911 = vmatmul.mubr.bf16.gmra.mxu0 %v873
    %v912 = vpop.f32.mrf.mxu0
    %v913 = vadd.f32 0.0, %v912
    %v914 = vpop.f32.mrf.mxu0
    %v915 = vpop.f32.mrf.mxu0
    %v916 = vpop.f32.mrf.mxu0
    %917 = vdwg.mxu0
    %919 = vrot.lane.b32.xlu0 %v757, 64
    %v920 = vpop.permute.xlu0 %919
    %v922 = vsel %vm773, %v757, 0
    %v925 = vsel %vm773, %v920, 0
    %927 = vmatprep.subr.bf16.mxu0 0
    %928 = vmatpush1.bf16.xpose.msra.mxu0 0
    %929 = vmatprep.subr.bf16.mxu0 0
    %930 = vmatpush1.bf16.xpose.msra.mxu0 0
    %931 = vmatprep.subr.bf16.mxu0 0
    %932 = vmatpush1.bf16.xpose.msra.mxu0 0
    %933 = vmatprep.subr.bf16.mxu0 0
    %934 = vmatpush1.bf16.xpose.msra.mxu0 0
    %935 = vmatprep.subr.bf16.mxu0 0
    %936 = vmatpush1.bf16.xpose.msra.mxu0 0
    %937 = vmatprep.subr.bf16.mxu0 0
    %938 = vmatpush1.bf16.xpose.msra.mxu0 0
    %939 = vmatprep.subr.bf16.mxu0 0
    %940 = vmatpush1.bf16.xpose.msra.mxu0 0
    %941 = vmatprep.subr.bf16.mxu0 0
    %942 = vmatpush1.bf16.xpose.msra.mxu0 %v925
    %943 = vmatprep.subr.bf16.mxu0 0
    %944 = vmatpush2.bf16.xpose.msra.mxu0 0
    %945 = vmatprep.subr.bf16.mxu0 0
    %946 = vmatpush2.bf16.xpose.msra.mxu0 0
    %947 = vmatprep.subr.bf16.mxu0 0
    %948 = vmatpush2.bf16.xpose.msra.mxu0 0
    %949 = vmatprep.subr.bf16.mxu0 0
    %950 = vmatpush2.bf16.xpose.msra.mxu0 0
    %951 = vmatprep.subr.bf16.mxu0 0
    %952 = vmatpush2.bf16.xpose.msra.mxu0 0
    %953 = vmatprep.subr.bf16.mxu0 0
    %954 = vmatpush2.bf16.xpose.msra.mxu0 0
    %955 = vmatprep.subr.bf16.mxu0 0
    %956 = vmatpush2.bf16.xpose.msra.mxu0 0
    %957 = vmatprep.subr.bf16.mxu0 0
    %958 = vmatpush2.bf16.xpose.msra.mxu0 0
    %959 = vmatprep.mubr.bf16.mxu0 0
    %960 = vmatmul.mubr.bf16.gmra.mxu0 %v922
    %v961 = vpop.f32.mrf.mxu0
    %v962 = vadd.f32 0.0, %v961
    %v963 = vpop.f32.mrf.mxu0
    %v964 = vpop.f32.mrf.mxu0
    %v965 = vpop.f32.mrf.mxu0
    %966 = vdwg.mxu0
    %v967 = vmul.f32 %v815, 0.17677669
    %v968 = vmul.f32 %v864, 0.17677669
    %v969 = vmul.f32 %v913, 0.17677669
    %v970 = vmul.f32 %v962, 0.17677669
    %v971 = vadd.f32 %v967, %v597
    %v972 = vadd.f32 %v968, %v597
    %v973 = vadd.f32 %v969, %v597
    %v974 = vadd.f32 %v970, %v597
    %vm975 = vcmask 64512
    %v976 = vsel %vm975, %v971, -inf
    %977 = vmax.xlane.f32.xlu0 %v976
    %v978 = vpop.xlane.xlu0 %977
    %v979 = vsel %vm975, %v972, -inf
    %980 = vmax.xlane.f32.xlu0 %v979
    %v981 = vpop.xlane.xlu0 %980
    %v982 = vsel %vm975, %v973, -inf
    %983 = vmax.xlane.f32.xlu0 %v982
    %v984 = vpop.xlane.xlu0 %983
    %v985 = vsel %vm975, %v974, -inf
    %986 = vmax.xlane.f32.xlu0 %v985
    %v987 = vpop.xlane.xlu0 %986
    %v988 = vsub.f32 %v971, %v978
    %v989 = vsub.f32 %v972, %v981
    %v990 = vsub.f32 %v973, %v984
    %v991 = vsub.f32 %v974, %v987
    %v992 = vmul.f32 %v988, 1.442695
    %v993 = vpow.pop %v992
    %v994 = vmul.f32 %v989, 1.442695
    %v995 = vpow.pop %v994
    %v996 = vmul.f32 %v990, 1.442695
    %v997 = vpow.pop %v996
    %v998 = vmul.f32 %v991, 1.442695
    %v999 = vpow.pop %v998
    %v1000 = vsel %vm975, %v993, 0.0
    %1001 = vadd.xlane.f32.xlu0 %v1000
    %v1002 = vpop.xlane.xlu0 %1001
    %v1003 = vsel %vm975, %v995, 0.0
    %1004 = vadd.xlane.f32.xlu0 %v1003
    %v1005 = vpop.xlane.xlu0 %1004
    %v1006 = vsel %vm975, %v997, 0.0
    %1007 = vadd.xlane.f32.xlu0 %v1006
    %v1008 = vpop.xlane.xlu0 %1007
    %v1009 = vsel %vm975, %v999, 0.0
    %1010 = vadd.xlane.f32.xlu0 %v1009
    %v1011 = vpop.xlane.xlu0 %1010
    %v1012 = vrcp.pop %v1002
    %v1013 = vrcp.pop %v1005
    %v1014 = vrcp.pop %v1008
    %v1015 = vrcp.pop %v1011
    %v1016 = vmul.f32 %v993, %v1012
    %v1017 = vmul.f32 %v995, %v1013
    %v1018 = vmul.f32 %v997, %v1014
    %v1019 = vmul.f32 %v999, %v1015
    %v1020 = vpack.c.bf16 %v1016, %v1016
    %v1021 = vpack.c.bf16 %v1017, %v1017
    %v1022 = vpack.c.bf16 %v1018, %v1018
    %v1023 = vpack.c.bf16 %v1019, %v1019
    %v1025 = vsel %vm975, %v1020, 0
    %vm1027 = vcmask 1043456
    %v1029 = vsel %vm1027, %v766, 0
    %1031 = vmatprep.subr.bf16.mxu0 0
    %1032 = vmatpush1.bf16.msra.mxu0 0
    %1033 = vmatprep.subr.bf16.mxu0 0
    %1034 = vmatpush1.bf16.msra.mxu0 0
    %1035 = vmatprep.subr.bf16.mxu0 0
    %1036 = vmatpush1.bf16.msra.mxu0 0
    %1037 = vmatprep.subr.bf16.mxu0 0
    %1038 = vmatpush1.bf16.msra.mxu0 0
    %1039 = vmatprep.subr.bf16.mxu0 0
    %1040 = vmatpush1.bf16.msra.mxu0 0
    %1041 = vmatprep.subr.bf16.mxu0 0
    %1042 = vmatpush1.bf16.msra.mxu0 0
    %1043 = vmatprep.subr.bf16.mxu0 0
    %1044 = vmatpush1.bf16.msra.mxu0 0
    %1045 = vmatprep.subr.bf16.mxu0 0
    %1046 = vmatpush1.bf16.msra.mxu0 %v1029
    %1047 = vmatprep.subr.bf16.mxu0 0
    %1048 = vmatpush2.bf16.msra.mxu0 0
    %1049 = vmatprep.subr.bf16.mxu0 0
    %1050 = vmatpush2.bf16.msra.mxu0 0
    %1051 = vmatprep.subr.bf16.mxu0 0
    %1052 = vmatpush2.bf16.msra.mxu0 0
    %1053 = vmatprep.subr.bf16.mxu0 0
    %1054 = vmatpush2.bf16.msra.mxu0 0
    %1055 = vmatprep.subr.bf16.mxu0 0
    %1056 = vmatpush2.bf16.msra.mxu0 0
    %1057 = vmatprep.subr.bf16.mxu0 0
    %1058 = vmatpush2.bf16.msra.mxu0 0
    %1059 = vmatprep.subr.bf16.mxu0 0
    %1060 = vmatpush2.bf16.msra.mxu0 0
    %1061 = vmatprep.subr.bf16.mxu0 0
    %1062 = vmatpush2.bf16.msra.mxu0 0
    %1063 = vmatprep.mubr.bf16.mxu0 0
    %1064 = vmatmul.mubr.bf16.gmra.mxu0 %v1025
    %v1065 = vpop.f32.mrf.mxu0
    %v1066 = vadd.f32 0.0, %v1065
    %v1067 = vpop.f32.mrf.mxu0
    %v1068 = vpop.f32.mrf.mxu0
    %v1069 = vpop.f32.mrf.mxu0
    %1070 = vdwg.mxu0
    %v1072 = vsel %vm975, %v1021, 0
    %v1075 = vsel %vm1027, %v767, 0
    %1077 = vmatprep.subr.bf16.mxu0 0
    %1078 = vmatpush1.bf16.msra.mxu0 0
    %1079 = vmatprep.subr.bf16.mxu0 0
    %1080 = vmatpush1.bf16.msra.mxu0 0
    %1081 = vmatprep.subr.bf16.mxu0 0
    %1082 = vmatpush1.bf16.msra.mxu0 0
    %1083 = vmatprep.subr.bf16.mxu0 0
    %1084 = vmatpush1.bf16.msra.mxu0 0
    %1085 = vmatprep.subr.bf16.mxu0 0
    %1086 = vmatpush1.bf16.msra.mxu0 0
    %1087 = vmatprep.subr.bf16.mxu0 0
    %1088 = vmatpush1.bf16.msra.mxu0 0
    %1089 = vmatprep.subr.bf16.mxu0 0
    %1090 = vmatpush1.bf16.msra.mxu0 0
    %1091 = vmatprep.subr.bf16.mxu0 0
    %1092 = vmatpush1.bf16.msra.mxu0 %v1075
    %1093 = vmatprep.subr.bf16.mxu0 0
    %1094 = vmatpush2.bf16.msra.mxu0 0
    %1095 = vmatprep.subr.bf16.mxu0 0
    %1096 = vmatpush2.bf16.msra.mxu0 0
    %1097 = vmatprep.subr.bf16.mxu0 0
    %1098 = vmatpush2.bf16.msra.mxu0 0
    %1099 = vmatprep.subr.bf16.mxu0 0
    %1100 = vmatpush2.bf16.msra.mxu0 0
    %1101 = vmatprep.subr.bf16.mxu0 0
    %1102 = vmatpush2.bf16.msra.mxu0 0
    %1103 = vmatprep.subr.bf16.mxu0 0
    %1104 = vmatpush2.bf16.msra.mxu0 0
    %1105 = vmatprep.subr.bf16.mxu0 0
    %1106 = vmatpush2.bf16.msra.mxu0 0
    %1107 = vmatprep.subr.bf16.mxu0 0
    %1108 = vmatpush2.bf16.msra.mxu0 0
    %1109 = vmatprep.mubr.bf16.mxu0 0
    %1110 = vmatmul.mubr.bf16.gmra.mxu0 %v1072
    %v1111 = vpop.f32.mrf.mxu0
    %v1112 = vadd.f32 0.0, %v1111
    %v1113 = vpop.f32.mrf.mxu0
    %v1114 = vpop.f32.mrf.mxu0
    %v1115 = vpop.f32.mrf.mxu0
    %1116 = vdwg.mxu0
    %v1118 = vsel %vm975, %v1022, 0
    %v1121 = vsel %vm1027, %v768, 0
    %1123 = vmatprep.subr.bf16.mxu0 0
    %1124 = vmatpush1.bf16.msra.mxu0 0
    %1125 = vmatprep.subr.bf16.mxu0 0
    %1126 = vmatpush1.bf16.msra.mxu0 0
    %1127 = vmatprep.subr.bf16.mxu0 0
    %1128 = vmatpush1.bf16.msra.mxu0 0
    %1129 = vmatprep.subr.bf16.mxu0 0
    %1130 = vmatpush1.bf16.msra.mxu0 0
    %1131 = vmatprep.subr.bf16.mxu0 0
    %1132 = vmatpush1.bf16.msra.mxu0 0
    %1133 = vmatprep.subr.bf16.mxu0 0
    %1134 = vmatpush1.bf16.msra.mxu0 0
    %1135 = vmatprep.subr.bf16.mxu0 0
    %1136 = vmatpush1.bf16.msra.mxu0 0
    %1137 = vmatprep.subr.bf16.mxu0 0
    %1138 = vmatpush1.bf16.msra.mxu0 %v1121
    %1139 = vmatprep.subr.bf16.mxu0 0
    %1140 = vmatpush2.bf16.msra.mxu0 0
    %1141 = vmatprep.subr.bf16.mxu0 0
    %1142 = vmatpush2.bf16.msra.mxu0 0
    %1143 = vmatprep.subr.bf16.mxu0 0
    %1144 = vmatpush2.bf16.msra.mxu0 0
    %1145 = vmatprep.subr.bf16.mxu0 0
    %1146 = vmatpush2.bf16.msra.mxu0 0
    %1147 = vmatprep.subr.bf16.mxu0 0
    %1148 = vmatpush2.bf16.msra.mxu0 0
    %1149 = vmatprep.subr.bf16.mxu0 0
    %1150 = vmatpush2.bf16.msra.mxu0 0
    %1151 = vmatprep.subr.bf16.mxu0 0
    %1152 = vmatpush2.bf16.msra.mxu0 0
    %1153 = vmatprep.subr.bf16.mxu0 0
    %1154 = vmatpush2.bf16.msra.mxu0 0
    %1155 = vmatprep.mubr.bf16.mxu0 0
    %1156 = vmatmul.mubr.bf16.gmra.mxu0 %v1118
    %v1157 = vpop.f32.mrf.mxu0
    %v1158 = vadd.f32 0.0, %v1157
    %v1159 = vpop.f32.mrf.mxu0
    %v1160 = vpop.f32.mrf.mxu0
    %v1161 = vpop.f32.mrf.mxu0
    %1162 = vdwg.mxu0
    %v1164 = vsel %vm975, %v1023, 0
    %v1167 = vsel %vm1027, %v769, 0
    %1169 = vmatprep.subr.bf16.mxu0 0
    %1170 = vmatpush1.bf16.msra.mxu0 0
    %1171 = vmatprep.subr.bf16.mxu0 0
    %1172 = vmatpush1.bf16.msra.mxu0 0
    %1173 = vmatprep.subr.bf16.mxu0 0
    %1174 = vmatpush1.bf16.msra.mxu0 0
    %1175 = vmatprep.subr.bf16.mxu0 0
    %1176 = vmatpush1.bf16.msra.mxu0 0
    %1177 = vmatprep.subr.bf16.mxu0 0
    %1178 = vmatpush1.bf16.msra.mxu0 0
    %1179 = vmatprep.subr.bf16.mxu0 0
    %1180 = vmatpush1.bf16.msra.mxu0 0
    %1181 = vmatprep.subr.bf16.mxu0 0
    %1182 = vmatpush1.bf16.msra.mxu0 0
    %1183 = vmatprep.subr.bf16.mxu0 0
    %1184 = vmatpush1.bf16.msra.mxu0 %v1167
    %1185 = vmatprep.subr.bf16.mxu0 0
    %1186 = vmatpush2.bf16.msra.mxu0 0
    %1187 = vmatprep.subr.bf16.mxu0 0
    %1188 = vmatpush2.bf16.msra.mxu0 0
    %1189 = vmatprep.subr.bf16.mxu0 0
    %1190 = vmatpush2.bf16.msra.mxu0 0
    %1191 = vmatprep.subr.bf16.mxu0 0
    %1192 = vmatpush2.bf16.msra.mxu0 0
    %1193 = vmatprep.subr.bf16.mxu0 0
    %1194 = vmatpush2.bf16.msra.mxu0 0
    %1195 = vmatprep.subr.bf16.mxu0 0
    %1196 = vmatpush2.bf16.msra.mxu0 0
    %1197 = vmatprep.subr.bf16.mxu0 0
    %1198 = vmatpush2.bf16.msra.mxu0 0
    %1199 = vmatprep.subr.bf16.mxu0 0
    %1200 = vmatpush2.bf16.msra.mxu0 0
    %1201 = vmatprep.mubr.bf16.mxu0 0
    %1202 = vmatmul.mubr.bf16.gmra.mxu0 %v1164
    %v1203 = vpop.f32.mrf.mxu0
    %v1204 = vadd.f32 0.0, %v1203
    %v1205 = vpop.f32.mrf.mxu0
    %v1206 = vpop.f32.mrf.mxu0
    %v1207 = vpop.f32.mrf.mxu0
    %1208 = vdwg.mxu0
    %1210 = vrot.lane.b32.xlu0 %v1112, 32
    %v1211 = vpop.permute.xlu0 %1210
    %v1213 = vsel %vm773, %v1066, %v1211
    %1215 = vrot.lane.b32.xlu0 %v1204, 32
    %v1216 = vpop.permute.xlu0 %1215
    %v1218 = vsel %vm773, %v1158, %v1216
    %v1219 = vpack.c.bf16 %v1218, %v1213
    %v1220 = vld [vmem:[%s5] sm:$0xf]
    %v1221 = vld [vmem:[%s5 + $0x4] sm:$0xf]
    %v1222 = vld [vmem:[%s5 + $0x8] sm:$0xf]
    %v1223 = vld [vmem:[%s5 + $0xc] sm:$0xf]
    %v1224 = vld [vmem:[%s5 + $0x10] sm:$0xf]
    %v1225 = vld [vmem:[%s5 + $0x14] sm:$0xf]
    %v1226 = vld [vmem:[%s5 + $0x18] sm:$0xf]
    %v1227 = vld [vmem:[%s5 + $0x1c] sm:$0xf]
    %v1236 = vunpack.c.l.b16 %v1220
    %v1237 = vunpack.c.l.b16 %v1221
    %v1238 = vunpack.c.l.b16 %v1222
    %v1239 = vunpack.c.l.b16 %v1223
    %v1240 = vunpack.c.l.b16 %v1224
    %v1241 = vunpack.c.l.b16 %v1225
    %v1242 = vunpack.c.l.b16 %v1226
    %v1243 = vunpack.c.l.b16 %v1227
    %v1244 = vpack.c.b16 %v1237, %v1236
    %v1245 = vpack.c.b16 %v1239, %v1238
    %v1246 = vpack.c.b16 %v1241, %v1240
    %v1247 = vpack.c.b16 %v1243, %v1242
    %v1253 = vsel %vm608, %v1219, 0
    %1255 = vmatprep.subr.bf16.mxu0 0
    %1256 = vmatpush1.bf16.msra.mxu0 0
    %1257 = vmatprep.subr.bf16.mxu0 0
    %1258 = vmatpush1.bf16.msra.mxu0 0
    %1259 = vmatprep.subr.bf16.mxu0 0
    %1260 = vmatpush1.bf16.msra.mxu0 0
    %1261 = vmatprep.subr.bf16.mxu0 0
    %1262 = vmatpush1.bf16.msra.mxu0 0
    %1263 = vmatprep.subr.bf16.mxu0 0
    %1264 = vmatpush1.bf16.msra.mxu0 %v1247
    %1265 = vmatprep.subr.bf16.mxu0 0
    %1266 = vmatpush1.bf16.msra.mxu0 %v1246
    %1267 = vmatprep.subr.bf16.mxu0 0
    %1268 = vmatpush1.bf16.msra.mxu0 %v1245
    %1269 = vmatprep.subr.bf16.mxu0 0
    %1270 = vmatpush1.bf16.msra.mxu0 %v1244
    %1271 = vmatprep.subr.bf16.mxu0 0
    %1272 = vmatpush2.bf16.msra.mxu0 0
    %1273 = vmatprep.subr.bf16.mxu0 0
    %1274 = vmatpush2.bf16.msra.mxu0 0
    %1275 = vmatprep.subr.bf16.mxu0 0
    %1276 = vmatpush2.bf16.msra.mxu0 0
    %1277 = vmatprep.subr.bf16.mxu0 0
    %1278 = vmatpush2.bf16.msra.mxu0 0
    %1279 = vmatprep.subr.bf16.mxu0 0
    %1280 = vmatpush2.bf16.msra.mxu0 0
    %1281 = vmatprep.subr.bf16.mxu0 0
    %1282 = vmatpush2.bf16.msra.mxu0 0
    %1283 = vmatprep.subr.bf16.mxu0 0
    %1284 = vmatpush2.bf16.msra.mxu0 0
    %1285 = vmatprep.subr.bf16.mxu0 0
    %1286 = vmatpush2.bf16.msra.mxu0 0
    %1287 = vmatprep.mubr.bf16.mxu0 0
    %1288 = vmatmul.mubr.bf16.gmra.mxu0 %v1253
    %v1289 = vpop.f32.mrf.mxu0
    %v1290 = vadd.f32 0.0, %v1289
    %v1291 = vpop.f32.mrf.mxu0
    %v1292 = vpop.f32.mrf.mxu0
    %v1293 = vadd.f32 0.0, %v1292
    %v1294 = vpop.f32.mrf.mxu0
    %1295 = vdwg.mxu0
    %v1296 = vadd.f32 %v588, %v1290
    %v1297 = vadd.f32 %v591, %v1293
    %v1298 = vadd.f32 %v1296, %v602
    %v1299 = vadd.f32 %v1297, %v602
    %v1300 = vsel %vm608, %v1298, 0.0
    %1301 = vadd.xlane.f32.xlu0 %v1300
    %v1302 = vpop.xlane.xlu0 %1301
    %v1303 = vsel %vm608, %v1299, 0.0
    %1304 = vadd.xlane.f32.xlu0 %v1303
    %v1305 = vpop.xlane.xlu0 %1304
    %v1306 = vmul.f32 %v1302, %v615
    %v1307 = vmul.f32 %v1305, %v615
    %v1308 = vsub.f32 %v1298, %v1306
    %v1309 = vsub.f32 %v1299, %v1307
    %v1310 = vmul.f32 %v1308, %v1308
    %v1311 = vmul.f32 %v1309, %v1309
    %v1312 = vsel %vm608, %v1310, 0.0
    %1313 = vadd.xlane.f32.xlu0 %v1312
    %v1314 = vpop.xlane.xlu0 %1313
    %v1315 = vsel %vm608, %v1311, 0.0
    %1316 = vadd.xlane.f32.xlu0 %v1315
    %v1317 = vpop.xlane.xlu0 %1316
    %v1318 = vmul.f32 %v1314, %v615
    %v1319 = vmul.f32 %v1317, %v615
    %v1320 = vadd.f32 %v1318, 1e-06
    %v1321 = vadd.f32 %v1319, 1e-06
    %v1322 = vrsqrt.pop %v1320
    %v1323 = vrsqrt.pop %v1321
    %v1324 = vmul.f32 %v1308, %v1322
    %v1325 = vmul.f32 %v1309, %v1323
    %v1326 = vmul.f32 %v1324, %v603
    %v1327 = vmul.f32 %v1325, %v603
    %v1328 = vadd.f32 %v1326, %v604
    %v1329 = vadd.f32 %v1327, %v604
    %v1330 = vpack.c.bf16 %v1329, %v1328
    %v1331 = vld [vmem:[%s6] sm:$0xff]
    %v1332 = vld [vmem:[%s6 + $0x8] sm:$0xff]
    %v1333 = vld [vmem:[%s6 + $0x10] sm:$0xff]
    %v1334 = vld [vmem:[%s6 + $0x18] sm:$0xff]
    %v1335 = vld [vmem:[%s6 + $0x20] sm:$0xff]
    %v1336 = vld [vmem:[%s6 + $0x28] sm:$0xff]
    %v1337 = vld [vmem:[%s6 + $0x30] sm:$0xff]
    %v1338 = vld [vmem:[%s6 + $0x38] sm:$0xff]
    %v1340 = vlaneseq
    %v1341 = vshrl.u32 %v1340, 7
    %v1342 = vsub.s32 0, %v1341
    %v1343 = vrot.slane %v606, %v1342
    %v1344 = vlaneseq
    %v1345 = vshrl.u32 %v1344, 7
    %v1346 = vsub.s32 1, %v1345
    %v1347 = vrot.slane %v606, %v1346
    %v1358 = vunpack.c.l.b16 %v1331
    %v1359 = vunpack.c.h.b16 %v1331
    %v1360 = vunpack.c.l.b16 %v1332
    %v1361 = vunpack.c.h.b16 %v1332
    %v1362 = vunpack.c.l.b16 %v1333
    %v1363 = vunpack.c.h.b16 %v1333
    %v1364 = vunpack.c.l.b16 %v1334
    %v1365 = vunpack.c.h.b16 %v1334
    %v1366 = vunpack.c.l.b16 %v1335
    %v1367 = vunpack.c.h.b16 %v1335
    %v1368 = vunpack.c.l.b16 %v1336
    %v1369 = vunpack.c.h.b16 %v1336
    %v1370 = vunpack.c.l.b16 %v1337
    %v1371 = vunpack.c.h.b16 %v1337
    %v1372 = vunpack.c.l.b16 %v1338
    %v1373 = vunpack.c.h.b16 %v1338
    %v1374 = vpack.c.b16 %v1360, %v1358
    %v1375 = vpack.c.b16 %v1361, %v1359
    %v1376 = vpack.c.b16 %v1364, %v1362
    %v1377 = vpack.c.b16 %v1365, %v1363
    %v1378 = vpack.c.b16 %v1368, %v1366
    %v1379 = vpack.c.b16 %v1369, %v1367
    %v1380 = vpack.c.b16 %v1372, %v1370
    %v1381 = vpack.c.b16 %v1373, %v1371
    %v1391 = vsel %vm608, %v1330, 0
    %1393 = vmatprep.subr.bf16.mxu0 0
    %1394 = vmatpush1.bf16.msra.mxu0 0
    %1395 = vmatprep.subr.bf16.mxu0 0
    %1396 = vmatpush1.bf16.msra.mxu0 0
    %1397 = vmatprep.subr.bf16.mxu0 0
    %1398 = vmatpush1.bf16.msra.mxu0 0
    %1399 = vmatprep.subr.bf16.mxu0 0
    %1400 = vmatpush1.bf16.msra.mxu0 0
    %1401 = vmatprep.subr.bf16.mxu0 %v1381
    %1402 = vmatpush1.bf16.msra.mxu0 %v1380
    %1403 = vmatprep.subr.bf16.mxu0 %v1379
    %1404 = vmatpush1.bf16.msra.mxu0 %v1378
    %1405 = vmatprep.subr.bf16.mxu0 %v1377
    %1406 = vmatpush1.bf16.msra.mxu0 %v1376
    %1407 = vmatprep.subr.bf16.mxu0 %v1375
    %1408 = vmatpush1.bf16.msra.mxu0 %v1374
    %1409 = vmatprep.subr.bf16.mxu0 0
    %1410 = vmatpush2.bf16.msra.mxu0 0
    %1411 = vmatprep.subr.bf16.mxu0 0
    %1412 = vmatpush2.bf16.msra.mxu0 0
    %1413 = vmatprep.subr.bf16.mxu0 0
    %1414 = vmatpush2.bf16.msra.mxu0 0
    %1415 = vmatprep.subr.bf16.mxu0 0
    %1416 = vmatpush2.bf16.msra.mxu0 0
    %1417 = vmatprep.subr.bf16.mxu0 0
    %1418 = vmatpush2.bf16.msra.mxu0 0
    %1419 = vmatprep.subr.bf16.mxu0 0
    %1420 = vmatpush2.bf16.msra.mxu0 0
    %1421 = vmatprep.subr.bf16.mxu0 0
    %1422 = vmatpush2.bf16.msra.mxu0 0
    %1423 = vmatprep.subr.bf16.mxu0 0
    %1424 = vmatpush2.bf16.msra.mxu0 0
    %1425 = vmatprep.mubr.bf16.mxu0 0
    %1426 = vmatmul.mubr.bf16.gmra.mxu0 %v1391
    %v1427 = vpop.f32.mrf.mxu0
    %v1428 = vadd.f32 %v1343, %v1427
    %v1429 = vpop.f32.mrf.mxu0
    %v1430 = vadd.f32 %v1347, %v1429
    %v1431 = vpop.f32.mrf.mxu0
    %v1432 = vadd.f32 %v1343, %v1431
    %v1433 = vpop.f32.mrf.mxu0
    %v1434 = vadd.f32 %v1347, %v1433
    %1435 = vdwg.mxu0
    %v1436 = vmul.f32 %v1428, 0.5
    %v1437 = vmul.f32 %v1430, 0.5
    %v1438 = vmul.f32 %v1432, 0.5
    %v1439 = vmul.f32 %v1434, 0.5
    %v1440 = vmul.f32 %v1428, 0.044715
    %v1441 = vmul.f32 %v1430, 0.044715
    %v1442 = vmul.f32 %v1432, 0.044715
    %v1443 = vmul.f32 %v1434, 0.044715
    %v1444 = vmul.f32 %v1440, %v1428
    %v1445 = vmul.f32 %v1441, %v1430
    %v1446 = vmul.f32 %v1442, %v1432
    %v1447 = vmul.f32 %v1443, %v1434
    %v1448 = vmul.f32 %v1444, %v1428
    %v1449 = vmul.f32 %v1445, %v1430
    %v1450 = vmul.f32 %v1446, %v1432
    %v1451 = vmul.f32 %v1447, %v1434
    %v1452 = vadd.f32 %v1428, %v1448
    %v1453 = vadd.f32 %v1430, %v1449
    %v1454 = vadd.f32 %v1432, %v1450
    %v1455 = vadd.f32 %v1434, %v1451
    %v1456 = vmul.f32 %v1452, 0.7978846
    %v1457 = vmul.f32 %v1453, 0.7978846
    %v1458 = vmul.f32 %v1454, 0.7978846
    %v1459 = vmul.f32 %v1455, 0.7978846
    %v1460 = vtanh.pop %v1456
    %v1461 = vtanh.pop %v1457
    %v1462 = vtanh.pop %v1458
    %v1463 = vtanh.pop %v1459
    %v1464 = vadd.f32 %v1460, 1.0
    %v1465 = vadd.f32 %v1461, 1.0
    %v1466 = vadd.f32 %v1462, 1.0
    %v1467 = vadd.f32 %v1463, 1.0
    %v1468 = vmul.f32 %v1436, %v1464
    %v1469 = vmul.f32 %v1437, %v1465
    %v1470 = vmul.f32 %v1438, %v1466
    %v1471 = vmul.f32 %v1439, %v1467
    %v1472 = vpack.c.bf16 %v1470, %v1468
    %v1473 = vpack.c.bf16 %v1471, %v1469
    %v1474 = vld [vmem:[%s7] sm:$0xf]
    %v1475 = vld [vmem:[%s7 + $0x4] sm:$0xf]
    %v1476 = vld [vmem:[%s7 + $0x8] sm:$0xf]
    %v1477 = vld [vmem:[%s7 + $0xc] sm:$0xf]
    %v1478 = vld [vmem:[%s7 + $0x10] sm:$0xf]
    %v1479 = vld [vmem:[%s7 + $0x14] sm:$0xf]
    %v1480 = vld [vmem:[%s7 + $0x18] sm:$0xf]
    %v1481 = vld [vmem:[%s7 + $0x1c] sm:$0xf]
    %v1482 = vld [vmem:[%s7 + $0x20] sm:$0xf]
    %v1483 = vld [vmem:[%s7 + $0x24] sm:$0xf]
    %v1484 = vld [vmem:[%s7 + $0x28] sm:$0xf]
    %v1485 = vld [vmem:[%s7 + $0x2c] sm:$0xf]
    %v1486 = vld [vmem:[%s7 + $0x30] sm:$0xf]
    %v1487 = vld [vmem:[%s7 + $0x34] sm:$0xf]
    %v1488 = vld [vmem:[%s7 + $0x38] sm:$0xf]
    %v1489 = vld [vmem:[%s7 + $0x3c] sm:$0xf]
    %v1490 = vld [vmem:[%s7 + $0x40] sm:$0xf]
    %v1491 = vld [vmem:[%s7 + $0x44] sm:$0xf]
    %v1492 = vld [vmem:[%s7 + $0x48] sm:$0xf]
    %v1493 = vld [vmem:[%s7 + $0x4c] sm:$0xf]
    %v1494 = vld [vmem:[%s7 + $0x50] sm:$0xf]
    %v1495 = vld [vmem:[%s7 + $0x54] sm:$0xf]
    %v1496 = vld [vmem:[%s7 + $0x58] sm:$0xf]
    %v1497 = vld [vmem:[%s7 + $0x5c] sm:$0xf]
    %v1498 = vld [vmem:[%s7 + $0x60] sm:$0xf]
    %v1499 = vld [vmem:[%s7 + $0x64] sm:$0xf]
    %v1500 = vld [vmem:[%s7 + $0x68] sm:$0xf]
    %v1501 = vld [vmem:[%s7 + $0x6c] sm:$0xf]
    %v1502 = vld [vmem:[%s7 + $0x70] sm:$0xf]
    %v1503 = vld [vmem:[%s7 + $0x74] sm:$0xf]
    %v1504 = vld [vmem:[%s7 + $0x78] sm:$0xf]
    %v1505 = vld [vmem:[%s7 + $0x7c] sm:$0xf]
    %v1538 = vunpack.c.l.b16 %v1474
    %v1539 = vunpack.c.l.b16 %v1475
    %v1540 = vunpack.c.l.b16 %v1476
    %v1541 = vunpack.c.l.b16 %v1477
    %v1542 = vunpack.c.l.b16 %v1478
    %v1543 = vunpack.c.l.b16 %v1479
    %v1544 = vunpack.c.l.b16 %v1480
    %v1545 = vunpack.c.l.b16 %v1481
    %v1546 = vunpack.c.l.b16 %v1482
    %v1547 = vunpack.c.l.b16 %v1483
    %v1548 = vunpack.c.l.b16 %v1484
    %v1549 = vunpack.c.l.b16 %v1485
    %v1550 = vunpack.c.l.b16 %v1486
    %v1551 = vunpack.c.l.b16 %v1487
    %v1552 = vunpack.c.l.b16 %v1488
    %v1553 = vunpack.c.l.b16 %v1489
    %v1554 = vunpack.c.l.b16 %v1490
    %v1555 = vunpack.c.l.b16 %v1491
    %v1556 = vunpack.c.l.b16 %v1492
    %v1557 = vunpack.c.l.b16 %v1493
    %v1558 = vunpack.c.l.b16 %v1494
    %v1559 = vunpack.c.l.b16 %v1495
    %v1560 = vunpack.c.l.b16 %v1496
    %v1561 = vunpack.c.l.b16 %v1497
    %v1562 = vunpack.c.l.b16 %v1498
    %v1563 = vunpack.c.l.b16 %v1499
    %v1564 = vunpack.c.l.b16 %v1500
    %v1565 = vunpack.c.l.b16 %v1501
    %v1566 = vunpack.c.l.b16 %v1502
    %v1567 = vunpack.c.l.b16 %v1503
    %v1568 = vunpack.c.l.b16 %v1504
    %v1569 = vunpack.c.l.b16 %v1505
    %v1570 = vpack.c.b16 %v1539, %v1538
    %v1571 = vpack.c.b16 %v1541, %v1540
    %v1572 = vpack.c.b16 %v1543, %v1542
    %v1573 = vpack.c.b16 %v1545, %v1544
    %v1574 = vpack.c.b16 %v1547, %v1546
    %v1575 = vpack.c.b16 %v1549, %v1548
    %v1576 = vpack.c.b16 %v1551, %v1550
    %v1577 = vpack.c.b16 %v1553, %v1552
    %v1578 = vpack.c.b16 %v1555, %v1554
    %v1579 = vpack.c.b16 %v1557, %v1556
    %v1580 = vpack.c.b16 %v1559, %v1558
    %v1581 = vpack.c.b16 %v1561, %v1560
    %v1582 = vpack.c.b16 %v1563, %v1562
    %v1583 = vpack.c.b16 %v1565, %v1564
    %v1584 = vpack.c.b16 %v1567, %v1566
    %v1585 = vpack.c.b16 %v1569, %v1568
    %1602 = vmatprep.subr.bf16.mxu0 0
    %1603 = vmatpush1.bf16.msra.mxu0 %v1577
    %1604 = vmatprep.subr.bf16.mxu0 0
    %1605 = vmatpush1.bf16.msra.mxu0 %v1576
    %1606 = vmatprep.subr.bf16.mxu0 0
    %1607 = vmatpush1.bf16.msra.mxu0 %v1575
    %1608 = vmatprep.subr.bf16.mxu0 0
    %1609 = vmatpush1.bf16.msra.mxu0 %v1574
    %1610 = vmatprep.subr.bf16.mxu0 0
    %1611 = vmatpush1.bf16.msra.mxu0 %v1573
    %1612 = vmatprep.subr.bf16.mxu0 0
    %1613 = vmatpush1.bf16.msra.mxu0 %v1572
    %1614 = vmatprep.subr.bf16.mxu0 0
    %1615 = vmatpush1.bf16.msra.mxu0 %v1571
    %1616 = vmatprep.subr.bf16.mxu0 0
    %1617 = vmatpush1.bf16.msra.mxu0 %v1570
    %1618 = vmatprep.subr.bf16.mxu0 0
    %1619 = vmatpush2.bf16.msra.mxu0 %v1585
    %1620 = vmatprep.subr.bf16.mxu0 0
    %1621 = vmatpush2.bf16.msra.mxu0 %v1584
    %1622 = vmatprep.subr.bf16.mxu0 0
    %1623 = vmatpush2.bf16.msra.mxu0 %v1583
    %1624 = vmatprep.subr.bf16.mxu0 0
    %1625 = vmatpush2.bf16.msra.mxu0 %v1582
    %1626 = vmatprep.subr.bf16.mxu0 0
    %1627 = vmatpush2.bf16.msra.mxu0 %v1581
    %1628 = vmatprep.subr.bf16.mxu0 0
    %1629 = vmatpush2.bf16.msra.mxu0 %v1580
    %1630 = vmatprep.subr.bf16.mxu0 0
    %1631 = vmatpush2.bf16.msra.mxu0 %v1579
    %1632 = vmatprep.subr.bf16.mxu0 0
    %1633 = vmatpush2.bf16.msra.mxu0 %v1578
    %1634 = vmatprep.mubr.bf16.mxu0 %v1473
    %1635 = vmatmul.mubr.bf16.gmra.mxu0 %v1472
    %v1636 = vpop.f32.mrf.mxu0
    %v1637 = vadd.f32 0.0, %v1636
    %v1638 = vpop.f32.mrf.mxu0
    %v1639 = vpop.f32.mrf.mxu0
    %v1640 = vadd.f32 0.0, %v1639
    %v1641 = vpop.f32.mrf.mxu0
    %1642 = vdwg.mxu0
    %v1643 = vadd.f32 %v1298, %v1637
    %v1644 = vadd.f32 %v1299, %v1640
    %v1645 = vadd.f32 %v1643, %v607
    %v1646 = vadd.f32 %v1644, %v607
    %v1647 = vld [vmem:[%s3 + $0x10] ss:$0 sm:$0xff]
    %v1648 = vld [vmem:[%s3 + $0x11] ss:$0 sm:$0xff]
    %s1649 = scalar_lea.vmem %s3, 18
    %v1650 = vld [vmem:[%s1649] ss:$8 sm:$0x3]
    %v1651 = vld [vmem:[%s3 + $0x13] ss:$0 sm:$0xff]
    %v1652 = vld [vmem:[%s3 + $0x14] ss:$0 sm:$0xff]
    %v1653 = vld [vmem:[%s3 + $0x15] ss:$0 sm:$0xff]
    %s1654 = scalar_lea.vmem %s3, 22
    %v1655 = vld [vmem:[%s1654] ss:$8 sm:$0x3]
    %v1656 = vld [vmem:[%s3 + $0x17] ss:$0 sm:$0xff]
    %v1657 = vsel %vm608, %v1645, 0.0
    %1658 = vadd.xlane.f32.xlu0 %v1657
    %v1659 = vpop.xlane.xlu0 %1658
    %v1660 = vsel %vm608, %v1646, 0.0
    %1661 = vadd.xlane.f32.xlu0 %v1660
    %v1662 = vpop.xlane.xlu0 %1661
    %v1663 = vmul.f32 %v1659, %v615
    %v1664 = vmul.f32 %v1662, %v615
    %v1665 = vsub.f32 %v1645, %v1663
    %v1666 = vsub.f32 %v1646, %v1664
    %v1667 = vmul.f32 %v1665, %v1665
    %v1668 = vmul.f32 %v1666, %v1666
    %v1669 = vsel %vm608, %v1667, 0.0
    %1670 = vadd.xlane.f32.xlu0 %v1669
    %v1671 = vpop.xlane.xlu0 %1670
    %v1672 = vsel %vm608, %v1668, 0.0
    %1673 = vadd.xlane.f32.xlu0 %v1672
    %v1674 = vpop.xlane.xlu0 %1673
    %v1675 = vmul.f32 %v1671, %v615
    %v1676 = vmul.f32 %v1674, %v615
    %v1677 = vadd.f32 %v1675, 1e-06
    %v1678 = vadd.f32 %v1676, 1e-06
    %v1679 = vrsqrt.pop %v1677
    %v1680 = vrsqrt.pop %v1678
    %v1681 = vmul.f32 %v1665, %v1679
    %v1682 = vmul.f32 %v1666, %v1680
    %v1683 = vmul.f32 %v1681, %v1647
    %v1684 = vmul.f32 %v1682, %v1647
    %v1685 = vadd.f32 %v1683, %v1648
    %v1686 = vadd.f32 %v1684, %v1648
    %v1687 = vpack.c.bf16 %v1686, %v1685
    %v1688 = vld [vmem:[%s8] sm:$0xff]
    %v1689 = vld [vmem:[%s8 + $0x8] sm:$0xff]
    %v1690 = vld [vmem:[%s8 + $0x10] sm:$0xff]
    %v1691 = vld [vmem:[%s8 + $0x18] sm:$0xff]
    %v1692 = vld [vmem:[%s8 + $0x20] sm:$0xff]
    %v1693 = vld [vmem:[%s8 + $0x28] sm:$0xff]
    %v1694 = vld [vmem:[%s8 + $0x30] sm:$0xff]
    %v1695 = vld [vmem:[%s8 + $0x38] sm:$0xff]
    %v1697 = vlaneseq
    %v1698 = vshrl.u32 %v1697, 7
    %v1699 = vsub.s32 0, %v1698
    %v1700 = vrot.slane %v1650, %v1699
    %v1701 = vlaneseq
    %v1702 = vshrl.u32 %v1701, 7
    %v1703 = vsub.s32 1, %v1702
    %v1704 = vrot.slane %v1650, %v1703
    %v1715 = vunpack.c.l.b16 %v1688
    %v1716 = vunpack.c.h.b16 %v1688
    %v1717 = vunpack.c.l.b16 %v1689
    %v1718 = vunpack.c.h.b16 %v1689
    %v1719 = vunpack.c.l.b16 %v1690
    %v1720 = vunpack.c.h.b16 %v1690
    %v1721 = vunpack.c.l.b16 %v1691
    %v1722 = vunpack.c.h.b16 %v1691
    %v1723 = vunpack.c.l.b16 %v1692
    %v1724 = vunpack.c.h.b16 %v1692
    %v1725 = vunpack.c.l.b16 %v1693
    %v1726 = vunpack.c.h.b16 %v1693
    %v1727 = vunpack.c.l.b16 %v1694
    %v1728 = vunpack.c.h.b16 %v1694
    %v1729 = vunpack.c.l.b16 %v1695
    %v1730 = vunpack.c.h.b16 %v1695
    %v1731 = vpack.c.b16 %v1717, %v1715
    %v1732 = vpack.c.b16 %v1718, %v1716
    %v1733 = vpack.c.b16 %v1721, %v1719
    %v1734 = vpack.c.b16 %v1722, %v1720
    %v1735 = vpack.c.b16 %v1725, %v1723
    %v1736 = vpack.c.b16 %v1726, %v1724
    %v1737 = vpack.c.b16 %v1729, %v1727
    %v1738 = vpack.c.b16 %v1730, %v1728
    %v1748 = vsel %vm608, %v1687, 0
    %1750 = vmatprep.subr.bf16.mxu0 0
    %1751 = vmatpush1.bf16.msra.mxu0 0
    %1752 = vmatprep.subr.bf16.mxu0 0
    %1753 = vmatpush1.bf16.msra.mxu0 0
    %1754 = vmatprep.subr.bf16.mxu0 0
    %1755 = vmatpush1.bf16.msra.mxu0 0
    %1756 = vmatprep.subr.bf16.mxu0 0
    %1757 = vmatpush1.bf16.msra.mxu0 0
    %1758 = vmatprep.subr.bf16.mxu0 %v1738
    %1759 = vmatpush1.bf16.msra.mxu0 %v1737
    %1760 = vmatprep.subr.bf16.mxu0 %v1736
    %1761 = vmatpush1.bf16.msra.mxu0 %v1735
    %1762 = vmatprep.subr.bf16.mxu0 %v1734
    %1763 = vmatpush1.bf16.msra.mxu0 %v1733
    %1764 = vmatprep.subr.bf16.mxu0 %v1732
    %1765 = vmatpush1.bf16.msra.mxu0 %v1731
    %1766 = vmatprep.subr.bf16.mxu0 0
    %1767 = vmatpush2.bf16.msra.mxu0 0
    %1768 = vmatprep.subr.bf16.mxu0 0
    %1769 = vmatpush2.bf16.msra.mxu0 0
    %1770 = vmatprep.subr.bf16.mxu0 0
    %1771 = vmatpush2.bf16.msra.mxu0 0
    %1772 = vmatprep.subr.bf16.mxu0 0
    %1773 = vmatpush2.bf16.msra.mxu0 0
    %1774 = vmatprep.subr.bf16.mxu0 0
    %1775 = vmatpush2.bf16.msra.mxu0 0
    %1776 = vmatprep.subr.bf16.mxu0 0
    %1777 = vmatpush2.bf16.msra.mxu0 0
    %1778 = vmatprep.subr.bf16.mxu0 0
    %1779 = vmatpush2.bf16.msra.mxu0 0
    %1780 = vmatprep.subr.bf16.mxu0 0
    %1781 = vmatpush2.bf16.msra.mxu0 0
    %1782 = vmatprep.mubr.bf16.mxu0 0
    %1783 = vmatmul.mubr.bf16.gmra.mxu0 %v1748
    %v1784 = vpop.f32.mrf.mxu0
    %v1785 = vadd.f32 %v1700, %v1784
    %v1786 = vpop.f32.mrf.mxu0
    %v1787 = vadd.f32 %v1704, %v1786
    %v1788 = vpop.f32.mrf.mxu0
    %v1789 = vadd.f32 %v1700, %v1788
    %v1790 = vpop.f32.mrf.mxu0
    %v1791 = vadd.f32 %v1704, %v1790
    %1792 = vdwg.mxu0
    %1794 = vrot.lane.b32.xlu0 %v1785, 96
    %v1795 = vpop.permute.xlu0 %1794
    %1798 = vrot.lane.b32.xlu0 %v1789, 96
    %v1799 = vpop.permute.xlu0 %1798
    %v1801 = vpack.c.bf16 %v1785, %v1785
    %v1802 = vpack.c.bf16 %v1795, %v1795
    %v1803 = vpack.c.bf16 %v1789, %v1789
    %v1804 = vpack.c.bf16 %v1799, %v1799
    %1806 = vrot.lane.b32.xlu0 %v1787, 96
    %v1807 = vpop.permute.xlu0 %1806
    %1810 = vrot.lane.b32.xlu0 %v1791, 96
    %v1811 = vpop.permute.xlu0 %1810
    %v1813 = vpack.c.bf16 %v1787, %v1787
    %v1814 = vpack.c.bf16 %v1807, %v1807
    %v1815 = vpack.c.bf16 %v1791, %v1791
    %v1816 = vpack.c.bf16 %v1811, %v1811
    %1818 = vrot.lane.b32.xlu0 %v1801, 64
    %v1819 = vpop.permute.xlu0 %1818
    %v1821 = vsel %vm773, %v1801, 0
    %v1824 = vsel %vm773, %v1819, 0
    %1826 = vmatprep.subr.bf16.mxu0 0
    %1827 = vmatpush1.bf16.xpose.msra.mxu0 0
    %1828 = vmatprep.subr.bf16.mxu0 0
    %1829 = vmatpush1.bf16.xpose.msra.mxu0 0
    %1830 = vmatprep.subr.bf16.mxu0 0
    %1831 = vmatpush1.bf16.xpose.msra.mxu0 0
    %1832 = vmatprep.subr.bf16.mxu0 0
    %1833 = vmatpush1.bf16.xpose.msra.mxu0 0
    %1834 = vmatprep.subr.bf16.mxu0 0
    %1835 = vmatpush1.bf16.xpose.msra.mxu0 0
    %1836 = vmatprep.subr.bf16.mxu0 0
    %1837 = vmatpush1.bf16.xpose.msra.mxu0 0
    %1838 = vmatprep.subr.bf16.mxu0 0
    %1839 = vmatpush1.bf16.xpose.msra.mxu0 0
    %1840 = vmatprep.subr.bf16.mxu0 0
    %1841 = vmatpush1.bf16.xpose.msra.mxu0 %v1824
    %1842 = vmatprep.subr.bf16.mxu0 0
    %1843 = vmatpush2.bf16.xpose.msra.mxu0 0
    %1844 = vmatprep.subr.bf16.mxu0 0
    %1845 = vmatpush2.bf16.xpose.msra.mxu0 0
    %1846 = vmatprep.subr.bf16.mxu0 0
    %1847 = vmatpush2.bf16.xpose.msra.mxu0 0
    %1848 = vmatprep.subr.bf16.mxu0 0
    %1849 = vmatpush2.bf16.xpose.msra.mxu0 0
    %1850 = vmatprep.subr.bf16.mxu0 0
    %1851 = vmatpush2.bf16.xpose.msra.mxu0 0
    %1852 = vmatprep.subr.bf16.mxu0 0
    %1853 = vmatpush2.bf16.xpose.msra.mxu0 0
    %1854 = vmatprep.subr.bf16.mxu0 0
    %1855 = vmatpush2.bf16.xpose.msra.mxu0 0
    %1856 = vmatprep.subr.bf16.mxu0 0
    %1857 = vmatpush2.bf16.xpose.msra.mxu0 0
    %1858 = vmatprep.mubr.bf16.mxu0 0
    %1859 = vmatmul.mubr.bf16.gmra.mxu0 %v1821
    %v1860 = vpop.f32.mrf.mxu0
    %v1861 = vadd.f32 0.0, %v1860
    %v1862 = vpop.f32.mrf.mxu0
    %v1863 = vpop.f32.mrf.mxu0
    %v1864 = vpop.f32.mrf.mxu0
    %1865 = vdwg.mxu0
    %1867 = vrot.lane.b32.xlu0 %v1802, 64
    %v1868 = vpop.permute.xlu0 %1867
    %v1870 = vsel %vm773, %v1802, 0
    %v1873 = vsel %vm773, %v1868, 0
    %1875 = vmatprep.subr.bf16.mxu0 0
    %1876 = vmatpush1.bf16.xpose.msra.mxu0 0
    %1877 = vmatprep.subr.bf16.mxu0 0
    %1878 = vmatpush1.bf16.xpose.msra.mxu0 0
    %1879 = vmatprep.subr.bf16.mxu0 0
    %1880 = vmatpush1.bf16.xpose.msra.mxu0 0
    %1881 = vmatprep.subr.bf16.mxu0 0
    %1882 = vmatpush1.bf16.xpose.msra.mxu0 0
    %1883 = vmatprep.subr.bf16.mxu0 0
    %1884 = vmatpush1.bf16.xpose.msra.mxu0 0
    %1885 = vmatprep.subr.bf16.mxu0 0
    %1886 = vmatpush1.bf16.xpose.msra.mxu0 0
    %1887 = vmatprep.subr.bf16.mxu0 0
    %1888 = vmatpush1.bf16.xpose.msra.mxu0 0
    %1889 = vmatprep.subr.bf16.mxu0 0
    %1890 = vmatpush1.bf16.xpose.msra.mxu0 %v1873
    %1891 = vmatprep.subr.bf16.mxu0 0
    %1892 = vmatpush2.bf16.xpose.msra.mxu0 0
    %1893 = vmatprep.subr.bf16.mxu0 0
    %1894 = vmatpush2.bf16.xpose.msra.mxu0 0
    %1895 = vmatprep.subr.bf16.mxu0 0
    %1896 = vmatpush2.bf16.xpose.msra.mxu0 0
    %1897 = vmatprep.subr.bf16.mxu0 0
    %1898 = vmatpush2.bf16.xpose.msra.mxu0 0
    %1899 = vmatprep.subr.bf16.mxu0 0
    %1900 = vmatpush2.bf16.xpose.msra.mxu0 0
    %1901 = vmatprep.subr.bf16.mxu0 0
    %1902 = vmatpush2.bf16.xpose.msra.mxu0 0
    %1903 = vmatprep.subr.bf16.mxu0 0
    %1904 = vmatpush2.bf16.xpose.msra.mxu0 0
    %1905 = vmatprep.subr.bf16.mxu0 0
    %1906 = vmatpush2.bf16.xpose.msra.mxu0 0
    %1907 = vmatprep.mubr.bf16.mxu0 0
    %1908 = vmatmul.mubr.bf16.gmra.mxu0 %v1870
    %v1909 = vpop.f32.mrf.mxu0
    %v1910 = vadd.f32 0.0, %v1909
    %v1911 = vpop.f32.mrf.mxu0
    %v1912 = vpop.f32.mrf.mxu0
    %v1913 = vpop.f32.mrf.mxu0
    %1914 = vdwg.mxu0
    %1916 = vrot.lane.b32.xlu0 %v1803, 64
    %v1917 = vpop.permute.xlu0 %1916
    %v1919 = vsel %vm773, %v1803, 0
    %v1922 = vsel %vm773, %v1917, 0
    %1924 = vmatprep.subr.bf16.mxu0 0
    %1925 = vmatpush1.bf16.xpose.msra.mxu0 0
    %1926 = vmatprep.subr.bf16.mxu0 0
    %1927 = vmatpush1.bf16.xpose.msra.mxu0 0
    %1928 = vmatprep.subr.bf16.mxu0 0
    %1929 = vmatpush1.bf16.xpose.msra.mxu0 0
    %1930 = vmatprep.subr.bf16.mxu0 0
    %1931 = vmatpush1.bf16.xpose.msra.mxu0 0
    %1932 = vmatprep.subr.bf16.mxu0 0
    %1933 = vmatpush1.bf16.xpose.msra.mxu0 0
    %1934 = vmatprep.subr.bf16.mxu0 0
    %1935 = vmatpush1.bf16.xpose.msra.mxu0 0
    %1936 = vmatprep.subr.bf16.mxu0 0
    %1937 = vmatpush1.bf16.xpose.msra.mxu0 0
    %1938 = vmatprep.subr.bf16.mxu0 0
    %1939 = vmatpush1.bf16.xpose.msra.mxu0 %v1922
    %1940 = vmatprep.subr.bf16.mxu0 0
    %1941 = vmatpush2.bf16.xpose.msra.mxu0 0
    %1942 = vmatprep.subr.bf16.mxu0 0
    %1943 = vmatpush2.bf16.xpose.msra.mxu0 0
    %1944 = vmatprep.subr.bf16.mxu0 0
    %1945 = vmatpush2.bf16.xpose.msra.mxu0 0
    %1946 = vmatprep.subr.bf16.mxu0 0
    %1947 = vmatpush2.bf16.xpose.msra.mxu0 0
    %1948 = vmatprep.subr.bf16.mxu0 0
    %1949 = vmatpush2.bf16.xpose.msra.mxu0 0
    %1950 = vmatprep.subr.bf16.mxu0 0
    %1951 = vmatpush2.bf16.xpose.msra.mxu0 0
    %1952 = vmatprep.subr.bf16.mxu0 0
    %1953 = vmatpush2.bf16.xpose.msra.mxu0 0
    %1954 = vmatprep.subr.bf16.mxu0 0
    %1955 = vmatpush2.bf16.xpose.msra.mxu0 0
    %1956 = vmatprep.mubr.bf16.mxu0 0
    %1957 = vmatmul.mubr.bf16.gmra.mxu0 %v1919
    %v1958 = vpop.f32.mrf.mxu0
    %v1959 = vadd.f32 0.0, %v1958
    %v1960 = vpop.f32.mrf.mxu0
    %v1961 = vpop.f32.mrf.mxu0
    %v1962 = vpop.f32.mrf.mxu0
    %1963 = vdwg.mxu0
    %1965 = vrot.lane.b32.xlu0 %v1804, 64
    %v1966 = vpop.permute.xlu0 %1965
    %v1968 = vsel %vm773, %v1804, 0
    %v1971 = vsel %vm773, %v1966, 0
    %1973 = vmatprep.subr.bf16.mxu0 0
    %1974 = vmatpush1.bf16.xpose.msra.mxu0 0
    %1975 = vmatprep.subr.bf16.mxu0 0
    %1976 = vmatpush1.bf16.xpose.msra.mxu0 0
    %1977 = vmatprep.subr.bf16.mxu0 0
    %1978 = vmatpush1.bf16.xpose.msra.mxu0 0
    %1979 = vmatprep.subr.bf16.mxu0 0
    %1980 = vmatpush1.bf16.xpose.msra.mxu0 0
    %1981 = vmatprep.subr.bf16.mxu0 0
    %1982 = vmatpush1.bf16.xpose.msra.mxu0 0
    %1983 = vmatprep.subr.bf16.mxu0 0
    %1984 = vmatpush1.bf16.xpose.msra.mxu0 0
    %1985 = vmatprep.subr.bf16.mxu0 0
    %1986 = vmatpush1.bf16.xpose.msra.mxu0 0
    %1987 = vmatprep.subr.bf16.mxu0 0
    %1988 = vmatpush1.bf16.xpose.msra.mxu0 %v1971
    %1989 = vmatprep.subr.bf16.mxu0 0
    %1990 = vmatpush2.bf16.xpose.msra.mxu0 0
    %1991 = vmatprep.subr.bf16.mxu0 0
    %1992 = vmatpush2.bf16.xpose.msra.mxu0 0
    %1993 = vmatprep.subr.bf16.mxu0 0
    %1994 = vmatpush2.bf16.xpose.msra.mxu0 0
    %1995 = vmatprep.subr.bf16.mxu0 0
    %1996 = vmatpush2.bf16.xpose.msra.mxu0 0
    %1997 = vmatprep.subr.bf16.mxu0 0
    %1998 = vmatpush2.bf16.xpose.msra.mxu0 0
    %1999 = vmatprep.subr.bf16.mxu0 0
    %2000 = vmatpush2.bf16.xpose.msra.mxu0 0
    %2001 = vmatprep.subr.bf16.mxu0 0
    %2002 = vmatpush2.bf16.xpose.msra.mxu0 0
    %2003 = vmatprep.subr.bf16.mxu0 0
    %2004 = vmatpush2.bf16.xpose.msra.mxu0 0
    %2005 = vmatprep.mubr.bf16.mxu0 0
    %2006 = vmatmul.mubr.bf16.gmra.mxu0 %v1968
    %v2007 = vpop.f32.mrf.mxu0
    %v2008 = vadd.f32 0.0, %v2007
    %v2009 = vpop.f32.mrf.mxu0
    %v2010 = vpop.f32.mrf.mxu0
    %v2011 = vpop.f32.mrf.mxu0
    %2012 = vdwg.mxu0
    %v2013 = vmul.f32 %v1861, 0.17677669
    %v2014 = vmul.f32 %v1910, 0.17677669
    %v2015 = vmul.f32 %v1959, 0.17677669
    %v2016 = vmul.f32 %v2008, 0.17677669
    %v2017 = vadd.f32 %v2013, %v597
    %v2018 = vadd.f32 %v2014, %v597
    %v2019 = vadd.f32 %v2015, %v597
    %v2020 = vadd.f32 %v2016, %v597
    %v2021 = vsel %vm975, %v2017, -inf
    %2022 = vmax.xlane.f32.xlu0 %v2021
    %v2023 = vpop.xlane.xlu0 %2022
    %v2024 = vsel %vm975, %v2018, -inf
    %2025 = vmax.xlane.f32.xlu0 %v2024
    %v2026 = vpop.xlane.xlu0 %2025
    %v2027 = vsel %vm975, %v2019, -inf
    %2028 = vmax.xlane.f32.xlu0 %v2027
    %v2029 = vpop.xlane.xlu0 %2028
    %v2030 = vsel %vm975, %v2020, -inf
    %2031 = vmax.xlane.f32.xlu0 %v2030
    %v2032 = vpop.xlane.xlu0 %2031
    %v2033 = vsub.f32 %v2017, %v2023
    %v2034 = vsub.f32 %v2018, %v2026
    %v2035 = vsub.f32 %v2019, %v2029
    %v2036 = vsub.f32 %v2020, %v2032
    %v2037 = vmul.f32 %v2033, 1.442695
    %v2038 = vpow.pop %v2037
    %v2039 = vmul.f32 %v2034, 1.442695
    %v2040 = vpow.pop %v2039
    %v2041 = vmul.f32 %v2035, 1.442695
    %v2042 = vpow.pop %v2041
    %v2043 = vmul.f32 %v2036, 1.442695
    %v2044 = vpow.pop %v2043
    %v2045 = vsel %vm975, %v2038, 0.0
    %2046 = vadd.xlane.f32.xlu0 %v2045
    %v2047 = vpop.xlane.xlu0 %2046
    %v2048 = vsel %vm975, %v2040, 0.0
    %2049 = vadd.xlane.f32.xlu0 %v2048
    %v2050 = vpop.xlane.xlu0 %2049
    %v2051 = vsel %vm975, %v2042, 0.0
    %2052 = vadd.xlane.f32.xlu0 %v2051
    %v2053 = vpop.xlane.xlu0 %2052
    %v2054 = vsel %vm975, %v2044, 0.0
    %2055 = vadd.xlane.f32.xlu0 %v2054
    %v2056 = vpop.xlane.xlu0 %2055
    %v2057 = vrcp.pop %v2047
    %v2058 = vrcp.pop %v2050
    %v2059 = vrcp.pop %v2053
    %v2060 = vrcp.pop %v2056
    %v2061 = vmul.f32 %v2038, %v2057
    %v2062 = vmul.f32 %v2040, %v2058
    %v2063 = vmul.f32 %v2042, %v2059
    %v2064 = vmul.f32 %v2044, %v2060
    %v2065 = vpack.c.bf16 %v2061, %v2061
    %v2066 = vpack.c.bf16 %v2062, %v2062
    %v2067 = vpack.c.bf16 %v2063, %v2063
    %v2068 = vpack.c.bf16 %v2064, %v2064
    %v2070 = vsel %vm975, %v2065, 0
    %v2073 = vsel %vm1027, %v1813, 0
    %2075 = vmatprep.subr.bf16.mxu0 0
    %2076 = vmatpush1.bf16.msra.mxu0 0
    %2077 = vmatprep.subr.bf16.mxu0 0
    %2078 = vmatpush1.bf16.msra.mxu0 0
    %2079 = vmatprep.subr.bf16.mxu0 0
    %2080 = vmatpush1.bf16.msra.mxu0 0
    %2081 = vmatprep.subr.bf16.mxu0 0
    %2082 = vmatpush1.bf16.msra.mxu0 0
    %2083 = vmatprep.subr.bf16.mxu0 0
    %2084 = vmatpush1.bf16.msra.mxu0 0
    %2085 = vmatprep.subr.bf16.mxu0 0
    %2086 = vmatpush1.bf16.msra.mxu0 0
    %2087 = vmatprep.subr.bf16.mxu0 0
    %2088 = vmatpush1.bf16.msra.mxu0 0
    %2089 = vmatprep.subr.bf16.mxu0 0
    %2090 = vmatpush1.bf16.msra.mxu0 %v2073
    %2091 = vmatprep.subr.bf16.mxu0 0
    %2092 = vmatpush2.bf16.msra.mxu0 0
    %2093 = vmatprep.subr.bf16.mxu0 0
    %2094 = vmatpush2.bf16.msra.mxu0 0
    %2095 = vmatprep.subr.bf16.mxu0 0
    %2096 = vmatpush2.bf16.msra.mxu0 0
    %2097 = vmatprep.subr.bf16.mxu0 0
    %2098 = vmatpush2.bf16.msra.mxu0 0
    %2099 = vmatprep.subr.bf16.mxu0 0
    %2100 = vmatpush2.bf16.msra.mxu0 0
    %2101 = vmatprep.subr.bf16.mxu0 0
    %2102 = vmatpush2.bf16.msra.mxu0 0
    %2103 = vmatprep.subr.bf16.mxu0 0
    %2104 = vmatpush2.bf16.msra.mxu0 0
    %2105 = vmatprep.subr.bf16.mxu0 0
    %2106 = vmatpush2.bf16.msra.mxu0 0
    %2107 = vmatprep.mubr.bf16.mxu0 0
    %2108 = vmatmul.mubr.bf16.gmra.mxu0 %v2070
    %v2109 = vpop.f32.mrf.mxu0
    %v2110 = vadd.f32 0.0, %v2109
    %v2111 = vpop.f32.mrf.mxu0
    %v2112 = vpop.f32.mrf.mxu0
    %v2113 = vpop.f32.mrf.mxu0
    %2114 = vdwg.mxu0
    %v2116 = vsel %vm975, %v2066, 0
    %v2119 = vsel %vm1027, %v1814, 0
    %2121 = vmatprep.subr.bf16.mxu0 0
    %2122 = vmatpush1.bf16.msra.mxu0 0
    %2123 = vmatprep.subr.bf16.mxu0 0
    %2124 = vmatpush1.bf16.msra.mxu0 0
    %2125 = vmatprep.subr.bf16.mxu0 0
    %2126 = vmatpush1.bf16.msra.mxu0 0
    %2127 = vmatprep.subr.bf16.mxu0 0
    %2128 = vmatpush1.bf16.msra.mxu0 0
    %2129 = vmatprep.subr.bf16.mxu0 0
    %2130 = vmatpush1.bf16.msra.mxu0 0
    %2131 = vmatprep.subr.bf16.mxu0 0
    %2132 = vmatpush1.bf16.msra.mxu0 0
    %2133 = vmatprep.subr.bf16.mxu0 0
    %2134 = vmatpush1.bf16.msra.mxu0 0
    %2135 = vmatprep.subr.bf16.mxu0 0
    %2136 = vmatpush1.bf16.msra.mxu0 %v2119
    %2137 = vmatprep.subr.bf16.mxu0 0
    %2138 = vmatpush2.bf16.msra.mxu0 0
    %2139 = vmatprep.subr.bf16.mxu0 0
    %2140 = vmatpush2.bf16.msra.mxu0 0
    %2141 = vmatprep.subr.bf16.mxu0 0
    %2142 = vmatpush2.bf16.msra.mxu0 0
    %2143 = vmatprep.subr.bf16.mxu0 0
    %2144 = vmatpush2.bf16.msra.mxu0 0
    %2145 = vmatprep.subr.bf16.mxu0 0
    %2146 = vmatpush2.bf16.msra.mxu0 0
    %2147 = vmatprep.subr.bf16.mxu0 0
    %2148 = vmatpush2.bf16.msra.mxu0 0
    %2149 = vmatprep.subr.bf16.mxu0 0
    %2150 = vmatpush2.bf16.msra.mxu0 0
    %2151 = vmatprep.subr.bf16.mxu0 0
    %2152 = vmatpush2.bf16.msra.mxu0 0
    %2153 = vmatprep.mubr.bf16.mxu0 0
    %2154 = vmatmul.mubr.bf16.gmra.mxu0 %v2116
    %v2155 = vpop.f32.mrf.mxu0
    %v2156 = vadd.f32 0.0, %v2155
    %v2157 = vpop.f32.mrf.mxu0
    %v2158 = vpop.f32.mrf.mxu0
    %v2159 = vpop.f32.mrf.mxu0
    %2160 = vdwg.mxu0
    %v2162 = vsel %vm975, %v2067, 0
    %v2165 = vsel %vm1027, %v1815, 0
    %2167 = vmatprep.subr.bf16.mxu0 0
    %2168 = vmatpush1.bf16.msra.mxu0 0
    %2169 = vmatprep.subr.bf16.mxu0 0
    %2170 = vmatpush1.bf16.msra.mxu0 0
    %2171 = vmatprep.subr.bf16.mxu0 0
    %2172 = vmatpush1.bf16.msra.mxu0 0
    %2173 = vmatprep.subr.bf16.mxu0 0
    %2174 = vmatpush1.bf16.msra.mxu0 0
    %2175 = vmatprep.subr.bf16.mxu0 0
    %2176 = vmatpush1.bf16.msra.mxu0 0
    %2177 = vmatprep.subr.bf16.mxu0 0
    %2178 = vmatpush1.bf16.msra.mxu0 0
    %2179 = vmatprep.subr.bf16.mxu0 0
    %2180 = vmatpush1.bf16.msra.mxu0 0
    %2181 = vmatprep.subr.bf16.mxu0 0
    %2182 = vmatpush1.bf16.msra.mxu0 %v2165
    %2183 = vmatprep.subr.bf16.mxu0 0
    %2184 = vmatpush2.bf16.msra.mxu0 0
    %2185 = vmatprep.subr.bf16.mxu0 0
    %2186 = vmatpush2.bf16.msra.mxu0 0
    %2187 = vmatprep.subr.bf16.mxu0 0
    %2188 = vmatpush2.bf16.msra.mxu0 0
    %2189 = vmatprep.subr.bf16.mxu0 0
    %2190 = vmatpush2.bf16.msra.mxu0 0
    %2191 = vmatprep.subr.bf16.mxu0 0
    %2192 = vmatpush2.bf16.msra.mxu0 0
    %2193 = vmatprep.subr.bf16.mxu0 0
    %2194 = vmatpush2.bf16.msra.mxu0 0
    %2195 = vmatprep.subr.bf16.mxu0 0
    %2196 = vmatpush2.bf16.msra.mxu0 0
    %2197 = vmatprep.subr.bf16.mxu0 0
    %2198 = vmatpush2.bf16.msra.mxu0 0
    %2199 = vmatprep.mubr.bf16.mxu0 0
    %2200 = vmatmul.mubr.bf16.gmra.mxu0 %v2162
    %v2201 = vpop.f32.mrf.mxu0
    %v2202 = vadd.f32 0.0, %v2201
    %v2203 = vpop.f32.mrf.mxu0
    %v2204 = vpop.f32.mrf.mxu0
    %v2205 = vpop.f32.mrf.mxu0
    %2206 = vdwg.mxu0
    %v2208 = vsel %vm975, %v2068, 0
    %v2211 = vsel %vm1027, %v1816, 0
    %2213 = vmatprep.subr.bf16.mxu0 0
    %2214 = vmatpush1.bf16.msra.mxu0 0
    %2215 = vmatprep.subr.bf16.mxu0 0
    %2216 = vmatpush1.bf16.msra.mxu0 0
    %2217 = vmatprep.subr.bf16.mxu0 0
    %2218 = vmatpush1.bf16.msra.mxu0 0
    %2219 = vmatprep.subr.bf16.mxu0 0
    %2220 = vmatpush1.bf16.msra.mxu0 0
    %2221 = vmatprep.subr.bf16.mxu0 0
    %2222 = vmatpush1.bf16.msra.mxu0 0
    %2223 = vmatprep.subr.bf16.mxu0 0
    %2224 = vmatpush1.bf16.msra.mxu0 0
    %2225 = vmatprep.subr.bf16.mxu0 0
    %2226 = vmatpush1.bf16.msra.mxu0 0
    %2227 = vmatprep.subr.bf16.mxu0 0
    %2228 = vmatpush1.bf16.msra.mxu0 %v2211
    %2229 = vmatprep.subr.bf16.mxu0 0
    %2230 = vmatpush2.bf16.msra.mxu0 0
    %2231 = vmatprep.subr.bf16.mxu0 0
    %2232 = vmatpush2.bf16.msra.mxu0 0
    %2233 = vmatprep.subr.bf16.mxu0 0
    %2234 = vmatpush2.bf16.msra.mxu0 0
    %2235 = vmatprep.subr.bf16.mxu0 0
    %2236 = vmatpush2.bf16.msra.mxu0 0
    %2237 = vmatprep.subr.bf16.mxu0 0
    %2238 = vmatpush2.bf16.msra.mxu0 0
    %2239 = vmatprep.subr.bf16.mxu0 0
    %2240 = vmatpush2.bf16.msra.mxu0 0
    %2241 = vmatprep.subr.bf16.mxu0 0
    %2242 = vmatpush2.bf16.msra.mxu0 0
    %2243 = vmatprep.subr.bf16.mxu0 0
    %2244 = vmatpush2.bf16.msra.mxu0 0
    %2245 = vmatprep.mubr.bf16.mxu0 0
    %2246 = vmatmul.mubr.bf16.gmra.mxu0 %v2208
    %v2247 = vpop.f32.mrf.mxu0
    %v2248 = vadd.f32 0.0, %v2247
    %v2249 = vpop.f32.mrf.mxu0
    %v2250 = vpop.f32.mrf.mxu0
    %v2251 = vpop.f32.mrf.mxu0
    %2252 = vdwg.mxu0
    %2254 = vrot.lane.b32.xlu0 %v2156, 32
    %v2255 = vpop.permute.xlu0 %2254
    %v2257 = vsel %vm773, %v2110, %v2255
    %2259 = vrot.lane.b32.xlu0 %v2248, 32
    %v2260 = vpop.permute.xlu0 %2259
    %v2262 = vsel %vm773, %v2202, %v2260
    %v2263 = vpack.c.bf16 %v2262, %v2257
    %v2264 = vld [vmem:[%s9] sm:$0xf]
    %v2265 = vld [vmem:[%s9 + $0x4] sm:$0xf]
    %v2266 = vld [vmem:[%s9 + $0x8] sm:$0xf]
    %v2267 = vld [vmem:[%s9 + $0xc] sm:$0xf]
    %v2268 = vld [vmem:[%s9 + $0x10] sm:$0xf]
    %v2269 = vld [vmem:[%s9 + $0x14] sm:$0xf]
    %v2270 = vld [vmem:[%s9 + $0x18] sm:$0xf]
    %v2271 = vld [vmem:[%s9 + $0x1c] sm:$0xf]
    %v2280 = vunpack.c.l.b16 %v2264
    %v2281 = vunpack.c.l.b16 %v2265
    %v2282 = vunpack.c.l.b16 %v2266
    %v2283 = vunpack.c.l.b16 %v2267
    %v2284 = vunpack.c.l.b16 %v2268
    %v2285 = vunpack.c.l.b16 %v2269
    %v2286 = vunpack.c.l.b16 %v2270
    %v2287 = vunpack.c.l.b16 %v2271
    %v2288 = vpack.c.b16 %v2281, %v2280
    %v2289 = vpack.c.b16 %v2283, %v2282
    %v2290 = vpack.c.b16 %v2285, %v2284
    %v2291 = vpack.c.b16 %v2287, %v2286
    %v2297 = vsel %vm608, %v2263, 0
    %2299 = vmatprep.subr.bf16.mxu0 0
    %2300 = vmatpush1.bf16.msra.mxu0 0
    %2301 = vmatprep.subr.bf16.mxu0 0
    %2302 = vmatpush1.bf16.msra.mxu0 0
    %2303 = vmatprep.subr.bf16.mxu0 0
    %2304 = vmatpush1.bf16.msra.mxu0 0
    %2305 = vmatprep.subr.bf16.mxu0 0
    %2306 = vmatpush1.bf16.msra.mxu0 0
    %2307 = vmatprep.subr.bf16.mxu0 0
    %2308 = vmatpush1.bf16.msra.mxu0 %v2291
    %2309 = vmatprep.subr.bf16.mxu0 0
    %2310 = vmatpush1.bf16.msra.mxu0 %v2290
    %2311 = vmatprep.subr.bf16.mxu0 0
    %2312 = vmatpush1.bf16.msra.mxu0 %v2289
    %2313 = vmatprep.subr.bf16.mxu0 0
    %2314 = vmatpush1.bf16.msra.mxu0 %v2288
    %2315 = vmatprep.subr.bf16.mxu0 0
    %2316 = vmatpush2.bf16.msra.mxu0 0
    %2317 = vmatprep.subr.bf16.mxu0 0
    %2318 = vmatpush2.bf16.msra.mxu0 0
    %2319 = vmatprep.subr.bf16.mxu0 0
    %2320 = vmatpush2.bf16.msra.mxu0 0
    %2321 = vmatprep.subr.bf16.mxu0 0
    %2322 = vmatpush2.bf16.msra.mxu0 0
    %2323 = vmatprep.subr.bf16.mxu0 0
    %2324 = vmatpush2.bf16.msra.mxu0 0
    %2325 = vmatprep.subr.bf16.mxu0 0
    %2326 = vmatpush2.bf16.msra.mxu0 0
    %2327 = vmatprep.subr.bf16.mxu0 0
    %2328 = vmatpush2.bf16.msra.mxu0 0
    %2329 = vmatprep.subr.bf16.mxu0 0
    %2330 = vmatpush2.bf16.msra.mxu0 0
    %2331 = vmatprep.mubr.bf16.mxu0 0
    %2332 = vmatmul.mubr.bf16.gmra.mxu0 %v2297
    %v2333 = vpop.f32.mrf.mxu0
    %v2334 = vadd.f32 0.0, %v2333
    %v2335 = vpop.f32.mrf.mxu0
    %v2336 = vpop.f32.mrf.mxu0
    %v2337 = vadd.f32 0.0, %v2336
    %v2338 = vpop.f32.mrf.mxu0
    %2339 = vdwg.mxu0
    %v2340 = vadd.f32 %v1645, %v2334
    %v2341 = vadd.f32 %v1646, %v2337
    %v2342 = vadd.f32 %v2340, %v1651
    %v2343 = vadd.f32 %v2341, %v1651
    %v2344 = vsel %vm608, %v2342, 0.0
    %2345 = vadd.xlane.f32.xlu0 %v2344
    %v2346 = vpop.xlane.xlu0 %2345
    %v2347 = vsel %vm608, %v2343, 0.0
    %2348 = vadd.xlane.f32.xlu0 %v2347
    %v2349 = vpop.xlane.xlu0 %2348
    %v2350 = vmul.f32 %v2346, %v615
    %v2351 = vmul.f32 %v2349, %v615
    %v2352 = vsub.f32 %v2342, %v2350
    %v2353 = vsub.f32 %v2343, %v2351
    %v2354 = vmul.f32 %v2352, %v2352
    %v2355 = vmul.f32 %v2353, %v2353
    %v2356 = vsel %vm608, %v2354, 0.0
    %2357 = vadd.xlane.f32.xlu0 %v2356
    %v2358 = vpop.xlane.xlu0 %2357
    %v2359 = vsel %vm608, %v2355, 0.0
    %2360 = vadd.xlane.f32.xlu0 %v2359
    %v2361 = vpop.xlane.xlu0 %2360
    %v2362 = vmul.f32 %v2358, %v615
    %v2363 = vmul.f32 %v2361, %v615
    %v2364 = vadd.f32 %v2362, 1e-06
    %v2365 = vadd.f32 %v2363, 1e-06
    %v2366 = vrsqrt.pop %v2364
    %v2367 = vrsqrt.pop %v2365
    %v2368 = vmul.f32 %v2352, %v2366
    %v2369 = vmul.f32 %v2353, %v2367
    %v2370 = vmul.f32 %v2368, %v1652
    %v2371 = vmul.f32 %v2369, %v1652
    %v2372 = vadd.f32 %v2370, %v1653
    %v2373 = vadd.f32 %v2371, %v1653
    %v2374 = vpack.c.bf16 %v2373, %v2372
    %v2375 = vld [vmem:[%s10] sm:$0xff]
    %v2376 = vld [vmem:[%s10 + $0x8] sm:$0xff]
    %v2377 = vld [vmem:[%s10 + $0x10] sm:$0xff]
    %v2378 = vld [vmem:[%s10 + $0x18] sm:$0xff]
    %v2379 = vld [vmem:[%s10 + $0x20] sm:$0xff]
    %v2380 = vld [vmem:[%s10 + $0x28] sm:$0xff]
    %v2381 = vld [vmem:[%s10 + $0x30] sm:$0xff]
    %v2382 = vld [vmem:[%s10 + $0x38] sm:$0xff]
    %v2384 = vlaneseq
    %v2385 = vshrl.u32 %v2384, 7
    %v2386 = vsub.s32 0, %v2385
    %v2387 = vrot.slane %v1655, %v2386
    %v2388 = vlaneseq
    %v2389 = vshrl.u32 %v2388, 7
    %v2390 = vsub.s32 1, %v2389
    %v2391 = vrot.slane %v1655, %v2390
    %v2402 = vunpack.c.l.b16 %v2375
    %v2403 = vunpack.c.h.b16 %v2375
    %v2404 = vunpack.c.l.b16 %v2376
    %v2405 = vunpack.c.h.b16 %v2376
    %v2406 = vunpack.c.l.b16 %v2377
    %v2407 = vunpack.c.h.b16 %v2377
    %v2408 = vunpack.c.l.b16 %v2378
    %v2409 = vunpack.c.h.b16 %v2378
    %v2410 = vunpack.c.l.b16 %v2379
    %v2411 = vunpack.c.h.b16 %v2379
    %v2412 = vunpack.c.l.b16 %v2380
    %v2413 = vunpack.c.h.b16 %v2380
    %v2414 = vunpack.c.l.b16 %v2381
    %v2415 = vunpack.c.h.b16 %v2381
    %v2416 = vunpack.c.l.b16 %v2382
    %v2417 = vunpack.c.h.b16 %v2382
    %v2418 = vpack.c.b16 %v2404, %v2402
    %v2419 = vpack.c.b16 %v2405, %v2403
    %v2420 = vpack.c.b16 %v2408, %v2406
    %v2421 = vpack.c.b16 %v2409, %v2407
    %v2422 = vpack.c.b16 %v2412, %v2410
    %v2423 = vpack.c.b16 %v2413, %v2411
    %v2424 = vpack.c.b16 %v2416, %v2414
    %v2425 = vpack.c.b16 %v2417, %v2415
    %v2435 = vsel %vm608, %v2374, 0
    %2437 = vmatprep.subr.bf16.mxu0 0
    %2438 = vmatpush1.bf16.msra.mxu0 0
    %2439 = vmatprep.subr.bf16.mxu0 0
    %2440 = vmatpush1.bf16.msra.mxu0 0
    %2441 = vmatprep.subr.bf16.mxu0 0
    %2442 = vmatpush1.bf16.msra.mxu0 0
    %2443 = vmatprep.subr.bf16.mxu0 0
    %2444 = vmatpush1.bf16.msra.mxu0 0
    %2445 = vmatprep.subr.bf16.mxu0 %v2425
    %2446 = vmatpush1.bf16.msra.mxu0 %v2424
    %2447 = vmatprep.subr.bf16.mxu0 %v2423
    %2448 = vmatpush1.bf16.msra.mxu0 %v2422
    %2449 = vmatprep.subr.bf16.mxu0 %v2421
    %2450 = vmatpush1.bf16.msra.mxu0 %v2420
    %2451 = vmatprep.subr.bf16.mxu0 %v2419
    %2452 = vmatpush1.bf16.msra.mxu0 %v2418
    %2453 = vmatprep.subr.bf16.mxu0 0
    %2454 = vmatpush2.bf16.msra.mxu0 0
    %2455 = vmatprep.subr.bf16.mxu0 0
    %2456 = vmatpush2.bf16.msra.mxu0 0
    %2457 = vmatprep.subr.bf16.mxu0 0
    %2458 = vmatpush2.bf16.msra.mxu0 0
    %2459 = vmatprep.subr.bf16.mxu0 0
    %2460 = vmatpush2.bf16.msra.mxu0 0
    %2461 = vmatprep.subr.bf16.mxu0 0
    %2462 = vmatpush2.bf16.msra.mxu0 0
    %2463 = vmatprep.subr.bf16.mxu0 0
    %2464 = vmatpush2.bf16.msra.mxu0 0
    %2465 = vmatprep.subr.bf16.mxu0 0
    %2466 = vmatpush2.bf16.msra.mxu0 0
    %2467 = vmatprep.subr.bf16.mxu0 0
    %2468 = vmatpush2.bf16.msra.mxu0 0
    %2469 = vmatprep.mubr.bf16.mxu0 0
    %2470 = vmatmul.mubr.bf16.gmra.mxu0 %v2435
    %v2471 = vpop.f32.mrf.mxu0
    %v2472 = vadd.f32 %v2387, %v2471
    %v2473 = vpop.f32.mrf.mxu0
    %v2474 = vadd.f32 %v2391, %v2473
    %v2475 = vpop.f32.mrf.mxu0
    %v2476 = vadd.f32 %v2387, %v2475
    %v2477 = vpop.f32.mrf.mxu0
    %v2478 = vadd.f32 %v2391, %v2477
    %2479 = vdwg.mxu0
    %v2480 = vmul.f32 %v2472, 0.5
    %v2481 = vmul.f32 %v2474, 0.5
    %v2482 = vmul.f32 %v2476, 0.5
    %v2483 = vmul.f32 %v2478, 0.5
    %v2484 = vmul.f32 %v2472, 0.044715
    %v2485 = vmul.f32 %v2474, 0.044715
    %v2486 = vmul.f32 %v2476, 0.044715
    %v2487 = vmul.f32 %v2478, 0.044715
    %v2488 = vmul.f32 %v2484, %v2472
    %v2489 = vmul.f32 %v2485, %v2474
    %v2490 = vmul.f32 %v2486, %v2476
    %v2491 = vmul.f32 %v2487, %v2478
    %v2492 = vmul.f32 %v2488, %v2472
    %v2493 = vmul.f32 %v2489, %v2474
    %v2494 = vmul.f32 %v2490, %v2476
    %v2495 = vmul.f32 %v2491, %v2478
    %v2496 = vadd.f32 %v2472, %v2492
    %v2497 = vadd.f32 %v2474, %v2493
    %v2498 = vadd.f32 %v2476, %v2494
    %v2499 = vadd.f32 %v2478, %v2495
    %v2500 = vmul.f32 %v2496, 0.7978846
    %v2501 = vmul.f32 %v2497, 0.7978846
    %v2502 = vmul.f32 %v2498, 0.7978846
    %v2503 = vmul.f32 %v2499, 0.7978846
    %v2504 = vtanh.pop %v2500
    %v2505 = vtanh.pop %v2501
    %v2506 = vtanh.pop %v2502
    %v2507 = vtanh.pop %v2503
    %v2508 = vadd.f32 %v2504, 1.0
    %v2509 = vadd.f32 %v2505, 1.0
    %v2510 = vadd.f32 %v2506, 1.0
    %v2511 = vadd.f32 %v2507, 1.0
    %v2512 = vmul.f32 %v2480, %v2508
    %v2513 = vmul.f32 %v2481, %v2509
    %v2514 = vmul.f32 %v2482, %v2510
    %v2515 = vmul.f32 %v2483, %v2511
    %v2516 = vpack.c.bf16 %v2514, %v2512
    %v2517 = vpack.c.bf16 %v2515, %v2513
    %v2518 = vld [vmem:[%s11] sm:$0xf]
    %v2519 = vld [vmem:[%s11 + $0x4] sm:$0xf]
    %v2520 = vld [vmem:[%s11 + $0x8] sm:$0xf]
    %v2521 = vld [vmem:[%s11 + $0xc] sm:$0xf]
    %v2522 = vld [vmem:[%s11 + $0x10] sm:$0xf]
    %v2523 = vld [vmem:[%s11 + $0x14] sm:$0xf]
    %v2524 = vld [vmem:[%s11 + $0x18] sm:$0xf]
    %v2525 = vld [vmem:[%s11 + $0x1c] sm:$0xf]
    %v2526 = vld [vmem:[%s11 + $0x20] sm:$0xf]
    %v2527 = vld [vmem:[%s11 + $0x24] sm:$0xf]
    %v2528 = vld [vmem:[%s11 + $0x28] sm:$0xf]
    %v2529 = vld [vmem:[%s11 + $0x2c] sm:$0xf]
    %v2530 = vld [vmem:[%s11 + $0x30] sm:$0xf]
    %v2531 = vld [vmem:[%s11 + $0x34] sm:$0xf]
    %v2532 = vld [vmem:[%s11 + $0x38] sm:$0xf]
    %v2533 = vld [vmem:[%s11 + $0x3c] sm:$0xf]
    %v2534 = vld [vmem:[%s11 + $0x40] sm:$0xf]
    %v2535 = vld [vmem:[%s11 + $0x44] sm:$0xf]
    %v2536 = vld [vmem:[%s11 + $0x48] sm:$0xf]
    %v2537 = vld [vmem:[%s11 + $0x4c] sm:$0xf]
    %v2538 = vld [vmem:[%s11 + $0x50] sm:$0xf]
    %v2539 = vld [vmem:[%s11 + $0x54] sm:$0xf]
    %v2540 = vld [vmem:[%s11 + $0x58] sm:$0xf]
    %v2541 = vld [vmem:[%s11 + $0x5c] sm:$0xf]
    %v2542 = vld [vmem:[%s11 + $0x60] sm:$0xf]
    %v2543 = vld [vmem:[%s11 + $0x64] sm:$0xf]
    %v2544 = vld [vmem:[%s11 + $0x68] sm:$0xf]
    %v2545 = vld [vmem:[%s11 + $0x6c] sm:$0xf]
    %v2546 = vld [vmem:[%s11 + $0x70] sm:$0xf]
    %v2547 = vld [vmem:[%s11 + $0x74] sm:$0xf]
    %v2548 = vld [vmem:[%s11 + $0x78] sm:$0xf]
    %v2549 = vld [vmem:[%s11 + $0x7c] sm:$0xf]
    %v2582 = vunpack.c.l.b16 %v2518
    %v2583 = vunpack.c.l.b16 %v2519
    %v2584 = vunpack.c.l.b16 %v2520
    %v2585 = vunpack.c.l.b16 %v2521
    %v2586 = vunpack.c.l.b16 %v2522
    %v2587 = vunpack.c.l.b16 %v2523
    %v2588 = vunpack.c.l.b16 %v2524
    %v2589 = vunpack.c.l.b16 %v2525
    %v2590 = vunpack.c.l.b16 %v2526
    %v2591 = vunpack.c.l.b16 %v2527
    %v2592 = vunpack.c.l.b16 %v2528
    %v2593 = vunpack.c.l.b16 %v2529
    %v2594 = vunpack.c.l.b16 %v2530
    %v2595 = vunpack.c.l.b16 %v2531
    %v2596 = vunpack.c.l.b16 %v2532
    %v2597 = vunpack.c.l.b16 %v2533
    %v2598 = vunpack.c.l.b16 %v2534
    %v2599 = vunpack.c.l.b16 %v2535
    %v2600 = vunpack.c.l.b16 %v2536
    %v2601 = vunpack.c.l.b16 %v2537
    %v2602 = vunpack.c.l.b16 %v2538
    %v2603 = vunpack.c.l.b16 %v2539
    %v2604 = vunpack.c.l.b16 %v2540
    %v2605 = vunpack.c.l.b16 %v2541
    %v2606 = vunpack.c.l.b16 %v2542
    %v2607 = vunpack.c.l.b16 %v2543
    %v2608 = vunpack.c.l.b16 %v2544
    %v2609 = vunpack.c.l.b16 %v2545
    %v2610 = vunpack.c.l.b16 %v2546
    %v2611 = vunpack.c.l.b16 %v2547
    %v2612 = vunpack.c.l.b16 %v2548
    %v2613 = vunpack.c.l.b16 %v2549
    %v2614 = vpack.c.b16 %v2583, %v2582
    %v2615 = vpack.c.b16 %v2585, %v2584
    %v2616 = vpack.c.b16 %v2587, %v2586
    %v2617 = vpack.c.b16 %v2589, %v2588
    %v2618 = vpack.c.b16 %v2591, %v2590
    %v2619 = vpack.c.b16 %v2593, %v2592
    %v2620 = vpack.c.b16 %v2595, %v2594
    %v2621 = vpack.c.b16 %v2597, %v2596
    %v2622 = vpack.c.b16 %v2599, %v2598
    %v2623 = vpack.c.b16 %v2601, %v2600
    %v2624 = vpack.c.b16 %v2603, %v2602
    %v2625 = vpack.c.b16 %v2605, %v2604
    %v2626 = vpack.c.b16 %v2607, %v2606
    %v2627 = vpack.c.b16 %v2609, %v2608
    %v2628 = vpack.c.b16 %v2611, %v2610
    %v2629 = vpack.c.b16 %v2613, %v2612
    %2646 = vmatprep.subr.bf16.mxu0 0
    %2647 = vmatpush1.bf16.msra.mxu0 %v2621
    %2648 = vmatprep.subr.bf16.mxu0 0
    %2649 = vmatpush1.bf16.msra.mxu0 %v2620
    %2650 = vmatprep.subr.bf16.mxu0 0
    %2651 = vmatpush1.bf16.msra.mxu0 %v2619
    %2652 = vmatprep.subr.bf16.mxu0 0
    %2653 = vmatpush1.bf16.msra.mxu0 %v2618
    %2654 = vmatprep.subr.bf16.mxu0 0
    %2655 = vmatpush1.bf16.msra.mxu0 %v2617
    %2656 = vmatprep.subr.bf16.mxu0 0
    %2657 = vmatpush1.bf16.msra.mxu0 %v2616
    %2658 = vmatprep.subr.bf16.mxu0 0
    %2659 = vmatpush1.bf16.msra.mxu0 %v2615
    %2660 = vmatprep.subr.bf16.mxu0 0
    %2661 = vmatpush1.bf16.msra.mxu0 %v2614
    %2662 = vmatprep.subr.bf16.mxu0 0
    %2663 = vmatpush2.bf16.msra.mxu0 %v2629
    %2664 = vmatprep.subr.bf16.mxu0 0
    %2665 = vmatpush2.bf16.msra.mxu0 %v2628
    %2666 = vmatprep.subr.bf16.mxu0 0
    %2667 = vmatpush2.bf16.msra.mxu0 %v2627
    %2668 = vmatprep.subr.bf16.mxu0 0
    %2669 = vmatpush2.bf16.msra.mxu0 %v2626
    %2670 = vmatprep.subr.bf16.mxu0 0
    %2671 = vmatpush2.bf16.msra.mxu0 %v2625
    %2672 = vmatprep.subr.bf16.mxu0 0
    %2673 = vmatpush2.bf16.msra.mxu0 %v2624
    %2674 = vmatprep.subr.bf16.mxu0 0
    %2675 = vmatpush2.bf16.msra.mxu0 %v2623
    %2676 = vmatprep.subr.bf16.mxu0 0
    %2677 = vmatpush2.bf16.msra.mxu0 %v2622
    %2678 = vmatprep.mubr.bf16.mxu0 %v2517
    %2679 = vmatmul.mubr.bf16.gmra.mxu0 %v2516
    %v2680 = vpop.f32.mrf.mxu0
    %v2681 = vadd.f32 0.0, %v2680
    %v2682 = vpop.f32.mrf.mxu0
    %v2683 = vpop.f32.mrf.mxu0
    %v2684 = vadd.f32 0.0, %v2683
    %v2685 = vpop.f32.mrf.mxu0
    %2686 = vdwg.mxu0
    %v2687 = vadd.f32 %v2342, %v2681
    %v2688 = vadd.f32 %v2343, %v2684
    %v2689 = vadd.f32 %v2687, %v1656
    %v2690 = vadd.f32 %v2688, %v1656
    %v2692 = vrot.slane %v2690, 7
    %vm2694 = vcmask 1040384
    %v2695 = vsel %vm2694, %v2689, %v2692
    %v2696 = vld [vmem:[%s12] sm:$0x1]
    %v2697 = vld [vmem:[%s12 + $0x1] sm:$0x1]
    %v2698 = vld [vmem:[%s12 + $0x2] sm:$0x1]
    %vm2699 = vcmask 517120
    %v2700 = vsel %vm2699, %v2695, 0.0
    %2701 = vadd.xlane.f32.xlu0 %v2700
    %v2702 = vpop.xlane.xlu0 %2701
    %v2703 = vmul.f32 %v2702, %v615
    %v2704 = vsub.f32 %v2695, %v2703
    %v2705 = vmul.f32 %v2704, %v2704
    %v2706 = vsel %vm2699, %v2705, 0.0
    %2707 = vadd.xlane.f32.xlu0 %v2706
    %v2708 = vpop.xlane.xlu0 %2707
    %v2709 = vmul.f32 %v2708, %v615
    %v2710 = vadd.f32 %v2709, 1e-06
    %v2711 = vrsqrt.pop %v2710
    %v2712 = vmul.f32 %v2704, %v2711
    %v2713 = vlaneseq
    %v2714 = vshrl.u32 %v2713, 7
    %v2715 = vsub.s32 0, %v2714
    %v2716 = vrot.slane %v2696, %v2715
    %v2717 = vmul.f32 %v2712, %v2716
    %v2718 = vlaneseq
    %v2719 = vshrl.u32 %v2718, 7
    %v2720 = vsub.s32 0, %v2719
    %v2721 = vrot.slane %v2697, %v2720
    %v2722 = vadd.f32 %v2717, %v2721
    %v2723 = vpack.c.bf16 %v2722, %v2722
    %v2724 = vld [vmem:[%s13] sm:$0xf]
    %v2725 = vld [vmem:[%s13 + $0x4] sm:$0xf]
    %v2726 = vld [vmem:[%s13 + $0x8] sm:$0xf]
    %v2727 = vld [vmem:[%s13 + $0xc] sm:$0xf]
    %v2728 = vld [vmem:[%s13 + $0x10] sm:$0xf]
    %v2729 = vld [vmem:[%s13 + $0x14] sm:$0xf]
    %v2730 = vld [vmem:[%s13 + $0x18] sm:$0xf]
    %v2731 = vld [vmem:[%s13 + $0x1c] sm:$0xf]
    %v2732 = vlaneseq
    %v2733 = vshrl.u32 %v2732, 7
    %v2734 = vsub.s32 0, %v2733
    %v2735 = vrot.slane %v2698, %v2734
    %v2744 = vunpack.c.l.b16 %v2724
    %v2745 = vunpack.c.l.b16 %v2725
    %v2746 = vunpack.c.l.b16 %v2726
    %v2747 = vunpack.c.l.b16 %v2727
    %v2748 = vunpack.c.l.b16 %v2728
    %v2749 = vunpack.c.l.b16 %v2729
    %v2750 = vunpack.c.l.b16 %v2730
    %v2751 = vunpack.c.l.b16 %v2731
    %v2752 = vpack.c.b16 %v2745, %v2744
    %v2753 = vpack.c.b16 %v2747, %v2746
    %v2754 = vpack.c.b16 %v2749, %v2748
    %v2755 = vpack.c.b16 %v2751, %v2750
    %v2761 = vsel %vm608, %v2723, 0
    %2763 = vmatprep.subr.bf16.mxu0 0
    %2764 = vmatpush1.bf16.msra.mxu0 0
    %2765 = vmatprep.subr.bf16.mxu0 0
    %2766 = vmatpush1.bf16.msra.mxu0 0
    %2767 = vmatprep.subr.bf16.mxu0 0
    %2768 = vmatpush1.bf16.msra.mxu0 0
    %2769 = vmatprep.subr.bf16.mxu0 0
    %2770 = vmatpush1.bf16.msra.mxu0 0
    %2771 = vmatprep.subr.bf16.mxu0 0
    %2772 = vmatpush1.bf16.msra.mxu0 %v2755
    %2773 = vmatprep.subr.bf16.mxu0 0
    %2774 = vmatpush1.bf16.msra.mxu0 %v2754
    %2775 = vmatprep.subr.bf16.mxu0 0
    %2776 = vmatpush1.bf16.msra.mxu0 %v2753
    %2777 = vmatprep.subr.bf16.mxu0 0
    %2778 = vmatpush1.bf16.msra.mxu0 %v2752
    %2779 = vmatprep.subr.bf16.mxu0 0
    %2780 = vmatpush2.bf16.msra.mxu0 0
    %2781 = vmatprep.subr.bf16.mxu0 0
    %2782 = vmatpush2.bf16.msra.mxu0 0
    %2783 = vmatprep.subr.bf16.mxu0 0
    %2784 = vmatpush2.bf16.msra.mxu0 0
    %2785 = vmatprep.subr.bf16.mxu0 0
    %2786 = vmatpush2.bf16.msra.mxu0 0
    %2787 = vmatprep.subr.bf16.mxu0 0
    %2788 = vmatpush2.bf16.msra.mxu0 0
    %2789 = vmatprep.subr.bf16.mxu0 0
    %2790 = vmatpush2.bf16.msra.mxu0 0
    %2791 = vmatprep.subr.bf16.mxu0 0
    %2792 = vmatpush2.bf16.msra.mxu0 0
    %2793 = vmatprep.subr.bf16.mxu0 0
    %2794 = vmatpush2.bf16.msra.mxu0 0
    %2795 = vmatprep.mubr.bf16.mxu0 0
    %2796 = vmatmul.mubr.bf16.gmra.mxu0 %v2761
    %v2797 = vpop.f32.mrf.mxu0
    %v2798 = vadd.f32 %v2735, %v2797
    %v2799 = vpop.f32.mrf.mxu0
    %v2800 = vpop.f32.mrf.mxu0
    %v2801 = vpop.f32.mrf.mxu0
    %2802 = vdwg.mxu0
    %2803 = vst [vmem:[#allocation2] sm:$0x3] %v2798
    // Predicated region
    $region58: #{emotion_model_forward.1} parent=1 // pred_check
      _
    $region59: #{emotion_model_forward.1} parent=1 // pred_check_branch
      %2805 = sbr.rel (0) target = $region61
    $region60: #{emotion_model_forward.1} parent=1 // pred_region
      %s2807 = ssub.s32 32, 32
      %2808 = vsyncadd [#allocation3], %s2807
      %s2810 = sshll.u32 [#allocation2], 4
      %s2811 = int_to_ptr.vmem [resolvable:$true] %s2810
      %2813 = dma.vmem_to_hbm [thread:$0]  %s2811, 32, %s14, [#allocation3]
    $region61: #{emotion_model_forward.1} parent=1 // pred_fallthru
      _
    // Predicated region
    $region62: #{emotion_model_forward.1} parent=1 // pred_check
      _
    $region63: #{emotion_model_forward.1} parent=1 // pred_check_branch
      %2815 = sbr.rel (0) target = $region65
    $region64: #{emotion_model_forward.1} parent=1 // pred_region
      %2816 = dma.done [#allocation3], 32
    $region65: #{emotion_model_forward.1} parent=1 // pred_fallthru
      _
    %2817 = vsyncpa [#allocation3], 1

</llo_original>
